<compile_context>
chip_gen: v7x
topology: tpu7x:2x2x1
jax: 0.10.0
libtpu: 0.0.40
codegen_flags: <defaults>
</compile_context>

<pallas_src>
import functools
import numpy as np

import jax
import jax.numpy as jnp
from jax.experimental import pallas as pl
from jax.experimental.pallas import tpu as pltpu


# ----------------------------------------------------------------------------
# Fused kernel: whole forward pass for NB images per grid step.
# ----------------------------------------------------------------------------
def _lenet_kernel(x_ref, w1_ref, b1_ref, w2_ref, b2_ref,
                  wf1_ref, bf1_ref, wf2_ref, bf2_ref, wf3_ref, bf3_ref,
                  out_ref):
    f32 = jnp.float32
    bf16 = jnp.bfloat16
    NB = x_ref.shape[0]
    M = 8 * NB                       # rows of every conv-stage matmul

    def shift_up(a, n):
        # result[m] = a[m + n] (circular over the whole batched slab).  Wrapped /
        # cross-image rows only ever land in per-image "garbage" rows that are
        # never read back by a later stage.
        return jnp.concatenate([a[n:], a[:n]], axis=0)

    def colmax(a):
        # 2x2 pool over W: even/odd conv output columns live in separate
        # 128-lane-aligned halves of the 256-wide matmul output.
        return jnp.maximum(a[:, :128], a[:, 128:])

    # -------- Stage 1: conv1(5x5, 3->6) + ReLU + 2x2 maxpool -----------------
    # Phase slabs: S[p][off][8n + q, :] = image n, row 4*(q+off) + p, as bf16.
    S = []
    for p in range(4):
        s0 = x_ref[:, p, :, :].reshape(M, 128)          # f32, free reshape
        S.append((s0.astype(bf16), shift_up(s0, 1).astype(bf16)))

    w1 = w1_ref[...]                                    # (640, 256) bf16
    b1 = b1_ref[...]                                    # (1, 128)   f32
    p1 = []                                             # pooled1, parity-split
    c_even = None
    for k in range(4):                                  # conv1 row = 4q + k
        xk = jnp.concatenate(
            [S[(k + di) % 4][(k + di) // 4] for di in range(5)], axis=1)  # (M, 640)
        ck = colmax(jnp.dot(xk, w1, preferred_element_type=f32))         # (M, 128)
        if k % 2 == 0:
            c_even = ck
        else:
            # rows 4q+{0,1} -> pooled row 2q ; rows 4q+{2,3} -> pooled row 2q+1
            p1.append(jnp.maximum(jnp.maximum(c_even, ck) + b1, 0.0))     # (M, 128)

    # -------- Stage 2: conv2(5x5, 6->16) + ReLU + 2x2 maxpool ----------------
    # P[par][off][8n + t, :] = pooled1 row 2*(t+off) + par of image n (bf16).
    P = [(p1[par].astype(bf16),
          shift_up(p1[par], 1).astype(bf16),
          shift_up(p1[par], 2).astype(bf16)) for par in range(2)]
    w2 = w2_ref[...]                                    # (640, 256) bf16
    b2 = b2_ref[...]                                    # (1, 128)
    c_even = None
    p2 = None
    for s in range(2):                                  # conv2 row = 2t + s
        xk = jnp.concatenate(
            [P[(s + di) % 2][(s + di) // 2] for di in range(5)], axis=1)  # (M, 640)
        ck = colmax(jnp.dot(xk, w2, preferred_element_type=f32))
        if s == 0:
            c_even = ck
        else:
            p2 = jnp.maximum(jnp.maximum(c_even, ck) + b2, 0.0)           # (M, 128)

    # -------- FC head: fc1 -> relu -> fc2 -> relu -> fc3 ---------------------
    # pooled2 valid data: per image rows h=0..4, lanes w*16+c (0..79).
    p2r = p2.reshape(NB, 8, 128)                         # free split of the row dim
    z = jnp.concatenate([p2r[:, h, :] for h in range(5)], axis=1).astype(bf16)  # (NB, 640)
    y = jnp.maximum(jnp.dot(z, wf1_ref[...], preferred_element_type=f32)
                    + bf1_ref[...], 0.0)                                  # (NB, 128)
    y = jnp.maximum(jnp.dot(y.astype(bf16), wf2_ref[...],
                            preferred_element_type=f32) + bf2_ref[...], 0.0)
    y = (jnp.dot(y.astype(bf16), wf3_ref[...], preferred_element_type=f32)
         + bf3_ref[...])                                                  # (NB, 128)
    out_ref[...] = y.astype(out_ref.dtype)               # lane-dense store


# ----------------------------------------------------------------------------
# One-time weight preparation (K-fused shift matrices, lane-aligned pooling
# halves, padded/pre-transposed FC weights, padded biases).
# ----------------------------------------------------------------------------
def prepare_params(params):
    w1 = np.asarray(params["conv1_w"], np.float32)      # (6, 3, 5, 5)
    b1 = np.asarray(params["conv1_b"], np.float32)      # (6,)
    w2 = np.asarray(params["conv2_w"], np.float32)      # (16, 6, 5, 5)
    b2 = np.asarray(params["conv2_b"], np.float32)      # (16,)
    f1w = np.asarray(params["fc1_w"], np.float32)       # (120, 400)
    f1b = np.asarray(params["fc1_b"], np.float32)
    f2w = np.asarray(params["fc2_w"], np.float32)       # (84, 120)
    f2b = np.asarray(params["fc2_b"], np.float32)
    f3w = np.asarray(params["fc3_w"], np.float32)       # (10, 84)
    f3b = np.asarray(params["fc3_b"], np.float32)

    # Conv1 fused shift matrix (K blocks of 128 per di, 128-aligned N halves):
    # W1[di*128 + (j+dj)*3 + ci, half*128 + pj*6 + co] = w1[co, ci, di, dj],
    # with output column j = 2*pj + half.
    W1 = np.zeros((5, 128, 256), np.float32)
    for di in range(5):
        for dj in range(5):
            blk = w1[:, :, di, dj].T                     # (ci=3, co=6)
            for half in range(2):
                for pj in range(14):
                    j = 2 * pj + half
                    r0 = (j + dj) * 3
                    c0 = half * 128 + pj * 6
                    W1[di, r0:r0 + 3, c0:c0 + 6] = blk

    # Conv2 fused shift matrix:
    # W2[di*128 + (j2+dj)*6 + c1, half*128 + pj2*16 + c2] = w2[c2, c1, di, dj].
    W2 = np.zeros((5, 128, 256), np.float32)
    for di in range(5):
        for dj in range(5):
            blk = w2[:, :, di, dj].T                     # (c1=6, c2=16)
            for half in range(2):
                for pj in range(5):
                    j = 2 * pj + half
                    r0 = (j + dj) * 6
                    c0 = half * 128 + pj * 16
                    W2[di, r0:r0 + 6, c0:c0 + 16] = blk

    # fc1 weights permuted to the kernel's (h, w*16+c) layout (this reproduces
    # torch's x.view(-1, 16*5*5) flattening exactly), padded to 128 lanes.
    Wf1 = np.zeros((5, 128, 128), np.float32)
    Wf1[:, :80, :120] = (f1w.reshape(120, 16, 5, 5)
                         .transpose(2, 3, 1, 0).reshape(5, 80, 120))
    Wf2 = np.zeros((128, 128), np.float32)
    Wf2[:120, :84] = f2w.T
    Wf3 = np.zeros((128, 128), np.float32)
    Wf3[:84, :10] = f3w.T

    def pad128(v):
        out = np.zeros((1, 128), np.float32)
        out[0, :v.size] = v
        return out

    return {
        "W1": jnp.asarray(W1.reshape(640, 256), jnp.bfloat16),
        "b1": jnp.asarray(pad128(np.tile(b1, 14))),      # per pj*6+co, 84 valid
        "W2": jnp.asarray(W2.reshape(640, 256), jnp.bfloat16),
        "b2": jnp.asarray(pad128(np.tile(b2, 5))),       # per pj2*16+c2, 80 valid
        "Wf1": jnp.asarray(Wf1.reshape(640, 128), jnp.bfloat16),
        "bf1": jnp.asarray(pad128(f1b)),
        "Wf2": jnp.asarray(Wf2, jnp.bfloat16),
        "bf2": jnp.asarray(pad128(f2b)),
        "Wf3": jnp.asarray(Wf3, jnp.bfloat16),
        "bf3": jnp.asarray(pad128(f3b)),
    }


# ----------------------------------------------------------------------------
# Forward pass (single fused, batched pallas_call).
# ----------------------------------------------------------------------------
@functools.partial(jax.jit, static_argnames=("nb",))
def net_forward(prep, x_nchw, nb=32):
    B = x_nchw.shape[0]
    if B < nb:                      # small batches: one grid step, padded to x8
        nb = max(8, ((B + 7) // 8) * 8)
    b_pad = ((B + nb - 1) // nb) * nb

    # Input layout glue (ideally hoisted to data-prep time):
    # NCHW -> NHWC -> (B, row%4, row//4, col*3+cin), lanes zero-padded 96 -> 128.
    x = jnp.transpose(x_nchw, (0, 2, 3, 1)).astype(jnp.float32)      # (B, 32, 32, 3)
    x = x.reshape(B, 8, 4, 96).transpose(0, 2, 1, 3)                 # (B, 4, 8, 96)
    x = jnp.pad(x, ((0, b_pad - B), (0, 0), (0, 0), (0, 32)))        # (B_pad, 4, 8, 128)

    out = pl.pallas_call(
        _lenet_kernel,
        out_shape=jax.ShapeDtypeStruct((b_pad, 128), jnp.float32),
        grid=(b_pad // nb,),
        in_specs=[
            pl.BlockSpec((nb, 4, 8, 128), lambda b: (b, 0, 0, 0)),   # images
            pl.BlockSpec((640, 256), lambda b: (0, 0)),              # W1 (resident)
            pl.BlockSpec((1, 128), lambda b: (0, 0)),                # b1
            pl.BlockSpec((640, 256), lambda b: (0, 0)),              # W2
            pl.BlockSpec((1, 128), lambda b: (0, 0)),                # b2
            pl.BlockSpec((640, 128), lambda b: (0, 0)),              # Wf1
            pl.BlockSpec((1, 128), lambda b: (0, 0)),                # bf1
            pl.BlockSpec((128, 128), lambda b: (0, 0)),              # Wf2
            pl.BlockSpec((1, 128), lambda b: (0, 0)),                # bf2
            pl.BlockSpec((128, 128), lambda b: (0, 0)),              # Wf3
            pl.BlockSpec((1, 128), lambda b: (0, 0)),                # bf3
        ],
        out_specs=pl.BlockSpec((nb, 128), lambda b: (b, 0)),
        compiler_params=pltpu.CompilerParams(
            dimension_semantics=("parallel",),           # batch axis -> megacore
            vmem_limit_bytes=32 * 1024 * 1024),          # explicit, v7x-safe
    )(x, prep["W1"], prep["b1"], prep["W2"], prep["b2"],
      prep["Wf1"], prep["bf1"], prep["Wf2"], prep["bf2"],
      prep["Wf3"], prep["bf3"])
    return out[:B, :10]


# ----------------------------------------------------------------------------
# Deterministic PyTorch-default-style init + pure-JAX reference for validation.
# ----------------------------------------------------------------------------
def init_params(key):
    def u(k, shape, fan_in):
        bound = 1.0 / float(np.sqrt(fan_in))
        return jax.random.uniform(k, shape, jnp.float32, -bound, bound)

    ks = jax.random.split(key, 10)
    return {
        "conv1_w": u(ks[0], (6, 3, 5, 5), 3 * 5 * 5),
        "conv1_b": u(ks[1], (6,), 3 * 5 * 5),
        "conv2_w": u(ks[2], (16, 6, 5, 5), 6 * 5 * 5),
        "conv2_b": u(ks[3], (16,), 6 * 5 * 5),
        "fc1_w": u(ks[4], (120, 400), 400),
        "fc1_b": u(ks[5], (120,), 400),
        "fc2_w": u(ks[6], (84, 120), 120),
        "fc2_b": u(ks[7], (84,), 120),
        "fc3_w": u(ks[8], (10, 84), 84),
        "fc3_b": u(ks[9], (10,), 84),
    }


@jax.jit
def reference_forward(params, x_nchw):
    x = x_nchw.astype(jnp.float32)

    def conv(z, w, b):
        y = jax.lax.conv_general_dilated(
            z, w, window_strides=(1, 1), padding="VALID",
            dimension_numbers=("NCHW", "OIHW", "NCHW"))
        return y + b.reshape(1, -1, 1, 1)

    def pool(z):
        B, C, H, W = z.shape
        return z.reshape(B, C, H // 2, 2, W // 2, 2).max(axis=(3, 5))

    y = pool(jax.nn.relu(conv(x, params["conv1_w"], params["conv1_b"])))
    y = pool(jax.nn.relu(conv(y, params["conv2_w"], params["conv2_b"])))
    y = y.reshape(x.shape[0], 16 * 5 * 5)
    y = jax.nn.relu(y @ params["fc1_w"].T + params["fc1_b"])
    y = jax.nn.relu(y @ params["fc2_w"].T + params["fc2_b"])
    return y @ params["fc3_w"].T + params["fc3_b"]


if __name__ == "__main__":
    key = jax.random.PRNGKey(0)
    k_params, k_x = jax.random.split(key)
    params = init_params(k_params)
    prep = prepare_params(params)

    # conv(5) -> pool -> conv(5) -> pool -> 5x5 implies 3x32x32 inputs.  A batch
    # of 6 keeps shapes small and exercises the batch-padding path (6 -> 8).
    x = jax.random.normal(k_x, (6, 3, 32, 32), dtype=jnp.float32)   # NCHW like PyTorch

    out = jax.block_until_ready(net_forward(prep, x))
    ref = jax.block_until_ready(reference_forward(params, x))

    assert out.shape == (6, 10), out.shape
    assert bool(jnp.all(jnp.isfinite(out)))
    # bf16 MXU operands -> generous tolerance.
    np.testing.assert_allclose(np.asarray(out), np.asarray(ref), rtol=5e-2, atol=5e-2)
    print("KERNEL_OK")
</pallas_src>

<mosaic_0001>
module attributes {stable_mosaic.version = 11 : i64} {
  func.func @_lenet_kernel(%arg0: i32, %arg1: memref<8x4x8x128xf32, #tpu.memory_space<vmem>>, %arg2: memref<640x256xbf16, #tpu.memory_space<vmem>>, %arg3: memref<1x128xf32, #tpu.memory_space<vmem>>, %arg4: memref<640x256xbf16, #tpu.memory_space<vmem>>, %arg5: memref<1x128xf32, #tpu.memory_space<vmem>>, %arg6: memref<640x128xbf16, #tpu.memory_space<vmem>>, %arg7: memref<1x128xf32, #tpu.memory_space<vmem>>, %arg8: memref<128x128xbf16, #tpu.memory_space<vmem>>, %arg9: memref<1x128xf32, #tpu.memory_space<vmem>>, %arg10: memref<128x128xbf16, #tpu.memory_space<vmem>>, %arg11: memref<1x128xf32, #tpu.memory_space<vmem>>, %arg12: memref<8x128xf32, #tpu.memory_space<vmem>>) attributes {dimension_semantics = [#tpu.dimension_semantics<parallel>], iteration_bounds = array<i64: 1>, scalar_prefetch = 0 : i64, scratch_operands = 0 : i64, tpu.core_type = #tpu.core_type<tc>, window_params = [{transform_indices = @transform_0, window_bounds = array<i64: 8, 4, 8, 128>}, {pipeline_mode = #tpu.pipeline_mode<synchronous>, transform_indices = @transform_1, window_bounds = array<i64: 640, 256>}, {pipeline_mode = #tpu.pipeline_mode<synchronous>, transform_indices = @transform_2, window_bounds = array<i64: 1, 128>}, {pipeline_mode = #tpu.pipeline_mode<synchronous>, transform_indices = @transform_3, window_bounds = array<i64: 640, 256>}, {pipeline_mode = #tpu.pipeline_mode<synchronous>, transform_indices = @transform_4, window_bounds = array<i64: 1, 128>}, {pipeline_mode = #tpu.pipeline_mode<synchronous>, transform_indices = @transform_5, window_bounds = array<i64: 640, 128>}, {pipeline_mode = #tpu.pipeline_mode<synchronous>, transform_indices = @transform_6, window_bounds = array<i64: 1, 128>}, {pipeline_mode = #tpu.pipeline_mode<synchronous>, transform_indices = @transform_7, window_bounds = array<i64: 128, 128>}, {pipeline_mode = #tpu.pipeline_mode<synchronous>, transform_indices = @transform_8, window_bounds = array<i64: 1, 128>}, {pipeline_mode = #tpu.pipeline_mode<synchronous>, transform_indices = @transform_9, window_bounds = array<i64: 128, 128>}, {pipeline_mode = #tpu.pipeline_mode<synchronous>, transform_indices = @transform_10, window_bounds = array<i64: 1, 128>}, {transform_indices = @transform_11, window_bounds = array<i64: 8, 128>}]} {
    %c0 = arith.constant 0 : index
    %c0_0 = arith.constant 0 : index
    %c0_1 = arith.constant 0 : index
    %c0_2 = arith.constant 0 : index
    %0 = vector.load %arg1[%c0, %c0_0, %c0_1, %c0_2] : memref<8x4x8x128xf32, #tpu.memory_space<vmem>>, vector<8x1x8x128xf32>
    %1 = vector.shape_cast %0 : vector<8x1x8x128xf32> to vector<8x8x128xf32>
    %2 = vector.shape_cast %1 : vector<8x8x128xf32> to vector<64x128xf32>
    %3 = arith.truncf %2 : vector<64x128xf32> to vector<64x128xbf16>
    %4 = vector.extract_strided_slice %2 {offsets = [1, 0], sizes = [63, 128], strides = [1, 1]} : vector<64x128xf32> to vector<63x128xf32>
    %5 = vector.extract_strided_slice %2 {offsets = [0, 0], sizes = [1, 128], strides = [1, 1]} : vector<64x128xf32> to vector<1x128xf32>
    %6 = tpu.concatenate %4, %5 in 0 : vector<63x128xf32>, vector<1x128xf32> -> vector<64x128xf32>
    %7 = arith.truncf %6 : vector<64x128xf32> to vector<64x128xbf16>
    %c0_3 = arith.constant 0 : index
    %c1 = arith.constant 1 : index
    %c0_4 = arith.constant 0 : index
    %c0_5 = arith.constant 0 : index
    %8 = vector.load %arg1[%c0_3, %c1, %c0_4, %c0_5] : memref<8x4x8x128xf32, #tpu.memory_space<vmem>>, vector<8x1x8x128xf32>
    %9 = vector.shape_cast %8 : vector<8x1x8x128xf32> to vector<8x8x128xf32>
    %10 = vector.shape_cast %9 : vector<8x8x128xf32> to vector<64x128xf32>
    %11 = arith.truncf %10 : vector<64x128xf32> to vector<64x128xbf16>
    %12 = vector.extract_strided_slice %10 {offsets = [1, 0], sizes = [63, 128], strides = [1, 1]} : vector<64x128xf32> to vector<63x128xf32>
    %13 = vector.extract_strided_slice %10 {offsets = [0, 0], sizes = [1, 128], strides = [1, 1]} : vector<64x128xf32> to vector<1x128xf32>
    %14 = tpu.concatenate %12, %13 in 0 : vector<63x128xf32>, vector<1x128xf32> -> vector<64x128xf32>
    %15 = arith.truncf %14 : vector<64x128xf32> to vector<64x128xbf16>
    %c0_6 = arith.constant 0 : index
    %c2 = arith.constant 2 : index
    %c0_7 = arith.constant 0 : index
    %c0_8 = arith.constant 0 : index
    %16 = vector.load %arg1[%c0_6, %c2, %c0_7, %c0_8] : memref<8x4x8x128xf32, #tpu.memory_space<vmem>>, vector<8x1x8x128xf32>
    %17 = vector.shape_cast %16 : vector<8x1x8x128xf32> to vector<8x8x128xf32>
    %18 = vector.shape_cast %17 : vector<8x8x128xf32> to vector<64x128xf32>
    %19 = arith.truncf %18 : vector<64x128xf32> to vector<64x128xbf16>
    %20 = vector.extract_strided_slice %18 {offsets = [1, 0], sizes = [63, 128], strides = [1, 1]} : vector<64x128xf32> to vector<63x128xf32>
    %21 = vector.extract_strided_slice %18 {offsets = [0, 0], sizes = [1, 128], strides = [1, 1]} : vector<64x128xf32> to vector<1x128xf32>
    %22 = tpu.concatenate %20, %21 in 0 : vector<63x128xf32>, vector<1x128xf32> -> vector<64x128xf32>
    %23 = arith.truncf %22 : vector<64x128xf32> to vector<64x128xbf16>
    %c0_9 = arith.constant 0 : index
    %c3 = arith.constant 3 : index
    %c0_10 = arith.constant 0 : index
    %c0_11 = arith.constant 0 : index
    %24 = vector.load %arg1[%c0_9, %c3, %c0_10, %c0_11] : memref<8x4x8x128xf32, #tpu.memory_space<vmem>>, vector<8x1x8x128xf32>
    %25 = vector.shape_cast %24 : vector<8x1x8x128xf32> to vector<8x8x128xf32>
    %26 = vector.shape_cast %25 : vector<8x8x128xf32> to vector<64x128xf32>
    %27 = arith.truncf %26 : vector<64x128xf32> to vector<64x128xbf16>
    %28 = vector.extract_strided_slice %26 {offsets = [1, 0], sizes = [63, 128], strides = [1, 1]} : vector<64x128xf32> to vector<63x128xf32>
    %29 = vector.extract_strided_slice %26 {offsets = [0, 0], sizes = [1, 128], strides = [1, 1]} : vector<64x128xf32> to vector<1x128xf32>
    %30 = tpu.concatenate %28, %29 in 0 : vector<63x128xf32>, vector<1x128xf32> -> vector<64x128xf32>
    %31 = arith.truncf %30 : vector<64x128xf32> to vector<64x128xbf16>
    %c0_12 = arith.constant 0 : index
    %c0_13 = arith.constant 0 : index
    %32 = vector.load %arg2[%c0_12, %c0_13] : memref<640x256xbf16, #tpu.memory_space<vmem>>, vector<640x256xbf16>
    %c0_14 = arith.constant 0 : index
    %c0_15 = arith.constant 0 : index
    %33 = vector.load %arg3[%c0_14, %c0_15] : memref<1x128xf32, #tpu.memory_space<vmem>>, vector<1x128xf32>
    %34 = tpu.concatenate %3, %11, %19, %27, %7 in 1 : vector<64x128xbf16>, vector<64x128xbf16>, vector<64x128xbf16>, vector<64x128xbf16>, vector<64x128xbf16> -> vector<64x640xbf16>
    %cst = arith.constant dense<0.000000e+00> : vector<64x256xf32>
    %35 = tpu.matmul %34, %32, %cst {dimension_numbers = #tpu.dot_dimension_numbers<[1], [0], [0], [1], [0, 0, 1, 1], [], []>} : vector<64x640xbf16>, vector<640x256xbf16>, vector<64x256xf32> -> vector<64x256xf32>
    %36 = vector.extract_strided_slice %35 {offsets = [0, 0], sizes = [64, 128], strides = [1, 1]} : vector<64x256xf32> to vector<64x128xf32>
    %37 = vector.extract_strided_slice %35 {offsets = [0, 128], sizes = [64, 128], strides = [1, 1]} : vector<64x256xf32> to vector<64x128xf32>
    %38 = arith.maximumf %36, %37 : vector<64x128xf32>
    %39 = tpu.concatenate %11, %19, %27, %7, %15 in 1 : vector<64x128xbf16>, vector<64x128xbf16>, vector<64x128xbf16>, vector<64x128xbf16>, vector<64x128xbf16> -> vector<64x640xbf16>
    %cst_16 = arith.constant dense<0.000000e+00> : vector<64x256xf32>
    %40 = tpu.matmul %39, %32, %cst_16 {dimension_numbers = #tpu.dot_dimension_numbers<[1], [0], [0], [1], [0, 0, 1, 1], [], []>} : vector<64x640xbf16>, vector<640x256xbf16>, vector<64x256xf32> -> vector<64x256xf32>
    %41 = vector.extract_strided_slice %40 {offsets = [0, 0], sizes = [64, 128], strides = [1, 1]} : vector<64x256xf32> to vector<64x128xf32>
    %42 = vector.extract_strided_slice %40 {offsets = [0, 128], sizes = [64, 128], strides = [1, 1]} : vector<64x256xf32> to vector<64x128xf32>
    %43 = arith.maximumf %41, %42 : vector<64x128xf32>
    %44 = arith.maximumf %38, %43 : vector<64x128xf32>
    %45 = vector.broadcast %33 : vector<1x128xf32> to vector<64x128xf32>
    %46 = arith.addf %44, %45 : vector<64x128xf32>
    %cst_17 = arith.constant 0.000000e+00 : f32
    %47 = vector.broadcast %cst_17 : f32 to vector<64x128xf32>
    %48 = arith.maximumf %46, %47 : vector<64x128xf32>
    %49 = tpu.concatenate %19, %27, %7, %15, %23 in 1 : vector<64x128xbf16>, vector<64x128xbf16>, vector<64x128xbf16>, vector<64x128xbf16>, vector<64x128xbf16> -> vector<64x640xbf16>
    %cst_18 = arith.constant dense<0.000000e+00> : vector<64x256xf32>
    %50 = tpu.matmul %49, %32, %cst_18 {dimension_numbers = #tpu.dot_dimension_numbers<[1], [0], [0], [1], [0, 0, 1, 1], [], []>} : vector<64x640xbf16>, vector<640x256xbf16>, vector<64x256xf32> -> vector<64x256xf32>
    %51 = vector.extract_strided_slice %50 {offsets = [0, 0], sizes = [64, 128], strides = [1, 1]} : vector<64x256xf32> to vector<64x128xf32>
    %52 = vector.extract_strided_slice %50 {offsets = [0, 128], sizes = [64, 128], strides = [1, 1]} : vector<64x256xf32> to vector<64x128xf32>
    %53 = arith.maximumf %51, %52 : vector<64x128xf32>
    %54 = tpu.concatenate %27, %7, %15, %23, %31 in 1 : vector<64x128xbf16>, vector<64x128xbf16>, vector<64x128xbf16>, vector<64x128xbf16>, vector<64x128xbf16> -> vector<64x640xbf16>
    %cst_19 = arith.constant dense<0.000000e+00> : vector<64x256xf32>
    %55 = tpu.matmul %54, %32, %cst_19 {dimension_numbers = #tpu.dot_dimension_numbers<[1], [0], [0], [1], [0, 0, 1, 1], [], []>} : vector<64x640xbf16>, vector<640x256xbf16>, vector<64x256xf32> -> vector<64x256xf32>
    %56 = vector.extract_strided_slice %55 {offsets = [0, 0], sizes = [64, 128], strides = [1, 1]} : vector<64x256xf32> to vector<64x128xf32>
    %57 = vector.extract_strided_slice %55 {offsets = [0, 128], sizes = [64, 128], strides = [1, 1]} : vector<64x256xf32> to vector<64x128xf32>
    %58 = arith.maximumf %56, %57 : vector<64x128xf32>
    %59 = arith.maximumf %53, %58 : vector<64x128xf32>
    %60 = vector.broadcast %33 : vector<1x128xf32> to vector<64x128xf32>
    %61 = arith.addf %59, %60 : vector<64x128xf32>
    %cst_20 = arith.constant 0.000000e+00 : f32
    %62 = vector.broadcast %cst_20 : f32 to vector<64x128xf32>
    %63 = arith.maximumf %61, %62 : vector<64x128xf32>
    %64 = arith.truncf %48 : vector<64x128xf32> to vector<64x128xbf16>
    %65 = vector.extract_strided_slice %48 {offsets = [1, 0], sizes = [63, 128], strides = [1, 1]} : vector<64x128xf32> to vector<63x128xf32>
    %66 = vector.extract_strided_slice %48 {offsets = [0, 0], sizes = [1, 128], strides = [1, 1]} : vector<64x128xf32> to vector<1x128xf32>
    %67 = tpu.concatenate %65, %66 in 0 : vector<63x128xf32>, vector<1x128xf32> -> vector<64x128xf32>
    %68 = arith.truncf %67 : vector<64x128xf32> to vector<64x128xbf16>
    %69 = vector.extract_strided_slice %48 {offsets = [2, 0], sizes = [62, 128], strides = [1, 1]} : vector<64x128xf32> to vector<62x128xf32>
    %70 = vector.extract_strided_slice %48 {offsets = [0, 0], sizes = [2, 128], strides = [1, 1]} : vector<64x128xf32> to vector<2x128xf32>
    %71 = tpu.concatenate %69, %70 in 0 : vector<62x128xf32>, vector<2x128xf32> -> vector<64x128xf32>
    %72 = arith.truncf %71 : vector<64x128xf32> to vector<64x128xbf16>
    %73 = arith.truncf %63 : vector<64x128xf32> to vector<64x128xbf16>
    %74 = vector.extract_strided_slice %63 {offsets = [1, 0], sizes = [63, 128], strides = [1, 1]} : vector<64x128xf32> to vector<63x128xf32>
    %75 = vector.extract_strided_slice %63 {offsets = [0, 0], sizes = [1, 128], strides = [1, 1]} : vector<64x128xf32> to vector<1x128xf32>
    %76 = tpu.concatenate %74, %75 in 0 : vector<63x128xf32>, vector<1x128xf32> -> vector<64x128xf32>
    %77 = arith.truncf %76 : vector<64x128xf32> to vector<64x128xbf16>
    %78 = vector.extract_strided_slice %63 {offsets = [2, 0], sizes = [62, 128], strides = [1, 1]} : vector<64x128xf32> to vector<62x128xf32>
    %79 = vector.extract_strided_slice %63 {offsets = [0, 0], sizes = [2, 128], strides = [1, 1]} : vector<64x128xf32> to vector<2x128xf32>
    %80 = tpu.concatenate %78, %79 in 0 : vector<62x128xf32>, vector<2x128xf32> -> vector<64x128xf32>
    %81 = arith.truncf %80 : vector<64x128xf32> to vector<64x128xbf16>
    %c0_21 = arith.constant 0 : index
    %c0_22 = arith.constant 0 : index
    %82 = vector.load %arg4[%c0_21, %c0_22] : memref<640x256xbf16, #tpu.memory_space<vmem>>, vector<640x256xbf16>
    %c0_23 = arith.constant 0 : index
    %c0_24 = arith.constant 0 : index
    %83 = vector.load %arg5[%c0_23, %c0_24] : memref<1x128xf32, #tpu.memory_space<vmem>>, vector<1x128xf32>
    %84 = tpu.concatenate %64, %73, %68, %77, %72 in 1 : vector<64x128xbf16>, vector<64x128xbf16>, vector<64x128xbf16>, vector<64x128xbf16>, vector<64x128xbf16> -> vector<64x640xbf16>
    %cst_25 = arith.constant dense<0.000000e+00> : vector<64x256xf32>
    %85 = tpu.matmul %84, %82, %cst_25 {dimension_numbers = #tpu.dot_dimension_numbers<[1], [0], [0], [1], [0, 0, 1, 1], [], []>} : vector<64x640xbf16>, vector<640x256xbf16>, vector<64x256xf32> -> vector<64x256xf32>
    %86 = vector.extract_strided_slice %85 {offsets = [0, 0], sizes = [64, 128], strides = [1, 1]} : vector<64x256xf32> to vector<64x128xf32>
    %87 = vector.extract_strided_slice %85 {offsets = [0, 128], sizes = [64, 128], strides = [1, 1]} : vector<64x256xf32> to vector<64x128xf32>
    %88 = arith.maximumf %86, %87 : vector<64x128xf32>
    %89 = tpu.concatenate %73, %68, %77, %72, %81 in 1 : vector<64x128xbf16>, vector<64x128xbf16>, vector<64x128xbf16>, vector<64x128xbf16>, vector<64x128xbf16> -> vector<64x640xbf16>
    %cst_26 = arith.constant dense<0.000000e+00> : vector<64x256xf32>
    %90 = tpu.matmul %89, %82, %cst_26 {dimension_numbers = #tpu.dot_dimension_numbers<[1], [0], [0], [1], [0, 0, 1, 1], [], []>} : vector<64x640xbf16>, vector<640x256xbf16>, vector<64x256xf32> -> vector<64x256xf32>
    %91 = vector.extract_strided_slice %90 {offsets = [0, 0], sizes = [64, 128], strides = [1, 1]} : vector<64x256xf32> to vector<64x128xf32>
    %92 = vector.extract_strided_slice %90 {offsets = [0, 128], sizes = [64, 128], strides = [1, 1]} : vector<64x256xf32> to vector<64x128xf32>
    %93 = arith.maximumf %91, %92 : vector<64x128xf32>
    %94 = arith.maximumf %88, %93 : vector<64x128xf32>
    %95 = vector.broadcast %83 : vector<1x128xf32> to vector<64x128xf32>
    %96 = arith.addf %94, %95 : vector<64x128xf32>
    %cst_27 = arith.constant 0.000000e+00 : f32
    %97 = vector.broadcast %cst_27 : f32 to vector<64x128xf32>
    %98 = arith.maximumf %96, %97 : vector<64x128xf32>
    %99 = vector.shape_cast %98 : vector<64x128xf32> to vector<8x8x128xf32>
    %100 = vector.extract_strided_slice %99 {offsets = [0, 0, 0], sizes = [8, 1, 128], strides = [1, 1, 1]} : vector<8x8x128xf32> to vector<8x1x128xf32>
    %101 = vector.shape_cast %100 : vector<8x1x128xf32> to vector<8x128xf32>
    %102 = vector.extract_strided_slice %99 {offsets = [0, 1, 0], sizes = [8, 1, 128], strides = [1, 1, 1]} : vector<8x8x128xf32> to vector<8x1x128xf32>
    %103 = vector.shape_cast %102 : vector<8x1x128xf32> to vector<8x128xf32>
    %104 = vector.extract_strided_slice %99 {offsets = [0, 2, 0], sizes = [8, 1, 128], strides = [1, 1, 1]} : vector<8x8x128xf32> to vector<8x1x128xf32>
    %105 = vector.shape_cast %104 : vector<8x1x128xf32> to vector<8x128xf32>
    %106 = vector.extract_strided_slice %99 {offsets = [0, 3, 0], sizes = [8, 1, 128], strides = [1, 1, 1]} : vector<8x8x128xf32> to vector<8x1x128xf32>
    %107 = vector.shape_cast %106 : vector<8x1x128xf32> to vector<8x128xf32>
    %108 = vector.extract_strided_slice %99 {offsets = [0, 4, 0], sizes = [8, 1, 128], strides = [1, 1, 1]} : vector<8x8x128xf32> to vector<8x1x128xf32>
    %109 = vector.shape_cast %108 : vector<8x1x128xf32> to vector<8x128xf32>
    %110 = tpu.concatenate %101, %103, %105, %107, %109 in 1 : vector<8x128xf32>, vector<8x128xf32>, vector<8x128xf32>, vector<8x128xf32>, vector<8x128xf32> -> vector<8x640xf32>
    %111 = arith.truncf %110 : vector<8x640xf32> to vector<8x640xbf16>
    %c0_28 = arith.constant 0 : index
    %c0_29 = arith.constant 0 : index
    %112 = vector.load %arg6[%c0_28, %c0_29] : memref<640x128xbf16, #tpu.memory_space<vmem>>, vector<640x128xbf16>
    %cst_30 = arith.constant dense<0.000000e+00> : vector<8x128xf32>
    %113 = tpu.matmul %111, %112, %cst_30 {dimension_numbers = #tpu.dot_dimension_numbers<[1], [0], [0], [1], [0, 0, 1, 1], [], []>} : vector<8x640xbf16>, vector<640x128xbf16>, vector<8x128xf32> -> vector<8x128xf32>
    %c0_31 = arith.constant 0 : index
    %c0_32 = arith.constant 0 : index
    %114 = vector.load %arg7[%c0_31, %c0_32] : memref<1x128xf32, #tpu.memory_space<vmem>>, vector<1x128xf32>
    %115 = vector.broadcast %114 : vector<1x128xf32> to vector<8x128xf32>
    %116 = arith.addf %113, %115 : vector<8x128xf32>
    %cst_33 = arith.constant 0.000000e+00 : f32
    %117 = vector.broadcast %cst_33 : f32 to vector<8x128xf32>
    %118 = arith.maximumf %116, %117 : vector<8x128xf32>
    %119 = arith.truncf %118 : vector<8x128xf32> to vector<8x128xbf16>
    %c0_34 = arith.constant 0 : index
    %c0_35 = arith.constant 0 : index
    %120 = vector.load %arg8[%c0_34, %c0_35] : memref<128x128xbf16, #tpu.memory_space<vmem>>, vector<128x128xbf16>
    %cst_36 = arith.constant dense<0.000000e+00> : vector<8x128xf32>
    %121 = tpu.matmul %119, %120, %cst_36 {dimension_numbers = #tpu.dot_dimension_numbers<[1], [0], [0], [1], [0, 0, 1, 1], [], []>} : vector<8x128xbf16>, vector<128x128xbf16>, vector<8x128xf32> -> vector<8x128xf32>
    %c0_37 = arith.constant 0 : index
    %c0_38 = arith.constant 0 : index
    %122 = vector.load %arg9[%c0_37, %c0_38] : memref<1x128xf32, #tpu.memory_space<vmem>>, vector<1x128xf32>
    %123 = vector.broadcast %122 : vector<1x128xf32> to vector<8x128xf32>
    %124 = arith.addf %121, %123 : vector<8x128xf32>
    %cst_39 = arith.constant 0.000000e+00 : f32
    %125 = vector.broadcast %cst_39 : f32 to vector<8x128xf32>
    %126 = arith.maximumf %124, %125 : vector<8x128xf32>
    %127 = arith.truncf %126 : vector<8x128xf32> to vector<8x128xbf16>
    %c0_40 = arith.constant 0 : index
    %c0_41 = arith.constant 0 : index
    %128 = vector.load %arg10[%c0_40, %c0_41] : memref<128x128xbf16, #tpu.memory_space<vmem>>, vector<128x128xbf16>
    %cst_42 = arith.constant dense<0.000000e+00> : vector<8x128xf32>
    %129 = tpu.matmul %127, %128, %cst_42 {dimension_numbers = #tpu.dot_dimension_numbers<[1], [0], [0], [1], [0, 0, 1, 1], [], []>} : vector<8x128xbf16>, vector<128x128xbf16>, vector<8x128xf32> -> vector<8x128xf32>
    %c0_43 = arith.constant 0 : index
    %c0_44 = arith.constant 0 : index
    %130 = vector.load %arg11[%c0_43, %c0_44] : memref<1x128xf32, #tpu.memory_space<vmem>>, vector<1x128xf32>
    %131 = vector.broadcast %130 : vector<1x128xf32> to vector<8x128xf32>
    %132 = arith.addf %129, %131 : vector<8x128xf32>
    %c0_45 = arith.constant 0 : index
    %c0_46 = arith.constant 0 : index
    %133 = vector.load %arg12[%c0_45, %c0_46] : memref<8x128xf32, #tpu.memory_space<vmem>>, vector<8x128xf32>
    tpu.vector_store %arg12[%c0_45, %c0_46], %132 {strides = array<i32>} : memref<8x128xf32, #tpu.memory_space<vmem>>, vector<8x128xf32>,
    return
  }
  func.func @transform_0(%arg0: i32) -> (i32, i32, i32, i32) {
    %c0_i32 = arith.constant 0 : i32
    %c0_i32_0 = arith.constant 0 : i32
    %c0_i32_1 = arith.constant 0 : i32
    %c0_i32_2 = arith.constant 0 : i32
    return %arg0, %c0_i32, %c0_i32_0, %c0_i32_1 : i32, i32, i32, i32
  }
  func.func @transform_1(%arg0: i32) -> (i32, i32) {
    %c0_i32 = arith.constant 0 : i32
    %c0_i32_0 = arith.constant 0 : i32
    %c0_i32_1 = arith.constant 0 : i32
    return %c0_i32, %c0_i32_0 : i32, i32
  }
  func.func @transform_2(%arg0: i32) -> (i32, i32) {
    %c0_i32 = arith.constant 0 : i32
    %c0_i32_0 = arith.constant 0 : i32
    %c0_i32_1 = arith.constant 0 : i32
    return %c0_i32, %c0_i32_0 : i32, i32
  }
  func.func @transform_3(%arg0: i32) -> (i32, i32) {
    %c0_i32 = arith.constant 0 : i32
    %c0_i32_0 = arith.constant 0 : i32
    %c0_i32_1 = arith.constant 0 : i32
    return %c0_i32, %c0_i32_0 : i32, i32
  }
  func.func @transform_4(%arg0: i32) -> (i32, i32) {
    %c0_i32 = arith.constant 0 : i32
    %c0_i32_0 = arith.constant 0 : i32
    %c0_i32_1 = arith.constant 0 : i32
    return %c0_i32, %c0_i32_0 : i32, i32
  }
  func.func @transform_5(%arg0: i32) -> (i32, i32) {
    %c0_i32 = arith.constant 0 : i32
    %c0_i32_0 = arith.constant 0 : i32
    %c0_i32_1 = arith.constant 0 : i32
    return %c0_i32, %c0_i32_0 : i32, i32
  }
  func.func @transform_6(%arg0: i32) -> (i32, i32) {
    %c0_i32 = arith.constant 0 : i32
    %c0_i32_0 = arith.constant 0 : i32
    %c0_i32_1 = arith.constant 0 : i32
    return %c0_i32, %c0_i32_0 : i32, i32
  }
  func.func @transform_7(%arg0: i32) -> (i32, i32) {
    %c0_i32 = arith.constant 0 : i32
    %c0_i32_0 = arith.constant 0 : i32
    %c0_i32_1 = arith.constant 0 : i32
    return %c0_i32, %c0_i32_0 : i32, i32
  }
  func.func @transform_8(%arg0: i32) -> (i32, i32) {
    %c0_i32 = arith.constant 0 : i32
    %c0_i32_0 = arith.constant 0 : i32
    %c0_i32_1 = arith.constant 0 : i32
    return %c0_i32, %c0_i32_0 : i32, i32
  }
  func.func @transform_9(%arg0: i32) -> (i32, i32) {
    %c0_i32 = arith.constant 0 : i32
    %c0_i32_0 = arith.constant 0 : i32
    %c0_i32_1 = arith.constant 0 : i32
    return %c0_i32, %c0_i32_0 : i32, i32
  }
  func.func @transform_10(%arg0: i32) -> (i32, i32) {
    %c0_i32 = arith.constant 0 : i32
    %c0_i32_0 = arith.constant 0 : i32
    %c0_i32_1 = arith.constant 0 : i32
    return %c0_i32, %c0_i32_0 : i32, i32
  }
  func.func @transform_11(%arg0: i32) -> (i32, i32) {
    %c0_i32 = arith.constant 0 : i32
    %c0_i32_0 = arith.constant 0 : i32
    return %arg0, %c0_i32 : i32, i32
  }
}

</mosaic_0001>

<llo_original>
// kernel: net_forward.1
$region0: #{net_forward.1}
  #allocation0 [shape = 'u32[]', space=smem, size = 0x4, offset = 0x4, fixed_abs, tag = 'smem constant byte address 0x4 - core index']
  #allocation1 [shape = 'u32[144,128]{1,0:T(1,128)}', space=vmem, size = 0x12000, scoped, tag = 'internal scratch']
  %s0 = inlined_call_operand.vmem [shape: f32[8,4,8,128], index: 0, kind: input, shape index: {}]
  %s1 = inlined_call_operand.vmem [shape: bf16[640,256], index: 1, kind: input, shape index: {}]
  %s2 = inlined_call_operand.vmem [shape: f32[1,128], index: 2, kind: input, shape index: {}]
  %s3 = inlined_call_operand.vmem [shape: bf16[640,256], index: 3, kind: input, shape index: {}]
  %s4 = inlined_call_operand.vmem [shape: f32[1,128], index: 4, kind: input, shape index: {}]
  %s5 = inlined_call_operand.vmem [shape: bf16[640,128], index: 5, kind: input, shape index: {}]
  %s6 = inlined_call_operand.vmem [shape: f32[1,128], index: 6, kind: input, shape index: {}]
  %s7 = inlined_call_operand.vmem [shape: bf16[128,128], index: 7, kind: input, shape index: {}]
  %s8 = inlined_call_operand.vmem [shape: f32[1,128], index: 8, kind: input, shape index: {}]
  %s9 = inlined_call_operand.vmem [shape: bf16[128,128], index: 9, kind: input, shape index: {}]
  %s10 = inlined_call_operand.vmem [shape: f32[1,128], index: 10, kind: input, shape index: {}]
  %s11 = inlined_call_operand.hbm [shape: f32[8,128], index: 11, kind: output, shape index: {}]
  %s12 = sld [smem:[#allocation0]]
  $region54: #{net_forward.1} parent=0
    _
  %s14 = ssub.s32 1, %s12
  %s15 = scalar_select 0, %s14, %s12
  $region1: #{net_forward.1} parent=0
    #allocation2 [shape = 'u8[4096]{0}', space=vmem, size = 0x1000, scoped, tag = 'output window, operand 0, single buffered']
    #allocation3 [shape = 's32[1]{0}', space=sflag, size = 0x4, scoped, tag = 'scoped memory for net_forward.1']
    %16 = vsyncpa [#allocation3], 0
    // Predicated region
    $region2: #{net_forward.1} parent=1 // pred_check
      _
    $region3: #{net_forward.1} parent=1 // pred_check_branch
      %18 = sbr.rel (0) target = $region5
    $region4: #{net_forward.1} parent=1 // pred_region
      _
    $region5: #{net_forward.1} parent=1 // pred_fallthru
      _
    // Predicated region
    $region6: #{net_forward.1} parent=1 // pred_check
      _
    $region7: #{net_forward.1} parent=1 // pred_check_branch
      %20 = sbr.rel (0) target = $region9
    $region8: #{net_forward.1} parent=1 // pred_region
      _
    $region9: #{net_forward.1} parent=1 // pred_fallthru
      _
    // Predicated region
    $region10: #{net_forward.1} parent=1 // pred_check
      _
    $region11: #{net_forward.1} parent=1 // pred_check_branch
      %22 = sbr.rel (0) target = $region13
    $region12: #{net_forward.1} parent=1 // pred_region
      _
    $region13: #{net_forward.1} parent=1 // pred_fallthru
      _
    // Predicated region
    $region14: #{net_forward.1} parent=1 // pred_check
      _
    $region15: #{net_forward.1} parent=1 // pred_check_branch
      %24 = sbr.rel (0) target = $region17
    $region16: #{net_forward.1} parent=1 // pred_region
      _
    $region17: #{net_forward.1} parent=1 // pred_fallthru
      _
    // Predicated region
    $region18: #{net_forward.1} parent=1 // pred_check
      _
    $region19: #{net_forward.1} parent=1 // pred_check_branch
      %26 = sbr.rel (0) target = $region21
    $region20: #{net_forward.1} parent=1 // pred_region
      _
    $region21: #{net_forward.1} parent=1 // pred_fallthru
      _
    // Predicated region
    $region22: #{net_forward.1} parent=1 // pred_check
      _
    $region23: #{net_forward.1} parent=1 // pred_check_branch
      %28 = sbr.rel (0) target = $region25
    $region24: #{net_forward.1} parent=1 // pred_region
      _
    $region25: #{net_forward.1} parent=1 // pred_fallthru
      _
    // Predicated region
    $region26: #{net_forward.1} parent=1 // pred_check
      _
    $region27: #{net_forward.1} parent=1 // pred_check_branch
      %30 = sbr.rel (0) target = $region29
    $region28: #{net_forward.1} parent=1 // pred_region
      _
    $region29: #{net_forward.1} parent=1 // pred_fallthru
      _
    // Predicated region
    $region30: #{net_forward.1} parent=1 // pred_check
      _
    $region31: #{net_forward.1} parent=1 // pred_check_branch
      %32 = sbr.rel (0) target = $region33
    $region32: #{net_forward.1} parent=1 // pred_region
      _
    $region33: #{net_forward.1} parent=1 // pred_fallthru
      _
    // Predicated region
    $region34: #{net_forward.1} parent=1 // pred_check
      _
    $region35: #{net_forward.1} parent=1 // pred_check_branch
      %34 = sbr.rel (0) target = $region37
    $region36: #{net_forward.1} parent=1 // pred_region
      _
    $region37: #{net_forward.1} parent=1 // pred_fallthru
      _
    // Predicated region
    $region38: #{net_forward.1} parent=1 // pred_check
      _
    $region39: #{net_forward.1} parent=1 // pred_check_branch
      %36 = sbr.rel (0) target = $region41
    $region40: #{net_forward.1} parent=1 // pred_region
      _
    $region41: #{net_forward.1} parent=1 // pred_fallthru
      _
    // Predicated region
    $region42: #{net_forward.1} parent=1 // pred_check
      _
    $region43: #{net_forward.1} parent=1 // pred_check_branch
      %38 = sbr.rel (0) target = $region45
    $region44: #{net_forward.1} parent=1 // pred_region
      _
    $region45: #{net_forward.1} parent=1 // pred_fallthru
      _
    %v40 = vld [vmem:[%s0] sm:$0xff]
    %v41 = vld [vmem:[%s0 + $0x20] sm:$0xff]
    %v42 = vld [vmem:[%s0 + $0x40] sm:$0xff]
    %v43 = vld [vmem:[%s0 + $0x60] sm:$0xff]
    %v44 = vld [vmem:[%s0 + $0x80] sm:$0xff]
    %v45 = vld [vmem:[%s0 + $0xa0] sm:$0xff]
    %v46 = vld [vmem:[%s0 + $0xc0] sm:$0xff]
    %v47 = vld [vmem:[%s0 + $0xe0] sm:$0xff]
    %v48 = vpack.c.bf16 %v41, %v40
    %v49 = vpack.c.bf16 %v43, %v42
    %v50 = vpack.c.bf16 %v45, %v44
    %v51 = vpack.c.bf16 %v47, %v46
    %vm60 = vcmask 1046528
    %v61 = vrot.slane %v40, 1
    %v62 = vrot.slane %v41, 1
    %v63 = vsel %vm60, %v61, %v62
    %v64 = vrot.slane %v42, 1
    %v65 = vsel %vm60, %v62, %v64
    %v66 = vrot.slane %v43, 1
    %v67 = vsel %vm60, %v64, %v66
    %v68 = vrot.slane %v44, 1
    %v69 = vsel %vm60, %v66, %v68
    %v70 = vrot.slane %v45, 1
    %v71 = vsel %vm60, %v68, %v70
    %v72 = vrot.slane %v46, 1
    %v73 = vsel %vm60, %v70, %v72
    %v74 = vrot.slane %v47, 1
    %v75 = vsel %vm60, %v72, %v74
    %v85 = vsel %vm60, %v74, %v61
    %v86 = vpack.c.bf16 %v65, %v63
    %v87 = vpack.c.bf16 %v69, %v67
    %v88 = vpack.c.bf16 %v73, %v71
    %v89 = vpack.c.bf16 %v85, %v75
    %s90 = scalar_lea.vmem %s0, 8
    %v91 = vld [vmem:[%s90] sm:$0xff]
    %v92 = vld [vmem:[%s90 + $0x20] sm:$0xff]
    %v93 = vld [vmem:[%s90 + $0x40] sm:$0xff]
    %v94 = vld [vmem:[%s90 + $0x60] sm:$0xff]
    %v95 = vld [vmem:[%s90 + $0x80] sm:$0xff]
    %v96 = vld [vmem:[%s90 + $0xa0] sm:$0xff]
    %v97 = vld [vmem:[%s90 + $0xc0] sm:$0xff]
    %v98 = vld [vmem:[%s90 + $0xe0] sm:$0xff]
    %v99 = vpack.c.bf16 %v92, %v91
    %v100 = vpack.c.bf16 %v94, %v93
    %v101 = vpack.c.bf16 %v96, %v95
    %v102 = vpack.c.bf16 %v98, %v97
    %v111 = vrot.slane %v91, 1
    %v112 = vrot.slane %v92, 1
    %v113 = vsel %vm60, %v111, %v112
    %v114 = vrot.slane %v93, 1
    %v115 = vsel %vm60, %v112, %v114
    %v116 = vrot.slane %v94, 1
    %v117 = vsel %vm60, %v114, %v116
    %v118 = vrot.slane %v95, 1
    %v119 = vsel %vm60, %v116, %v118
    %v120 = vrot.slane %v96, 1
    %v121 = vsel %vm60, %v118, %v120
    %v122 = vrot.slane %v97, 1
    %v123 = vsel %vm60, %v120, %v122
    %v124 = vrot.slane %v98, 1
    %v125 = vsel %vm60, %v122, %v124
    %v135 = vsel %vm60, %v124, %v111
    %v136 = vpack.c.bf16 %v115, %v113
    %v137 = vpack.c.bf16 %v119, %v117
    %v138 = vpack.c.bf16 %v123, %v121
    %v139 = vpack.c.bf16 %v135, %v125
    %s140 = scalar_lea.vmem %s0, 16
    %v141 = vld [vmem:[%s140] sm:$0xff]
    %v142 = vld [vmem:[%s140 + $0x20] sm:$0xff]
    %v143 = vld [vmem:[%s140 + $0x40] sm:$0xff]
    %v144 = vld [vmem:[%s140 + $0x60] sm:$0xff]
    %v145 = vld [vmem:[%s140 + $0x80] sm:$0xff]
    %v146 = vld [vmem:[%s140 + $0xa0] sm:$0xff]
    %v147 = vld [vmem:[%s140 + $0xc0] sm:$0xff]
    %v148 = vld [vmem:[%s140 + $0xe0] sm:$0xff]
    %v149 = vpack.c.bf16 %v142, %v141
    %v150 = vpack.c.bf16 %v144, %v143
    %v151 = vpack.c.bf16 %v146, %v145
    %v152 = vpack.c.bf16 %v148, %v147
    %v161 = vrot.slane %v141, 1
    %v162 = vrot.slane %v142, 1
    %v163 = vsel %vm60, %v161, %v162
    %v164 = vrot.slane %v143, 1
    %v165 = vsel %vm60, %v162, %v164
    %v166 = vrot.slane %v144, 1
    %v167 = vsel %vm60, %v164, %v166
    %v168 = vrot.slane %v145, 1
    %v169 = vsel %vm60, %v166, %v168
    %v170 = vrot.slane %v146, 1
    %v171 = vsel %vm60, %v168, %v170
    %v172 = vrot.slane %v147, 1
    %v173 = vsel %vm60, %v170, %v172
    %v174 = vrot.slane %v148, 1
    %v175 = vsel %vm60, %v172, %v174
    %v185 = vsel %vm60, %v174, %v161
    %v186 = vpack.c.bf16 %v165, %v163
    %v187 = vpack.c.bf16 %v169, %v167
    %v188 = vpack.c.bf16 %v173, %v171
    %v189 = vpack.c.bf16 %v185, %v175
    %s190 = scalar_lea.vmem %s0, 24
    %v191 = vld [vmem:[%s190] sm:$0xff]
    %v192 = vld [vmem:[%s190 + $0x20] sm:$0xff]
    %v193 = vld [vmem:[%s190 + $0x40] sm:$0xff]
    %v194 = vld [vmem:[%s190 + $0x60] sm:$0xff]
    %v195 = vld [vmem:[%s190 + $0x80] sm:$0xff]
    %v196 = vld [vmem:[%s190 + $0xa0] sm:$0xff]
    %v197 = vld [vmem:[%s190 + $0xc0] sm:$0xff]
    %v198 = vld [vmem:[%s190 + $0xe0] sm:$0xff]
    %v199 = vpack.c.bf16 %v192, %v191
    %v200 = vpack.c.bf16 %v194, %v193
    %v201 = vpack.c.bf16 %v196, %v195
    %v202 = vpack.c.bf16 %v198, %v197
    %v211 = vrot.slane %v191, 1
    %v212 = vrot.slane %v192, 1
    %v213 = vsel %vm60, %v211, %v212
    %v214 = vrot.slane %v193, 1
    %v215 = vsel %vm60, %v212, %v214
    %v216 = vrot.slane %v194, 1
    %v217 = vsel %vm60, %v214, %v216
    %v218 = vrot.slane %v195, 1
    %v219 = vsel %vm60, %v216, %v218
    %v220 = vrot.slane %v196, 1
    %v221 = vsel %vm60, %v218, %v220
    %v222 = vrot.slane %v197, 1
    %v223 = vsel %vm60, %v220, %v222
    %v224 = vrot.slane %v198, 1
    %v225 = vsel %vm60, %v222, %v224
    %v235 = vsel %vm60, %v224, %v211
    %v236 = vpack.c.bf16 %v215, %v213
    %v237 = vpack.c.bf16 %v219, %v217
    %v238 = vpack.c.bf16 %v223, %v221
    %v239 = vpack.c.bf16 %v235, %v225
    %v240 = vld [vmem:[%s1] sm:$0xff]
    %v241 = vld [vmem:[%s1 + $0x8] sm:$0xff]
    %v242 = vld [vmem:[%s1 + $0x10] sm:$0xff]
    %v243 = vld [vmem:[%s1 + $0x18] sm:$0xff]
    %v244 = vld [vmem:[%s1 + $0x20] sm:$0xff]
    %v245 = vld [vmem:[%s1 + $0x28] sm:$0xff]
    %v246 = vld [vmem:[%s1 + $0x30] sm:$0xff]
    %v247 = vld [vmem:[%s1 + $0x38] sm:$0xff]
    %v248 = vld [vmem:[%s1 + $0x40] sm:$0xff]
    %v249 = vld [vmem:[%s1 + $0x48] sm:$0xff]
    %v250 = vld [vmem:[%s1 + $0x50] sm:$0xff]
    %v251 = vld [vmem:[%s1 + $0x58] sm:$0xff]
    %v252 = vld [vmem:[%s1 + $0x60] sm:$0xff]
    %v253 = vld [vmem:[%s1 + $0x68] sm:$0xff]
    %v254 = vld [vmem:[%s1 + $0x70] sm:$0xff]
    %v255 = vld [vmem:[%s1 + $0x78] sm:$0xff]
    %v256 = vld [vmem:[%s1 + $0x80] sm:$0xff]
    %v257 = vld [vmem:[%s1 + $0x88] sm:$0xff]
    %v258 = vld [vmem:[%s1 + $0x90] sm:$0xff]
    %v259 = vld [vmem:[%s1 + $0x98] sm:$0xff]
    %v260 = vld [vmem:[%s1 + $0xa0] sm:$0xff]
    %v261 = vld [vmem:[%s1 + $0xa8] sm:$0xff]
    %v262 = vld [vmem:[%s1 + $0xb0] sm:$0xff]
    %v263 = vld [vmem:[%s1 + $0xb8] sm:$0xff]
    %v264 = vld [vmem:[%s1 + $0xc0] sm:$0xff]
    %v265 = vld [vmem:[%s1 + $0xc8] sm:$0xff]
    %v266 = vld [vmem:[%s1 + $0xd0] sm:$0xff]
    %v267 = vld [vmem:[%s1 + $0xd8] sm:$0xff]
    %v268 = vld [vmem:[%s1 + $0xe0] sm:$0xff]
    %v269 = vld [vmem:[%s1 + $0xe8] sm:$0xff]
    %v270 = vld [vmem:[%s1 + $0xf0] sm:$0xff]
    %v271 = vld [vmem:[%s1 + $0xf8] sm:$0xff]
    %v272 = vld [vmem:[%s1 + $0x100] sm:$0xff]
    %v273 = vld [vmem:[%s1 + $0x108] sm:$0xff]
    %v274 = vld [vmem:[%s1 + $0x110] sm:$0xff]
    %v275 = vld [vmem:[%s1 + $0x118] sm:$0xff]
    %v276 = vld [vmem:[%s1 + $0x120] sm:$0xff]
    %v277 = vld [vmem:[%s1 + $0x128] sm:$0xff]
    %v278 = vld [vmem:[%s1 + $0x130] sm:$0xff]
    %v279 = vld [vmem:[%s1 + $0x138] sm:$0xff]
    %v280 = vld [vmem:[%s1 + $0x140] sm:$0xff]
    %v281 = vld [vmem:[%s1 + $0x148] sm:$0xff]
    %v282 = vld [vmem:[%s1 + $0x150] sm:$0xff]
    %v283 = vld [vmem:[%s1 + $0x158] sm:$0xff]
    %v284 = vld [vmem:[%s1 + $0x160] sm:$0xff]
    %v285 = vld [vmem:[%s1 + $0x168] sm:$0xff]
    %v286 = vld [vmem:[%s1 + $0x170] sm:$0xff]
    %v287 = vld [vmem:[%s1 + $0x178] sm:$0xff]
    %v288 = vld [vmem:[%s1 + $0x180] sm:$0xff]
    %v289 = vld [vmem:[%s1 + $0x188] sm:$0xff]
    %v290 = vld [vmem:[%s1 + $0x190] sm:$0xff]
    %v291 = vld [vmem:[%s1 + $0x198] sm:$0xff]
    %v292 = vld [vmem:[%s1 + $0x1a0] sm:$0xff]
    %v293 = vld [vmem:[%s1 + $0x1a8] sm:$0xff]
    %v294 = vld [vmem:[%s1 + $0x1b0] sm:$0xff]
    %v295 = vld [vmem:[%s1 + $0x1b8] sm:$0xff]
    %v296 = vld [vmem:[%s1 + $0x1c0] sm:$0xff]
    %v297 = vld [vmem:[%s1 + $0x1c8] sm:$0xff]
    %v298 = vld [vmem:[%s1 + $0x1d0] sm:$0xff]
    %v299 = vld [vmem:[%s1 + $0x1d8] sm:$0xff]
    %v300 = vld [vmem:[%s1 + $0x1e0] sm:$0xff]
    %v301 = vld [vmem:[%s1 + $0x1e8] sm:$0xff]
    %v302 = vld [vmem:[%s1 + $0x1f0] sm:$0xff]
    %v303 = vld [vmem:[%s1 + $0x1f8] sm:$0xff]
    %v304 = vld [vmem:[%s1 + $0x200] sm:$0xff]
    %v305 = vld [vmem:[%s1 + $0x208] sm:$0xff]
    %v306 = vld [vmem:[%s1 + $0x210] sm:$0xff]
    %v307 = vld [vmem:[%s1 + $0x218] sm:$0xff]
    %v308 = vld [vmem:[%s1 + $0x220] sm:$0xff]
    %v309 = vld [vmem:[%s1 + $0x228] sm:$0xff]
    %v310 = vld [vmem:[%s1 + $0x230] sm:$0xff]
    %v311 = vld [vmem:[%s1 + $0x238] sm:$0xff]
    %v312 = vld [vmem:[%s1 + $0x240] sm:$0xff]
    %v313 = vld [vmem:[%s1 + $0x248] sm:$0xff]
    %v314 = vld [vmem:[%s1 + $0x250] sm:$0xff]
    %v315 = vld [vmem:[%s1 + $0x258] sm:$0xff]
    %v316 = vld [vmem:[%s1 + $0x260] sm:$0xff]
    %v317 = vld [vmem:[%s1 + $0x268] sm:$0xff]
    %v318 = vld [vmem:[%s1 + $0x270] sm:$0xff]
    %v319 = vld [vmem:[%s1 + $0x278] sm:$0xff]
    %v320 = vld [vmem:[%s2] sm:$0x1]
    %v401 = vunpack.c.l.b16 %v240
    %v402 = vunpack.c.h.b16 %v240
    %v403 = vunpack.c.l.b16 %v241
    %v404 = vunpack.c.h.b16 %v241
    %v405 = vunpack.c.l.b16 %v242
    %v406 = vunpack.c.h.b16 %v242
    %v407 = vunpack.c.l.b16 %v243
    %v408 = vunpack.c.h.b16 %v243
    %v409 = vunpack.c.l.b16 %v244
    %v410 = vunpack.c.h.b16 %v244
    %v411 = vunpack.c.l.b16 %v245
    %v412 = vunpack.c.h.b16 %v245
    %v413 = vunpack.c.l.b16 %v246
    %v414 = vunpack.c.h.b16 %v246
    %v415 = vunpack.c.l.b16 %v247
    %v416 = vunpack.c.h.b16 %v247
    %v417 = vunpack.c.l.b16 %v248
    %v418 = vunpack.c.h.b16 %v248
    %v419 = vunpack.c.l.b16 %v249
    %v420 = vunpack.c.h.b16 %v249
    %v421 = vunpack.c.l.b16 %v250
    %v422 = vunpack.c.h.b16 %v250
    %v423 = vunpack.c.l.b16 %v251
    %v424 = vunpack.c.h.b16 %v251
    %v425 = vunpack.c.l.b16 %v252
    %v426 = vunpack.c.h.b16 %v252
    %v427 = vunpack.c.l.b16 %v253
    %v428 = vunpack.c.h.b16 %v253
    %v429 = vunpack.c.l.b16 %v254
    %v430 = vunpack.c.h.b16 %v254
    %v431 = vunpack.c.l.b16 %v255
    %v432 = vunpack.c.h.b16 %v255
    %v433 = vunpack.c.l.b16 %v256
    %v434 = vunpack.c.h.b16 %v256
    %v435 = vunpack.c.l.b16 %v257
    %v436 = vunpack.c.h.b16 %v257
    %v437 = vunpack.c.l.b16 %v258
    %v438 = vunpack.c.h.b16 %v258
    %v439 = vunpack.c.l.b16 %v259
    %v440 = vunpack.c.h.b16 %v259
    %v441 = vunpack.c.l.b16 %v260
    %v442 = vunpack.c.h.b16 %v260
    %v443 = vunpack.c.l.b16 %v261
    %v444 = vunpack.c.h.b16 %v261
    %v445 = vunpack.c.l.b16 %v262
    %v446 = vunpack.c.h.b16 %v262
    %v447 = vunpack.c.l.b16 %v263
    %v448 = vunpack.c.h.b16 %v263
    %v449 = vunpack.c.l.b16 %v264
    %v450 = vunpack.c.h.b16 %v264
    %v451 = vunpack.c.l.b16 %v265
    %v452 = vunpack.c.h.b16 %v265
    %v453 = vunpack.c.l.b16 %v266
    %v454 = vunpack.c.h.b16 %v266
    %v455 = vunpack.c.l.b16 %v267
    %v456 = vunpack.c.h.b16 %v267
    %v457 = vunpack.c.l.b16 %v268
    %v458 = vunpack.c.h.b16 %v268
    %v459 = vunpack.c.l.b16 %v269
    %v460 = vunpack.c.h.b16 %v269
    %v461 = vunpack.c.l.b16 %v270
    %v462 = vunpack.c.h.b16 %v270
    %v463 = vunpack.c.l.b16 %v271
    %v464 = vunpack.c.h.b16 %v271
    %v465 = vunpack.c.l.b16 %v272
    %v466 = vunpack.c.h.b16 %v272
    %v467 = vunpack.c.l.b16 %v273
    %v468 = vunpack.c.h.b16 %v273
    %v469 = vunpack.c.l.b16 %v274
    %v470 = vunpack.c.h.b16 %v274
    %v471 = vunpack.c.l.b16 %v275
    %v472 = vunpack.c.h.b16 %v275
    %v473 = vunpack.c.l.b16 %v276
    %v474 = vunpack.c.h.b16 %v276
    %v475 = vunpack.c.l.b16 %v277
    %v476 = vunpack.c.h.b16 %v277
    %v477 = vunpack.c.l.b16 %v278
    %v478 = vunpack.c.h.b16 %v278
    %v479 = vunpack.c.l.b16 %v279
    %v480 = vunpack.c.h.b16 %v279
    %v481 = vunpack.c.l.b16 %v280
    %v482 = vunpack.c.h.b16 %v280
    %v483 = vunpack.c.l.b16 %v281
    %v484 = vunpack.c.h.b16 %v281
    %v485 = vunpack.c.l.b16 %v282
    %v486 = vunpack.c.h.b16 %v282
    %v487 = vunpack.c.l.b16 %v283
    %v488 = vunpack.c.h.b16 %v283
    %v489 = vunpack.c.l.b16 %v284
    %v490 = vunpack.c.h.b16 %v284
    %v491 = vunpack.c.l.b16 %v285
    %v492 = vunpack.c.h.b16 %v285
    %v493 = vunpack.c.l.b16 %v286
    %v494 = vunpack.c.h.b16 %v286
    %v495 = vunpack.c.l.b16 %v287
    %v496 = vunpack.c.h.b16 %v287
    %v497 = vunpack.c.l.b16 %v288
    %v498 = vunpack.c.h.b16 %v288
    %v499 = vunpack.c.l.b16 %v289
    %v500 = vunpack.c.h.b16 %v289
    %v501 = vunpack.c.l.b16 %v290
    %v502 = vunpack.c.h.b16 %v290
    %v503 = vunpack.c.l.b16 %v291
    %v504 = vunpack.c.h.b16 %v291
    %v505 = vunpack.c.l.b16 %v292
    %v506 = vunpack.c.h.b16 %v292
    %v507 = vunpack.c.l.b16 %v293
    %v508 = vunpack.c.h.b16 %v293
    %v509 = vunpack.c.l.b16 %v294
    %v510 = vunpack.c.h.b16 %v294
    %v511 = vunpack.c.l.b16 %v295
    %v512 = vunpack.c.h.b16 %v295
    %v513 = vunpack.c.l.b16 %v296
    %v514 = vunpack.c.h.b16 %v296
    %v515 = vunpack.c.l.b16 %v297
    %v516 = vunpack.c.h.b16 %v297
    %v517 = vunpack.c.l.b16 %v298
    %v518 = vunpack.c.h.b16 %v298
    %v519 = vunpack.c.l.b16 %v299
    %v520 = vunpack.c.h.b16 %v299
    %v521 = vunpack.c.l.b16 %v300
    %v522 = vunpack.c.h.b16 %v300
    %v523 = vunpack.c.l.b16 %v301
    %v524 = vunpack.c.h.b16 %v301
    %v525 = vunpack.c.l.b16 %v302
    %v526 = vunpack.c.h.b16 %v302
    %v527 = vunpack.c.l.b16 %v303
    %v528 = vunpack.c.h.b16 %v303
    %v529 = vunpack.c.l.b16 %v304
    %v530 = vunpack.c.h.b16 %v304
    %v531 = vunpack.c.l.b16 %v305
    %v532 = vunpack.c.h.b16 %v305
    %v533 = vunpack.c.l.b16 %v306
    %v534 = vunpack.c.h.b16 %v306
    %v535 = vunpack.c.l.b16 %v307
    %v536 = vunpack.c.h.b16 %v307
    %v537 = vunpack.c.l.b16 %v308
    %v538 = vunpack.c.h.b16 %v308
    %v539 = vunpack.c.l.b16 %v309
    %v540 = vunpack.c.h.b16 %v309
    %v541 = vunpack.c.l.b16 %v310
    %v542 = vunpack.c.h.b16 %v310
    %v543 = vunpack.c.l.b16 %v311
    %v544 = vunpack.c.h.b16 %v311
    %v545 = vunpack.c.l.b16 %v312
    %v546 = vunpack.c.h.b16 %v312
    %v547 = vunpack.c.l.b16 %v313
    %v548 = vunpack.c.h.b16 %v313
    %v549 = vunpack.c.l.b16 %v314
    %v550 = vunpack.c.h.b16 %v314
    %v551 = vunpack.c.l.b16 %v315
    %v552 = vunpack.c.h.b16 %v315
    %v553 = vunpack.c.l.b16 %v316
    %v554 = vunpack.c.h.b16 %v316
    %v555 = vunpack.c.l.b16 %v317
    %v556 = vunpack.c.h.b16 %v317
    %v557 = vunpack.c.l.b16 %v318
    %v558 = vunpack.c.h.b16 %v318
    %v559 = vunpack.c.l.b16 %v319
    %v560 = vunpack.c.h.b16 %v319
    %v561 = vpack.c.b16 %v403, %v401
    %v562 = vpack.c.b16 %v404, %v402
    %v563 = vpack.c.b16 %v407, %v405
    %v564 = vpack.c.b16 %v408, %v406
    %v565 = vpack.c.b16 %v411, %v409
    %v566 = vpack.c.b16 %v412, %v410
    %v567 = vpack.c.b16 %v415, %v413
    %v568 = vpack.c.b16 %v416, %v414
    %v569 = vpack.c.b16 %v419, %v417
    %v570 = vpack.c.b16 %v420, %v418
    %v571 = vpack.c.b16 %v423, %v421
    %v572 = vpack.c.b16 %v424, %v422
    %v573 = vpack.c.b16 %v427, %v425
    %v574 = vpack.c.b16 %v428, %v426
    %v575 = vpack.c.b16 %v431, %v429
    %v576 = vpack.c.b16 %v432, %v430
    %v577 = vpack.c.b16 %v435, %v433
    %v578 = vpack.c.b16 %v436, %v434
    %v579 = vpack.c.b16 %v439, %v437
    %v580 = vpack.c.b16 %v440, %v438
    %v581 = vpack.c.b16 %v443, %v441
    %v582 = vpack.c.b16 %v444, %v442
    %v583 = vpack.c.b16 %v447, %v445
    %v584 = vpack.c.b16 %v448, %v446
    %v585 = vpack.c.b16 %v451, %v449
    %v586 = vpack.c.b16 %v452, %v450
    %v587 = vpack.c.b16 %v455, %v453
    %v588 = vpack.c.b16 %v456, %v454
    %v589 = vpack.c.b16 %v459, %v457
    %v590 = vpack.c.b16 %v460, %v458
    %v591 = vpack.c.b16 %v463, %v461
    %v592 = vpack.c.b16 %v464, %v462
    %v593 = vpack.c.b16 %v467, %v465
    %v594 = vpack.c.b16 %v468, %v466
    %v595 = vpack.c.b16 %v471, %v469
    %v596 = vpack.c.b16 %v472, %v470
    %v597 = vpack.c.b16 %v475, %v473
    %v598 = vpack.c.b16 %v476, %v474
    %v599 = vpack.c.b16 %v479, %v477
    %v600 = vpack.c.b16 %v480, %v478
    %v601 = vpack.c.b16 %v483, %v481
    %v602 = vpack.c.b16 %v484, %v482
    %v603 = vpack.c.b16 %v487, %v485
    %v604 = vpack.c.b16 %v488, %v486
    %v605 = vpack.c.b16 %v491, %v489
    %v606 = vpack.c.b16 %v492, %v490
    %v607 = vpack.c.b16 %v495, %v493
    %v608 = vpack.c.b16 %v496, %v494
    %v609 = vpack.c.b16 %v499, %v497
    %v610 = vpack.c.b16 %v500, %v498
    %v611 = vpack.c.b16 %v503, %v501
    %v612 = vpack.c.b16 %v504, %v502
    %v613 = vpack.c.b16 %v507, %v505
    %v614 = vpack.c.b16 %v508, %v506
    %v615 = vpack.c.b16 %v511, %v509
    %v616 = vpack.c.b16 %v512, %v510
    %v617 = vpack.c.b16 %v515, %v513
    %v618 = vpack.c.b16 %v516, %v514
    %v619 = vpack.c.b16 %v519, %v517
    %v620 = vpack.c.b16 %v520, %v518
    %v621 = vpack.c.b16 %v523, %v521
    %v622 = vpack.c.b16 %v524, %v522
    %v623 = vpack.c.b16 %v527, %v525
    %v624 = vpack.c.b16 %v528, %v526
    %v625 = vpack.c.b16 %v531, %v529
    %v626 = vpack.c.b16 %v532, %v530
    %v627 = vpack.c.b16 %v535, %v533
    %v628 = vpack.c.b16 %v536, %v534
    %v629 = vpack.c.b16 %v539, %v537
    %v630 = vpack.c.b16 %v540, %v538
    %v631 = vpack.c.b16 %v543, %v541
    %v632 = vpack.c.b16 %v544, %v542
    %v633 = vpack.c.b16 %v547, %v545
    %v634 = vpack.c.b16 %v548, %v546
    %v635 = vpack.c.b16 %v551, %v549
    %v636 = vpack.c.b16 %v552, %v550
    %v637 = vpack.c.b16 %v555, %v553
    %v638 = vpack.c.b16 %v556, %v554
    %v639 = vpack.c.b16 %v559, %v557
    %v640 = vpack.c.b16 %v560, %v558
    %721 = vmatprep.subr.bf16.mxu0 %v562
    %722 = vmatpush1.bf16.msra.mxu0 %v561
    %723 = vmatprep.subr.bf16.mxu0 %v564
    %724 = vmatpush1.bf16.msra.mxu0 %v563
    %725 = vmatprep.subr.bf16.mxu0 %v566
    %726 = vmatpush1.bf16.msra.mxu0 %v565
    %727 = vmatprep.subr.bf16.mxu0 %v568
    %728 = vmatpush1.bf16.msra.mxu0 %v567
    %729 = vmatprep.subr.bf16.mxu0 %v570
    %730 = vmatpush1.bf16.msra.mxu0 %v569
    %731 = vmatprep.subr.bf16.mxu0 %v572
    %732 = vmatpush1.bf16.msra.mxu0 %v571
    %733 = vmatprep.subr.bf16.mxu0 %v574
    %734 = vmatpush1.bf16.msra.mxu0 %v573
    %735 = vmatprep.subr.bf16.mxu0 %v576
    %736 = vmatpush1.bf16.msra.mxu0 %v575
    %737 = vmatprep.subr.bf16.mxu0 %v578
    %738 = vmatpush1.bf16.msra.mxu0 %v577
    %739 = vmatprep.subr.bf16.mxu0 %v580
    %740 = vmatpush1.bf16.msra.mxu0 %v579
    %741 = vmatprep.subr.bf16.mxu0 %v582
    %742 = vmatpush1.bf16.msra.mxu0 %v581
    %743 = vmatprep.subr.bf16.mxu0 %v584
    %744 = vmatpush1.bf16.msra.mxu0 %v583
    %745 = vmatprep.subr.bf16.mxu0 %v586
    %746 = vmatpush1.bf16.msra.mxu0 %v585
    %747 = vmatprep.subr.bf16.mxu0 %v588
    %748 = vmatpush1.bf16.msra.mxu0 %v587
    %749 = vmatprep.subr.bf16.mxu0 %v590
    %750 = vmatpush1.bf16.msra.mxu0 %v589
    %751 = vmatprep.subr.bf16.mxu0 %v592
    %752 = vmatpush1.bf16.msra.mxu0 %v591
    %753 = vmatprep.mubr.bf16.mxu0 %v99
    %754 = vmatmul.mubr.bf16.gmra.mrb[0].mxu0 %v48
    %v755 = vpop.f32.mrb[0].mxu0
    %v756 = vadd.f32 0.0, %v755
    %v757 = vpop.f32.mrb[0].mxu0
    %v758 = vadd.f32 0.0, %v757
    %v759 = vpop.f32.mrb[0].mxu0
    %v760 = vadd.f32 0.0, %v759
    %v761 = vpop.f32.mrb[0].mxu0
    %v762 = vadd.f32 0.0, %v761
    %763 = vmatprep.mubr.bf16.mxu0 %v100
    %764 = vmatmul.mubr.bf16.gmra.mrb[0].mxu0 %v49
    %v765 = vpop.f32.mrb[0].mxu0
    %v766 = vadd.f32 0.0, %v765
    %v767 = vpop.f32.mrb[0].mxu0
    %v768 = vadd.f32 0.0, %v767
    %v769 = vpop.f32.mrb[0].mxu0
    %v770 = vadd.f32 0.0, %v769
    %v771 = vpop.f32.mrb[0].mxu0
    %v772 = vadd.f32 0.0, %v771
    %773 = vmatprep.mubr.bf16.mxu0 %v101
    %774 = vmatmul.mubr.bf16.gmra.mrb[0].mxu0 %v50
    %v775 = vpop.f32.mrb[0].mxu0
    %v776 = vadd.f32 0.0, %v775
    %v777 = vpop.f32.mrb[0].mxu0
    %v778 = vadd.f32 0.0, %v777
    %v779 = vpop.f32.mrb[0].mxu0
    %v780 = vadd.f32 0.0, %v779
    %v781 = vpop.f32.mrb[0].mxu0
    %v782 = vadd.f32 0.0, %v781
    %783 = vmatprep.mubr.bf16.mxu0 %v102
    %784 = vmatmul.mubr.bf16.gmra.mrb[0].mxu0 %v51
    %v785 = vpop.f32.mrb[0].mxu0
    %v786 = vadd.f32 0.0, %v785
    %v787 = vpop.f32.mrb[0].mxu0
    %v788 = vadd.f32 0.0, %v787
    %v789 = vpop.f32.mrb[0].mxu0
    %v790 = vadd.f32 0.0, %v789
    %v791 = vpop.f32.mrb[0].mxu0
    %v792 = vadd.f32 0.0, %v791
    %793 = vdwg.mxu0
    %794 = vmatprep.subr.bf16.mxu0 %v594
    %795 = vmatpush1.bf16.msra.mxu0 %v593
    %796 = vmatprep.subr.bf16.mxu0 %v596
    %797 = vmatpush1.bf16.msra.mxu0 %v595
    %798 = vmatprep.subr.bf16.mxu0 %v598
    %799 = vmatpush1.bf16.msra.mxu0 %v597
    %800 = vmatprep.subr.bf16.mxu0 %v600
    %801 = vmatpush1.bf16.msra.mxu0 %v599
    %802 = vmatprep.subr.bf16.mxu0 %v602
    %803 = vmatpush1.bf16.msra.mxu0 %v601
    %804 = vmatprep.subr.bf16.mxu0 %v604
    %805 = vmatpush1.bf16.msra.mxu0 %v603
    %806 = vmatprep.subr.bf16.mxu0 %v606
    %807 = vmatpush1.bf16.msra.mxu0 %v605
    %808 = vmatprep.subr.bf16.mxu0 %v608
    %809 = vmatpush1.bf16.msra.mxu0 %v607
    %810 = vmatprep.subr.bf16.mxu0 %v610
    %811 = vmatpush1.bf16.msra.mxu0 %v609
    %812 = vmatprep.subr.bf16.mxu0 %v612
    %813 = vmatpush1.bf16.msra.mxu0 %v611
    %814 = vmatprep.subr.bf16.mxu0 %v614
    %815 = vmatpush1.bf16.msra.mxu0 %v613
    %816 = vmatprep.subr.bf16.mxu0 %v616
    %817 = vmatpush1.bf16.msra.mxu0 %v615
    %818 = vmatprep.subr.bf16.mxu0 %v618
    %819 = vmatpush1.bf16.msra.mxu0 %v617
    %820 = vmatprep.subr.bf16.mxu0 %v620
    %821 = vmatpush1.bf16.msra.mxu0 %v619
    %822 = vmatprep.subr.bf16.mxu0 %v622
    %823 = vmatpush1.bf16.msra.mxu0 %v621
    %824 = vmatprep.subr.bf16.mxu0 %v624
    %825 = vmatpush1.bf16.msra.mxu0 %v623
    %826 = vmatprep.mubr.bf16.mxu0 %v199
    %827 = vmatmul.mubr.bf16.gmra.mrb[0].mxu0 %v149
    %v828 = vpop.f32.mrb[0].mxu0
    %v829 = vadd.f32 %v756, %v828
    %v830 = vpop.f32.mrb[0].mxu0
    %v831 = vadd.f32 %v758, %v830
    %v832 = vpop.f32.mrb[0].mxu0
    %v833 = vadd.f32 %v760, %v832
    %v834 = vpop.f32.mrb[0].mxu0
    %v835 = vadd.f32 %v762, %v834
    %836 = vmatprep.mubr.bf16.mxu0 %v200
    %837 = vmatmul.mubr.bf16.gmra.mrb[0].mxu0 %v150
    %v838 = vpop.f32.mrb[0].mxu0
    %v839 = vadd.f32 %v766, %v838
    %v840 = vpop.f32.mrb[0].mxu0
    %v841 = vadd.f32 %v768, %v840
    %v842 = vpop.f32.mrb[0].mxu0
    %v843 = vadd.f32 %v770, %v842
    %v844 = vpop.f32.mrb[0].mxu0
    %v845 = vadd.f32 %v772, %v844
    %846 = vmatprep.mubr.bf16.mxu0 %v201
    %847 = vmatmul.mubr.bf16.gmra.mrb[0].mxu0 %v151
    %v848 = vpop.f32.mrb[0].mxu0
    %v849 = vadd.f32 %v776, %v848
    %v850 = vpop.f32.mrb[0].mxu0
    %v851 = vadd.f32 %v778, %v850
    %v852 = vpop.f32.mrb[0].mxu0
    %v853 = vadd.f32 %v780, %v852
    %v854 = vpop.f32.mrb[0].mxu0
    %v855 = vadd.f32 %v782, %v854
    %856 = vmatprep.mubr.bf16.mxu0 %v202
    %857 = vmatmul.mubr.bf16.gmra.mrb[0].mxu0 %v152
    %v858 = vpop.f32.mrb[0].mxu0
    %v859 = vadd.f32 %v786, %v858
    %v860 = vpop.f32.mrb[0].mxu0
    %v861 = vadd.f32 %v788, %v860
    %v862 = vpop.f32.mrb[0].mxu0
    %v863 = vadd.f32 %v790, %v862
    %v864 = vpop.f32.mrb[0].mxu0
    %v865 = vadd.f32 %v792, %v864
    %866 = vdwg.mxu0
    %867 = vmatprep.subr.bf16.mxu0 %v626
    %868 = vmatpush1.bf16.msra.mxu0 %v625
    %869 = vmatprep.subr.bf16.mxu0 %v628
    %870 = vmatpush1.bf16.msra.mxu0 %v627
    %871 = vmatprep.subr.bf16.mxu0 %v630
    %872 = vmatpush1.bf16.msra.mxu0 %v629
    %873 = vmatprep.subr.bf16.mxu0 %v632
    %874 = vmatpush1.bf16.msra.mxu0 %v631
    %875 = vmatprep.subr.bf16.mxu0 %v634
    %876 = vmatpush1.bf16.msra.mxu0 %v633
    %877 = vmatprep.subr.bf16.mxu0 %v636
    %878 = vmatpush1.bf16.msra.mxu0 %v635
    %879 = vmatprep.subr.bf16.mxu0 %v638
    %880 = vmatpush1.bf16.msra.mxu0 %v637
    %881 = vmatprep.subr.bf16.mxu0 %v640
    %882 = vmatpush1.bf16.msra.mxu0 %v639
    %883 = vmatprep.subr.bf16.mxu0 0
    %884 = vmatpush1.bf16.msra.mxu0 0
    %885 = vmatprep.subr.bf16.mxu0 0
    %886 = vmatpush1.bf16.msra.mxu0 0
    %887 = vmatprep.subr.bf16.mxu0 0
    %888 = vmatpush1.bf16.msra.mxu0 0
    %889 = vmatprep.subr.bf16.mxu0 0
    %890 = vmatpush1.bf16.msra.mxu0 0
    %891 = vmatprep.subr.bf16.mxu0 0
    %892 = vmatpush1.bf16.msra.mxu0 0
    %893 = vmatprep.subr.bf16.mxu0 0
    %894 = vmatpush1.bf16.msra.mxu0 0
    %895 = vmatprep.subr.bf16.mxu0 0
    %896 = vmatpush1.bf16.msra.mxu0 0
    %897 = vmatprep.subr.bf16.mxu0 0
    %898 = vmatpush1.bf16.msra.mxu0 0
    %899 = vmatprep.mubr.bf16.mxu0 0
    %900 = vmatmul.mubr.bf16.gmra.mrb[0].mxu0 %v86
    %v901 = vpop.f32.mrb[0].mxu0
    %v902 = vadd.f32 %v829, %v901
    %v903 = vpop.f32.mrb[0].mxu0
    %v904 = vadd.f32 %v831, %v903
    %v905 = vpop.f32.mrb[0].mxu0
    %v906 = vadd.f32 %v833, %v905
    %v907 = vpop.f32.mrb[0].mxu0
    %v908 = vadd.f32 %v835, %v907
    %909 = vmatprep.mubr.bf16.mxu0 0
    %910 = vmatmul.mubr.bf16.gmra.mrb[0].mxu0 %v87
    %v911 = vpop.f32.mrb[0].mxu0
    %v912 = vadd.f32 %v839, %v911
    %v913 = vpop.f32.mrb[0].mxu0
    %v914 = vadd.f32 %v841, %v913
    %v915 = vpop.f32.mrb[0].mxu0
    %v916 = vadd.f32 %v843, %v915
    %v917 = vpop.f32.mrb[0].mxu0
    %v918 = vadd.f32 %v845, %v917
    %919 = vmatprep.mubr.bf16.mxu0 0
    %920 = vmatmul.mubr.bf16.gmra.mrb[0].mxu0 %v88
    %v921 = vpop.f32.mrb[0].mxu0
    %v922 = vadd.f32 %v849, %v921
    %v923 = vpop.f32.mrb[0].mxu0
    %v924 = vadd.f32 %v851, %v923
    %v925 = vpop.f32.mrb[0].mxu0
    %v926 = vadd.f32 %v853, %v925
    %v927 = vpop.f32.mrb[0].mxu0
    %v928 = vadd.f32 %v855, %v927
    %929 = vmatprep.mubr.bf16.mxu0 0
    %930 = vmatmul.mubr.bf16.gmra.mrb[0].mxu0 %v89
    %v931 = vpop.f32.mrb[0].mxu0
    %v932 = vadd.f32 %v859, %v931
    %v933 = vpop.f32.mrb[0].mxu0
    %v934 = vadd.f32 %v861, %v933
    %v935 = vpop.f32.mrb[0].mxu0
    %v936 = vadd.f32 %v863, %v935
    %v937 = vpop.f32.mrb[0].mxu0
    %v938 = vadd.f32 %v865, %v937
    %939 = vdwg.mxu0
    %v940 = vmax.f32 %v902, %v904
    %v941 = vmax.f32 %v906, %v908
    %v942 = vmax.f32 %v912, %v914
    %v943 = vmax.f32 %v916, %v918
    %v944 = vmax.f32 %v922, %v924
    %v945 = vmax.f32 %v926, %v928
    %v946 = vmax.f32 %v932, %v934
    %v947 = vmax.f32 %v936, %v938
    %948 = vmatprep.subr.bf16.mxu0 %v562
    %949 = vmatpush1.bf16.msra.mxu0 %v561
    %950 = vmatprep.subr.bf16.mxu0 %v564
    %951 = vmatpush1.bf16.msra.mxu0 %v563
    %952 = vmatprep.subr.bf16.mxu0 %v566
    %953 = vmatpush1.bf16.msra.mxu0 %v565
    %954 = vmatprep.subr.bf16.mxu0 %v568
    %955 = vmatpush1.bf16.msra.mxu0 %v567
    %956 = vmatprep.subr.bf16.mxu0 %v570
    %957 = vmatpush1.bf16.msra.mxu0 %v569
    %958 = vmatprep.subr.bf16.mxu0 %v572
    %959 = vmatpush1.bf16.msra.mxu0 %v571
    %960 = vmatprep.subr.bf16.mxu0 %v574
    %961 = vmatpush1.bf16.msra.mxu0 %v573
    %962 = vmatprep.subr.bf16.mxu0 %v576
    %963 = vmatpush1.bf16.msra.mxu0 %v575
    %964 = vmatprep.subr.bf16.mxu0 %v578
    %965 = vmatpush1.bf16.msra.mxu0 %v577
    %966 = vmatprep.subr.bf16.mxu0 %v580
    %967 = vmatpush1.bf16.msra.mxu0 %v579
    %968 = vmatprep.subr.bf16.mxu0 %v582
    %969 = vmatpush1.bf16.msra.mxu0 %v581
    %970 = vmatprep.subr.bf16.mxu0 %v584
    %971 = vmatpush1.bf16.msra.mxu0 %v583
    %972 = vmatprep.subr.bf16.mxu0 %v586
    %973 = vmatpush1.bf16.msra.mxu0 %v585
    %974 = vmatprep.subr.bf16.mxu0 %v588
    %975 = vmatpush1.bf16.msra.mxu0 %v587
    %976 = vmatprep.subr.bf16.mxu0 %v590
    %977 = vmatpush1.bf16.msra.mxu0 %v589
    %978 = vmatprep.subr.bf16.mxu0 %v592
    %979 = vmatpush1.bf16.msra.mxu0 %v591
    %980 = vmatprep.mubr.bf16.mxu0 %v149
    %981 = vmatmul.mubr.bf16.gmra.mrb[0].mxu0 %v99
    %v982 = vpop.f32.mrb[0].mxu0
    %v983 = vadd.f32 0.0, %v982
    %v984 = vpop.f32.mrb[0].mxu0
    %v985 = vadd.f32 0.0, %v984
    %v986 = vpop.f32.mrb[0].mxu0
    %v987 = vadd.f32 0.0, %v986
    %v988 = vpop.f32.mrb[0].mxu0
    %v989 = vadd.f32 0.0, %v988
    %990 = vmatprep.mubr.bf16.mxu0 %v150
    %991 = vmatmul.mubr.bf16.gmra.mrb[0].mxu0 %v100
    %v992 = vpop.f32.mrb[0].mxu0
    %v993 = vadd.f32 0.0, %v992
    %v994 = vpop.f32.mrb[0].mxu0
    %v995 = vadd.f32 0.0, %v994
    %v996 = vpop.f32.mrb[0].mxu0
    %v997 = vadd.f32 0.0, %v996
    %v998 = vpop.f32.mrb[0].mxu0
    %v999 = vadd.f32 0.0, %v998
    %1000 = vmatprep.mubr.bf16.mxu0 %v151
    %1001 = vmatmul.mubr.bf16.gmra.mrb[0].mxu0 %v101
    %v1002 = vpop.f32.mrb[0].mxu0
    %v1003 = vadd.f32 0.0, %v1002
    %v1004 = vpop.f32.mrb[0].mxu0
    %v1005 = vadd.f32 0.0, %v1004
    %v1006 = vpop.f32.mrb[0].mxu0
    %v1007 = vadd.f32 0.0, %v1006
    %v1008 = vpop.f32.mrb[0].mxu0
    %v1009 = vadd.f32 0.0, %v1008
    %1010 = vmatprep.mubr.bf16.mxu0 %v152
    %1011 = vmatmul.mubr.bf16.gmra.mrb[0].mxu0 %v102
    %v1012 = vpop.f32.mrb[0].mxu0
    %v1013 = vadd.f32 0.0, %v1012
    %v1014 = vpop.f32.mrb[0].mxu0
    %v1015 = vadd.f32 0.0, %v1014
    %v1016 = vpop.f32.mrb[0].mxu0
    %v1017 = vadd.f32 0.0, %v1016
    %v1018 = vpop.f32.mrb[0].mxu0
    %v1019 = vadd.f32 0.0, %v1018
    %1020 = vdwg.mxu0
    %1021 = vmatprep.subr.bf16.mxu0 %v594
    %1022 = vmatpush1.bf16.msra.mxu0 %v593
    %1023 = vmatprep.subr.bf16.mxu0 %v596
    %1024 = vmatpush1.bf16.msra.mxu0 %v595
    %1025 = vmatprep.subr.bf16.mxu0 %v598
    %1026 = vmatpush1.bf16.msra.mxu0 %v597
    %1027 = vmatprep.subr.bf16.mxu0 %v600
    %1028 = vmatpush1.bf16.msra.mxu0 %v599
    %1029 = vmatprep.subr.bf16.mxu0 %v602
    %1030 = vmatpush1.bf16.msra.mxu0 %v601
    %1031 = vmatprep.subr.bf16.mxu0 %v604
    %1032 = vmatpush1.bf16.msra.mxu0 %v603
    %1033 = vmatprep.subr.bf16.mxu0 %v606
    %1034 = vmatpush1.bf16.msra.mxu0 %v605
    %1035 = vmatprep.subr.bf16.mxu0 %v608
    %1036 = vmatpush1.bf16.msra.mxu0 %v607
    %1037 = vmatprep.subr.bf16.mxu0 %v610
    %1038 = vmatpush1.bf16.msra.mxu0 %v609
    %1039 = vmatprep.subr.bf16.mxu0 %v612
    %1040 = vmatpush1.bf16.msra.mxu0 %v611
    %1041 = vmatprep.subr.bf16.mxu0 %v614
    %1042 = vmatpush1.bf16.msra.mxu0 %v613
    %1043 = vmatprep.subr.bf16.mxu0 %v616
    %1044 = vmatpush1.bf16.msra.mxu0 %v615
    %1045 = vmatprep.subr.bf16.mxu0 %v618
    %1046 = vmatpush1.bf16.msra.mxu0 %v617
    %1047 = vmatprep.subr.bf16.mxu0 %v620
    %1048 = vmatpush1.bf16.msra.mxu0 %v619
    %1049 = vmatprep.subr.bf16.mxu0 %v622
    %1050 = vmatpush1.bf16.msra.mxu0 %v621
    %1051 = vmatprep.subr.bf16.mxu0 %v624
    %1052 = vmatpush1.bf16.msra.mxu0 %v623
    %1053 = vmatprep.mubr.bf16.mxu0 %v86
    %1054 = vmatmul.mubr.bf16.gmra.mrb[0].mxu0 %v199
    %v1055 = vpop.f32.mrb[0].mxu0
    %v1056 = vadd.f32 %v983, %v1055
    %v1057 = vpop.f32.mrb[0].mxu0
    %v1058 = vadd.f32 %v985, %v1057
    %v1059 = vpop.f32.mrb[0].mxu0
    %v1060 = vadd.f32 %v987, %v1059
    %v1061 = vpop.f32.mrb[0].mxu0
    %v1062 = vadd.f32 %v989, %v1061
    %1063 = vmatprep.mubr.bf16.mxu0 %v87
    %1064 = vmatmul.mubr.bf16.gmra.mrb[0].mxu0 %v200
    %v1065 = vpop.f32.mrb[0].mxu0
    %v1066 = vadd.f32 %v993, %v1065
    %v1067 = vpop.f32.mrb[0].mxu0
    %v1068 = vadd.f32 %v995, %v1067
    %v1069 = vpop.f32.mrb[0].mxu0
    %v1070 = vadd.f32 %v997, %v1069
    %v1071 = vpop.f32.mrb[0].mxu0
    %v1072 = vadd.f32 %v999, %v1071
    %1073 = vmatprep.mubr.bf16.mxu0 %v88
    %1074 = vmatmul.mubr.bf16.gmra.mrb[0].mxu0 %v201
    %v1075 = vpop.f32.mrb[0].mxu0
    %v1076 = vadd.f32 %v1003, %v1075
    %v1077 = vpop.f32.mrb[0].mxu0
    %v1078 = vadd.f32 %v1005, %v1077
    %v1079 = vpop.f32.mrb[0].mxu0
    %v1080 = vadd.f32 %v1007, %v1079
    %v1081 = vpop.f32.mrb[0].mxu0
    %v1082 = vadd.f32 %v1009, %v1081
    %1083 = vmatprep.mubr.bf16.mxu0 %v89
    %1084 = vmatmul.mubr.bf16.gmra.mrb[0].mxu0 %v202
    %v1085 = vpop.f32.mrb[0].mxu0
    %v1086 = vadd.f32 %v1013, %v1085
    %v1087 = vpop.f32.mrb[0].mxu0
    %v1088 = vadd.f32 %v1015, %v1087
    %v1089 = vpop.f32.mrb[0].mxu0
    %v1090 = vadd.f32 %v1017, %v1089
    %v1091 = vpop.f32.mrb[0].mxu0
    %v1092 = vadd.f32 %v1019, %v1091
    %1093 = vdwg.mxu0
    %1094 = vmatprep.subr.bf16.mxu0 %v626
    %1095 = vmatpush1.bf16.msra.mxu0 %v625
    %1096 = vmatprep.subr.bf16.mxu0 %v628
    %1097 = vmatpush1.bf16.msra.mxu0 %v627
    %1098 = vmatprep.subr.bf16.mxu0 %v630
    %1099 = vmatpush1.bf16.msra.mxu0 %v629
    %1100 = vmatprep.subr.bf16.mxu0 %v632
    %1101 = vmatpush1.bf16.msra.mxu0 %v631
    %1102 = vmatprep.subr.bf16.mxu0 %v634
    %1103 = vmatpush1.bf16.msra.mxu0 %v633
    %1104 = vmatprep.subr.bf16.mxu0 %v636
    %1105 = vmatpush1.bf16.msra.mxu0 %v635
    %1106 = vmatprep.subr.bf16.mxu0 %v638
    %1107 = vmatpush1.bf16.msra.mxu0 %v637
    %1108 = vmatprep.subr.bf16.mxu0 %v640
    %1109 = vmatpush1.bf16.msra.mxu0 %v639
    %1110 = vmatprep.subr.bf16.mxu0 0
    %1111 = vmatpush1.bf16.msra.mxu0 0
    %1112 = vmatprep.subr.bf16.mxu0 0
    %1113 = vmatpush1.bf16.msra.mxu0 0
    %1114 = vmatprep.subr.bf16.mxu0 0
    %1115 = vmatpush1.bf16.msra.mxu0 0
    %1116 = vmatprep.subr.bf16.mxu0 0
    %1117 = vmatpush1.bf16.msra.mxu0 0
    %1118 = vmatprep.subr.bf16.mxu0 0
    %1119 = vmatpush1.bf16.msra.mxu0 0
    %1120 = vmatprep.subr.bf16.mxu0 0
    %1121 = vmatpush1.bf16.msra.mxu0 0
    %1122 = vmatprep.subr.bf16.mxu0 0
    %1123 = vmatpush1.bf16.msra.mxu0 0
    %1124 = vmatprep.subr.bf16.mxu0 0
    %1125 = vmatpush1.bf16.msra.mxu0 0
    %1126 = vmatprep.mubr.bf16.mxu0 0
    %1127 = vmatmul.mubr.bf16.gmra.mrb[0].mxu0 %v136
    %v1128 = vpop.f32.mrb[0].mxu0
    %v1129 = vadd.f32 %v1056, %v1128
    %v1130 = vpop.f32.mrb[0].mxu0
    %v1131 = vadd.f32 %v1058, %v1130
    %v1132 = vpop.f32.mrb[0].mxu0
    %v1133 = vadd.f32 %v1060, %v1132
    %v1134 = vpop.f32.mrb[0].mxu0
    %v1135 = vadd.f32 %v1062, %v1134
    %1136 = vmatprep.mubr.bf16.mxu0 0
    %1137 = vmatmul.mubr.bf16.gmra.mrb[0].mxu0 %v137
    %v1138 = vpop.f32.mrb[0].mxu0
    %v1139 = vadd.f32 %v1066, %v1138
    %v1140 = vpop.f32.mrb[0].mxu0
    %v1141 = vadd.f32 %v1068, %v1140
    %v1142 = vpop.f32.mrb[0].mxu0
    %v1143 = vadd.f32 %v1070, %v1142
    %v1144 = vpop.f32.mrb[0].mxu0
    %v1145 = vadd.f32 %v1072, %v1144
    %1146 = vmatprep.mubr.bf16.mxu0 0
    %1147 = vmatmul.mubr.bf16.gmra.mrb[0].mxu0 %v138
    %v1148 = vpop.f32.mrb[0].mxu0
    %v1149 = vadd.f32 %v1076, %v1148
    %v1150 = vpop.f32.mrb[0].mxu0
    %v1151 = vadd.f32 %v1078, %v1150
    %v1152 = vpop.f32.mrb[0].mxu0
    %v1153 = vadd.f32 %v1080, %v1152
    %v1154 = vpop.f32.mrb[0].mxu0
    %v1155 = vadd.f32 %v1082, %v1154
    %1156 = vmatprep.mubr.bf16.mxu0 0
    %1157 = vmatmul.mubr.bf16.gmra.mrb[0].mxu0 %v139
    %v1158 = vpop.f32.mrb[0].mxu0
    %v1159 = vadd.f32 %v1086, %v1158
    %v1160 = vpop.f32.mrb[0].mxu0
    %v1161 = vadd.f32 %v1088, %v1160
    %v1162 = vpop.f32.mrb[0].mxu0
    %v1163 = vadd.f32 %v1090, %v1162
    %v1164 = vpop.f32.mrb[0].mxu0
    %v1165 = vadd.f32 %v1092, %v1164
    %1166 = vdwg.mxu0
    %v1167 = vmax.f32 %v1129, %v1131
    %v1168 = vmax.f32 %v1133, %v1135
    %v1169 = vmax.f32 %v1139, %v1141
    %v1170 = vmax.f32 %v1143, %v1145
    %v1171 = vmax.f32 %v1149, %v1151
    %v1172 = vmax.f32 %v1153, %v1155
    %v1173 = vmax.f32 %v1159, %v1161
    %v1174 = vmax.f32 %v1163, %v1165
    %v1175 = vmax.f32 %v940, %v1167
    %v1176 = vmax.f32 %v941, %v1168
    %v1177 = vmax.f32 %v942, %v1169
    %v1178 = vmax.f32 %v943, %v1170
    %v1179 = vmax.f32 %v944, %v1171
    %v1180 = vmax.f32 %v945, %v1172
    %v1181 = vmax.f32 %v946, %v1173
    %v1182 = vmax.f32 %v947, %v1174
    %v1184 = vlaneseq
    %v1185 = vshrl.u32 %v1184, 7
    %v1186 = vsub.s32 0, %v1185
    %v1187 = vrot.slane %v320, %v1186
    %v1189 = vadd.f32 %v1175, %v1187
    %v1190 = vadd.f32 %v1176, %v1187
    %v1191 = vadd.f32 %v1177, %v1187
    %v1192 = vadd.f32 %v1178, %v1187
    %v1193 = vadd.f32 %v1179, %v1187
    %v1194 = vadd.f32 %v1180, %v1187
    %v1195 = vadd.f32 %v1181, %v1187
    %v1196 = vadd.f32 %v1182, %v1187
    %v1197 = vmax.f32 %v1189, 0.0
    %v1198 = vmax.f32 %v1190, 0.0
    %v1199 = vmax.f32 %v1191, 0.0
    %v1200 = vmax.f32 %v1192, 0.0
    %v1201 = vmax.f32 %v1193, 0.0
    %v1202 = vmax.f32 %v1194, 0.0
    %v1203 = vmax.f32 %v1195, 0.0
    %v1204 = vmax.f32 %v1196, 0.0
    %1205 = vmatprep.subr.bf16.mxu0 %v562
    %1206 = vmatpush1.bf16.msra.mxu0 %v561
    %1207 = vmatprep.subr.bf16.mxu0 %v564
    %1208 = vmatpush1.bf16.msra.mxu0 %v563
    %1209 = vmatprep.subr.bf16.mxu0 %v566
    %1210 = vmatpush1.bf16.msra.mxu0 %v565
    %1211 = vmatprep.subr.bf16.mxu0 %v568
    %1212 = vmatpush1.bf16.msra.mxu0 %v567
    %1213 = vmatprep.subr.bf16.mxu0 %v570
    %1214 = vmatpush1.bf16.msra.mxu0 %v569
    %1215 = vmatprep.subr.bf16.mxu0 %v572
    %1216 = vmatpush1.bf16.msra.mxu0 %v571
    %1217 = vmatprep.subr.bf16.mxu0 %v574
    %1218 = vmatpush1.bf16.msra.mxu0 %v573
    %1219 = vmatprep.subr.bf16.mxu0 %v576
    %1220 = vmatpush1.bf16.msra.mxu0 %v575
    %1221 = vmatprep.subr.bf16.mxu0 %v578
    %1222 = vmatpush1.bf16.msra.mxu0 %v577
    %1223 = vmatprep.subr.bf16.mxu0 %v580
    %1224 = vmatpush1.bf16.msra.mxu0 %v579
    %1225 = vmatprep.subr.bf16.mxu0 %v582
    %1226 = vmatpush1.bf16.msra.mxu0 %v581
    %1227 = vmatprep.subr.bf16.mxu0 %v584
    %1228 = vmatpush1.bf16.msra.mxu0 %v583
    %1229 = vmatprep.subr.bf16.mxu0 %v586
    %1230 = vmatpush1.bf16.msra.mxu0 %v585
    %1231 = vmatprep.subr.bf16.mxu0 %v588
    %1232 = vmatpush1.bf16.msra.mxu0 %v587
    %1233 = vmatprep.subr.bf16.mxu0 %v590
    %1234 = vmatpush1.bf16.msra.mxu0 %v589
    %1235 = vmatprep.subr.bf16.mxu0 %v592
    %1236 = vmatpush1.bf16.msra.mxu0 %v591
    %1237 = vmatprep.mubr.bf16.mxu0 %v199
    %1238 = vmatmul.mubr.bf16.gmra.mrb[0].mxu0 %v149
    %v1239 = vpop.f32.mrb[0].mxu0
    %v1240 = vadd.f32 0.0, %v1239
    %v1241 = vpop.f32.mrb[0].mxu0
    %v1242 = vadd.f32 0.0, %v1241
    %v1243 = vpop.f32.mrb[0].mxu0
    %v1244 = vadd.f32 0.0, %v1243
    %v1245 = vpop.f32.mrb[0].mxu0
    %v1246 = vadd.f32 0.0, %v1245
    %1247 = vmatprep.mubr.bf16.mxu0 %v200
    %1248 = vmatmul.mubr.bf16.gmra.mrb[0].mxu0 %v150
    %v1249 = vpop.f32.mrb[0].mxu0
    %v1250 = vadd.f32 0.0, %v1249
    %v1251 = vpop.f32.mrb[0].mxu0
    %v1252 = vadd.f32 0.0, %v1251
    %v1253 = vpop.f32.mrb[0].mxu0
    %v1254 = vadd.f32 0.0, %v1253
    %v1255 = vpop.f32.mrb[0].mxu0
    %v1256 = vadd.f32 0.0, %v1255
    %1257 = vmatprep.mubr.bf16.mxu0 %v201
    %1258 = vmatmul.mubr.bf16.gmra.mrb[0].mxu0 %v151
    %v1259 = vpop.f32.mrb[0].mxu0
    %v1260 = vadd.f32 0.0, %v1259
    %v1261 = vpop.f32.mrb[0].mxu0
    %v1262 = vadd.f32 0.0, %v1261
    %v1263 = vpop.f32.mrb[0].mxu0
    %v1264 = vadd.f32 0.0, %v1263
    %v1265 = vpop.f32.mrb[0].mxu0
    %v1266 = vadd.f32 0.0, %v1265
    %1267 = vmatprep.mubr.bf16.mxu0 %v202
    %1268 = vmatmul.mubr.bf16.gmra.mrb[0].mxu0 %v152
    %v1269 = vpop.f32.mrb[0].mxu0
    %v1270 = vadd.f32 0.0, %v1269
    %v1271 = vpop.f32.mrb[0].mxu0
    %v1272 = vadd.f32 0.0, %v1271
    %v1273 = vpop.f32.mrb[0].mxu0
    %v1274 = vadd.f32 0.0, %v1273
    %v1275 = vpop.f32.mrb[0].mxu0
    %v1276 = vadd.f32 0.0, %v1275
    %1277 = vdwg.mxu0
    %1278 = vmatprep.subr.bf16.mxu0 %v594
    %1279 = vmatpush1.bf16.msra.mxu0 %v593
    %1280 = vmatprep.subr.bf16.mxu0 %v596
    %1281 = vmatpush1.bf16.msra.mxu0 %v595
    %1282 = vmatprep.subr.bf16.mxu0 %v598
    %1283 = vmatpush1.bf16.msra.mxu0 %v597
    %1284 = vmatprep.subr.bf16.mxu0 %v600
    %1285 = vmatpush1.bf16.msra.mxu0 %v599
    %1286 = vmatprep.subr.bf16.mxu0 %v602
    %1287 = vmatpush1.bf16.msra.mxu0 %v601
    %1288 = vmatprep.subr.bf16.mxu0 %v604
    %1289 = vmatpush1.bf16.msra.mxu0 %v603
    %1290 = vmatprep.subr.bf16.mxu0 %v606
    %1291 = vmatpush1.bf16.msra.mxu0 %v605
    %1292 = vmatprep.subr.bf16.mxu0 %v608
    %1293 = vmatpush1.bf16.msra.mxu0 %v607
    %1294 = vmatprep.subr.bf16.mxu0 %v610
    %1295 = vmatpush1.bf16.msra.mxu0 %v609
    %1296 = vmatprep.subr.bf16.mxu0 %v612
    %1297 = vmatpush1.bf16.msra.mxu0 %v611
    %1298 = vmatprep.subr.bf16.mxu0 %v614
    %1299 = vmatpush1.bf16.msra.mxu0 %v613
    %1300 = vmatprep.subr.bf16.mxu0 %v616
    %1301 = vmatpush1.bf16.msra.mxu0 %v615
    %1302 = vmatprep.subr.bf16.mxu0 %v618
    %1303 = vmatpush1.bf16.msra.mxu0 %v617
    %1304 = vmatprep.subr.bf16.mxu0 %v620
    %1305 = vmatpush1.bf16.msra.mxu0 %v619
    %1306 = vmatprep.subr.bf16.mxu0 %v622
    %1307 = vmatpush1.bf16.msra.mxu0 %v621
    %1308 = vmatprep.subr.bf16.mxu0 %v624
    %1309 = vmatpush1.bf16.msra.mxu0 %v623
    %1310 = vmatprep.mubr.bf16.mxu0 %v136
    %1311 = vmatmul.mubr.bf16.gmra.mrb[0].mxu0 %v86
    %v1312 = vpop.f32.mrb[0].mxu0
    %v1313 = vadd.f32 %v1240, %v1312
    %v1314 = vpop.f32.mrb[0].mxu0
    %v1315 = vadd.f32 %v1242, %v1314
    %v1316 = vpop.f32.mrb[0].mxu0
    %v1317 = vadd.f32 %v1244, %v1316
    %v1318 = vpop.f32.mrb[0].mxu0
    %v1319 = vadd.f32 %v1246, %v1318
    %1320 = vmatprep.mubr.bf16.mxu0 %v137
    %1321 = vmatmul.mubr.bf16.gmra.mrb[0].mxu0 %v87
    %v1322 = vpop.f32.mrb[0].mxu0
    %v1323 = vadd.f32 %v1250, %v1322
    %v1324 = vpop.f32.mrb[0].mxu0
    %v1325 = vadd.f32 %v1252, %v1324
    %v1326 = vpop.f32.mrb[0].mxu0
    %v1327 = vadd.f32 %v1254, %v1326
    %v1328 = vpop.f32.mrb[0].mxu0
    %v1329 = vadd.f32 %v1256, %v1328
    %1330 = vmatprep.mubr.bf16.mxu0 %v138
    %1331 = vmatmul.mubr.bf16.gmra.mrb[0].mxu0 %v88
    %v1332 = vpop.f32.mrb[0].mxu0
    %v1333 = vadd.f32 %v1260, %v1332
    %v1334 = vpop.f32.mrb[0].mxu0
    %v1335 = vadd.f32 %v1262, %v1334
    %v1336 = vpop.f32.mrb[0].mxu0
    %v1337 = vadd.f32 %v1264, %v1336
    %v1338 = vpop.f32.mrb[0].mxu0
    %v1339 = vadd.f32 %v1266, %v1338
    %1340 = vmatprep.mubr.bf16.mxu0 %v139
    %1341 = vmatmul.mubr.bf16.gmra.mrb[0].mxu0 %v89
    %v1342 = vpop.f32.mrb[0].mxu0
    %v1343 = vadd.f32 %v1270, %v1342
    %v1344 = vpop.f32.mrb[0].mxu0
    %v1345 = vadd.f32 %v1272, %v1344
    %v1346 = vpop.f32.mrb[0].mxu0
    %v1347 = vadd.f32 %v1274, %v1346
    %v1348 = vpop.f32.mrb[0].mxu0
    %v1349 = vadd.f32 %v1276, %v1348
    %1350 = vdwg.mxu0
    %1351 = vmatprep.subr.bf16.mxu0 %v626
    %1352 = vmatpush1.bf16.msra.mxu0 %v625
    %1353 = vmatprep.subr.bf16.mxu0 %v628
    %1354 = vmatpush1.bf16.msra.mxu0 %v627
    %1355 = vmatprep.subr.bf16.mxu0 %v630
    %1356 = vmatpush1.bf16.msra.mxu0 %v629
    %1357 = vmatprep.subr.bf16.mxu0 %v632
    %1358 = vmatpush1.bf16.msra.mxu0 %v631
    %1359 = vmatprep.subr.bf16.mxu0 %v634
    %1360 = vmatpush1.bf16.msra.mxu0 %v633
    %1361 = vmatprep.subr.bf16.mxu0 %v636
    %1362 = vmatpush1.bf16.msra.mxu0 %v635
    %1363 = vmatprep.subr.bf16.mxu0 %v638
    %1364 = vmatpush1.bf16.msra.mxu0 %v637
    %1365 = vmatprep.subr.bf16.mxu0 %v640
    %1366 = vmatpush1.bf16.msra.mxu0 %v639
    %1367 = vmatprep.subr.bf16.mxu0 0
    %1368 = vmatpush1.bf16.msra.mxu0 0
    %1369 = vmatprep.subr.bf16.mxu0 0
    %1370 = vmatpush1.bf16.msra.mxu0 0
    %1371 = vmatprep.subr.bf16.mxu0 0
    %1372 = vmatpush1.bf16.msra.mxu0 0
    %1373 = vmatprep.subr.bf16.mxu0 0
    %1374 = vmatpush1.bf16.msra.mxu0 0
    %1375 = vmatprep.subr.bf16.mxu0 0
    %1376 = vmatpush1.bf16.msra.mxu0 0
    %1377 = vmatprep.subr.bf16.mxu0 0
    %1378 = vmatpush1.bf16.msra.mxu0 0
    %1379 = vmatprep.subr.bf16.mxu0 0
    %1380 = vmatpush1.bf16.msra.mxu0 0
    %1381 = vmatprep.subr.bf16.mxu0 0
    %1382 = vmatpush1.bf16.msra.mxu0 0
    %1383 = vmatprep.mubr.bf16.mxu0 0
    %1384 = vmatmul.mubr.bf16.gmra.mrb[0].mxu0 %v186
    %v1385 = vpop.f32.mrb[0].mxu0
    %v1386 = vadd.f32 %v1313, %v1385
    %v1387 = vpop.f32.mrb[0].mxu0
    %v1388 = vadd.f32 %v1315, %v1387
    %v1389 = vpop.f32.mrb[0].mxu0
    %v1390 = vadd.f32 %v1317, %v1389
    %v1391 = vpop.f32.mrb[0].mxu0
    %v1392 = vadd.f32 %v1319, %v1391
    %1393 = vmatprep.mubr.bf16.mxu0 0
    %1394 = vmatmul.mubr.bf16.gmra.mrb[0].mxu0 %v187
    %v1395 = vpop.f32.mrb[0].mxu0
    %v1396 = vadd.f32 %v1323, %v1395
    %v1397 = vpop.f32.mrb[0].mxu0
    %v1398 = vadd.f32 %v1325, %v1397
    %v1399 = vpop.f32.mrb[0].mxu0
    %v1400 = vadd.f32 %v1327, %v1399
    %v1401 = vpop.f32.mrb[0].mxu0
    %v1402 = vadd.f32 %v1329, %v1401
    %1403 = vmatprep.mubr.bf16.mxu0 0
    %1404 = vmatmul.mubr.bf16.gmra.mrb[0].mxu0 %v188
    %v1405 = vpop.f32.mrb[0].mxu0
    %v1406 = vadd.f32 %v1333, %v1405
    %v1407 = vpop.f32.mrb[0].mxu0
    %v1408 = vadd.f32 %v1335, %v1407
    %v1409 = vpop.f32.mrb[0].mxu0
    %v1410 = vadd.f32 %v1337, %v1409
    %v1411 = vpop.f32.mrb[0].mxu0
    %v1412 = vadd.f32 %v1339, %v1411
    %1413 = vmatprep.mubr.bf16.mxu0 0
    %1414 = vmatmul.mubr.bf16.gmra.mrb[0].mxu0 %v189
    %v1415 = vpop.f32.mrb[0].mxu0
    %v1416 = vadd.f32 %v1343, %v1415
    %v1417 = vpop.f32.mrb[0].mxu0
    %v1418 = vadd.f32 %v1345, %v1417
    %v1419 = vpop.f32.mrb[0].mxu0
    %v1420 = vadd.f32 %v1347, %v1419
    %v1421 = vpop.f32.mrb[0].mxu0
    %v1422 = vadd.f32 %v1349, %v1421
    %1423 = vdwg.mxu0
    %v1424 = vmax.f32 %v1386, %v1388
    %v1425 = vmax.f32 %v1390, %v1392
    %v1426 = vmax.f32 %v1396, %v1398
    %v1427 = vmax.f32 %v1400, %v1402
    %v1428 = vmax.f32 %v1406, %v1408
    %v1429 = vmax.f32 %v1410, %v1412
    %v1430 = vmax.f32 %v1416, %v1418
    %v1431 = vmax.f32 %v1420, %v1422
    %1432 = vmatprep.subr.bf16.mxu0 %v562
    %1433 = vmatpush1.bf16.msra.mxu0 %v561
    %1434 = vmatprep.subr.bf16.mxu0 %v564
    %1435 = vmatpush1.bf16.msra.mxu0 %v563
    %1436 = vmatprep.subr.bf16.mxu0 %v566
    %1437 = vmatpush1.bf16.msra.mxu0 %v565
    %1438 = vmatprep.subr.bf16.mxu0 %v568
    %1439 = vmatpush1.bf16.msra.mxu0 %v567
    %1440 = vmatprep.subr.bf16.mxu0 %v570
    %1441 = vmatpush1.bf16.msra.mxu0 %v569
    %1442 = vmatprep.subr.bf16.mxu0 %v572
    %1443 = vmatpush1.bf16.msra.mxu0 %v571
    %1444 = vmatprep.subr.bf16.mxu0 %v574
    %1445 = vmatpush1.bf16.msra.mxu0 %v573
    %1446 = vmatprep.subr.bf16.mxu0 %v576
    %1447 = vmatpush1.bf16.msra.mxu0 %v575
    %1448 = vmatprep.subr.bf16.mxu0 %v578
    %1449 = vmatpush1.bf16.msra.mxu0 %v577
    %1450 = vmatprep.subr.bf16.mxu0 %v580
    %1451 = vmatpush1.bf16.msra.mxu0 %v579
    %1452 = vmatprep.subr.bf16.mxu0 %v582
    %1453 = vmatpush1.bf16.msra.mxu0 %v581
    %1454 = vmatprep.subr.bf16.mxu0 %v584
    %1455 = vmatpush1.bf16.msra.mxu0 %v583
    %1456 = vmatprep.subr.bf16.mxu0 %v586
    %1457 = vmatpush1.bf16.msra.mxu0 %v585
    %1458 = vmatprep.subr.bf16.mxu0 %v588
    %1459 = vmatpush1.bf16.msra.mxu0 %v587
    %1460 = vmatprep.subr.bf16.mxu0 %v590
    %1461 = vmatpush1.bf16.msra.mxu0 %v589
    %1462 = vmatprep.subr.bf16.mxu0 %v592
    %1463 = vmatpush1.bf16.msra.mxu0 %v591
    %1464 = vmatprep.mubr.bf16.mxu0 %v86
    %1465 = vmatmul.mubr.bf16.gmra.mrb[0].mxu0 %v199
    %v1466 = vpop.f32.mrb[0].mxu0
    %v1467 = vadd.f32 0.0, %v1466
    %v1468 = vpop.f32.mrb[0].mxu0
    %v1469 = vadd.f32 0.0, %v1468
    %v1470 = vpop.f32.mrb[0].mxu0
    %v1471 = vadd.f32 0.0, %v1470
    %v1472 = vpop.f32.mrb[0].mxu0
    %v1473 = vadd.f32 0.0, %v1472
    %1474 = vmatprep.mubr.bf16.mxu0 %v87
    %1475 = vmatmul.mubr.bf16.gmra.mrb[0].mxu0 %v200
    %v1476 = vpop.f32.mrb[0].mxu0
    %v1477 = vadd.f32 0.0, %v1476
    %v1478 = vpop.f32.mrb[0].mxu0
    %v1479 = vadd.f32 0.0, %v1478
    %v1480 = vpop.f32.mrb[0].mxu0
    %v1481 = vadd.f32 0.0, %v1480
    %v1482 = vpop.f32.mrb[0].mxu0
    %v1483 = vadd.f32 0.0, %v1482
    %1484 = vmatprep.mubr.bf16.mxu0 %v88
    %1485 = vmatmul.mubr.bf16.gmra.mrb[0].mxu0 %v201
    %v1486 = vpop.f32.mrb[0].mxu0
    %v1487 = vadd.f32 0.0, %v1486
    %v1488 = vpop.f32.mrb[0].mxu0
    %v1489 = vadd.f32 0.0, %v1488
    %v1490 = vpop.f32.mrb[0].mxu0
    %v1491 = vadd.f32 0.0, %v1490
    %v1492 = vpop.f32.mrb[0].mxu0
    %v1493 = vadd.f32 0.0, %v1492
    %1494 = vmatprep.mubr.bf16.mxu0 %v89
    %1495 = vmatmul.mubr.bf16.gmra.mrb[0].mxu0 %v202
    %v1496 = vpop.f32.mrb[0].mxu0
    %v1497 = vadd.f32 0.0, %v1496
    %v1498 = vpop.f32.mrb[0].mxu0
    %v1499 = vadd.f32 0.0, %v1498
    %v1500 = vpop.f32.mrb[0].mxu0
    %v1501 = vadd.f32 0.0, %v1500
    %v1502 = vpop.f32.mrb[0].mxu0
    %v1503 = vadd.f32 0.0, %v1502
    %1504 = vdwg.mxu0
    %1505 = vmatprep.subr.bf16.mxu0 %v594
    %1506 = vmatpush1.bf16.msra.mxu0 %v593
    %1507 = vmatprep.subr.bf16.mxu0 %v596
    %1508 = vmatpush1.bf16.msra.mxu0 %v595
    %1509 = vmatprep.subr.bf16.mxu0 %v598
    %1510 = vmatpush1.bf16.msra.mxu0 %v597
    %1511 = vmatprep.subr.bf16.mxu0 %v600
    %1512 = vmatpush1.bf16.msra.mxu0 %v599
    %1513 = vmatprep.subr.bf16.mxu0 %v602
    %1514 = vmatpush1.bf16.msra.mxu0 %v601
    %1515 = vmatprep.subr.bf16.mxu0 %v604
    %1516 = vmatpush1.bf16.msra.mxu0 %v603
    %1517 = vmatprep.subr.bf16.mxu0 %v606
    %1518 = vmatpush1.bf16.msra.mxu0 %v605
    %1519 = vmatprep.subr.bf16.mxu0 %v608
    %1520 = vmatpush1.bf16.msra.mxu0 %v607
    %1521 = vmatprep.subr.bf16.mxu0 %v610
    %1522 = vmatpush1.bf16.msra.mxu0 %v609
    %1523 = vmatprep.subr.bf16.mxu0 %v612
    %1524 = vmatpush1.bf16.msra.mxu0 %v611
    %1525 = vmatprep.subr.bf16.mxu0 %v614
    %1526 = vmatpush1.bf16.msra.mxu0 %v613
    %1527 = vmatprep.subr.bf16.mxu0 %v616
    %1528 = vmatpush1.bf16.msra.mxu0 %v615
    %1529 = vmatprep.subr.bf16.mxu0 %v618
    %1530 = vmatpush1.bf16.msra.mxu0 %v617
    %1531 = vmatprep.subr.bf16.mxu0 %v620
    %1532 = vmatpush1.bf16.msra.mxu0 %v619
    %1533 = vmatprep.subr.bf16.mxu0 %v622
    %1534 = vmatpush1.bf16.msra.mxu0 %v621
    %1535 = vmatprep.subr.bf16.mxu0 %v624
    %1536 = vmatpush1.bf16.msra.mxu0 %v623
    %1537 = vmatprep.mubr.bf16.mxu0 %v186
    %1538 = vmatmul.mubr.bf16.gmra.mrb[0].mxu0 %v136
    %v1539 = vpop.f32.mrb[0].mxu0
    %v1540 = vadd.f32 %v1467, %v1539
    %v1541 = vpop.f32.mrb[0].mxu0
    %v1542 = vadd.f32 %v1469, %v1541
    %v1543 = vpop.f32.mrb[0].mxu0
    %v1544 = vadd.f32 %v1471, %v1543
    %v1545 = vpop.f32.mrb[0].mxu0
    %v1546 = vadd.f32 %v1473, %v1545
    %1547 = vmatprep.mubr.bf16.mxu0 %v187
    %1548 = vmatmul.mubr.bf16.gmra.mrb[0].mxu0 %v137
    %v1549 = vpop.f32.mrb[0].mxu0
    %v1550 = vadd.f32 %v1477, %v1549
    %v1551 = vpop.f32.mrb[0].mxu0
    %v1552 = vadd.f32 %v1479, %v1551
    %v1553 = vpop.f32.mrb[0].mxu0
    %v1554 = vadd.f32 %v1481, %v1553
    %v1555 = vpop.f32.mrb[0].mxu0
    %v1556 = vadd.f32 %v1483, %v1555
    %1557 = vmatprep.mubr.bf16.mxu0 %v188
    %1558 = vmatmul.mubr.bf16.gmra.mrb[0].mxu0 %v138
    %v1559 = vpop.f32.mrb[0].mxu0
    %v1560 = vadd.f32 %v1487, %v1559
    %v1561 = vpop.f32.mrb[0].mxu0
    %v1562 = vadd.f32 %v1489, %v1561
    %v1563 = vpop.f32.mrb[0].mxu0
    %v1564 = vadd.f32 %v1491, %v1563
    %v1565 = vpop.f32.mrb[0].mxu0
    %v1566 = vadd.f32 %v1493, %v1565
    %1567 = vmatprep.mubr.bf16.mxu0 %v189
    %1568 = vmatmul.mubr.bf16.gmra.mrb[0].mxu0 %v139
    %v1569 = vpop.f32.mrb[0].mxu0
    %v1570 = vadd.f32 %v1497, %v1569
    %v1571 = vpop.f32.mrb[0].mxu0
    %v1572 = vadd.f32 %v1499, %v1571
    %v1573 = vpop.f32.mrb[0].mxu0
    %v1574 = vadd.f32 %v1501, %v1573
    %v1575 = vpop.f32.mrb[0].mxu0
    %v1576 = vadd.f32 %v1503, %v1575
    %1577 = vdwg.mxu0
    %1578 = vmatprep.subr.bf16.mxu0 %v626
    %1579 = vmatpush1.bf16.msra.mxu0 %v625
    %1580 = vmatprep.subr.bf16.mxu0 %v628
    %1581 = vmatpush1.bf16.msra.mxu0 %v627
    %1582 = vmatprep.subr.bf16.mxu0 %v630
    %1583 = vmatpush1.bf16.msra.mxu0 %v629
    %1584 = vmatprep.subr.bf16.mxu0 %v632
    %1585 = vmatpush1.bf16.msra.mxu0 %v631
    %1586 = vmatprep.subr.bf16.mxu0 %v634
    %1587 = vmatpush1.bf16.msra.mxu0 %v633
    %1588 = vmatprep.subr.bf16.mxu0 %v636
    %1589 = vmatpush1.bf16.msra.mxu0 %v635
    %1590 = vmatprep.subr.bf16.mxu0 %v638
    %1591 = vmatpush1.bf16.msra.mxu0 %v637
    %1592 = vmatprep.subr.bf16.mxu0 %v640
    %1593 = vmatpush1.bf16.msra.mxu0 %v639
    %1594 = vmatprep.subr.bf16.mxu0 0
    %1595 = vmatpush1.bf16.msra.mxu0 0
    %1596 = vmatprep.subr.bf16.mxu0 0
    %1597 = vmatpush1.bf16.msra.mxu0 0
    %1598 = vmatprep.subr.bf16.mxu0 0
    %1599 = vmatpush1.bf16.msra.mxu0 0
    %1600 = vmatprep.subr.bf16.mxu0 0
    %1601 = vmatpush1.bf16.msra.mxu0 0
    %1602 = vmatprep.subr.bf16.mxu0 0
    %1603 = vmatpush1.bf16.msra.mxu0 0
    %1604 = vmatprep.subr.bf16.mxu0 0
    %1605 = vmatpush1.bf16.msra.mxu0 0
    %1606 = vmatprep.subr.bf16.mxu0 0
    %1607 = vmatpush1.bf16.msra.mxu0 0
    %1608 = vmatprep.subr.bf16.mxu0 0
    %1609 = vmatpush1.bf16.msra.mxu0 0
    %1610 = vmatprep.mubr.bf16.mxu0 0
    %1611 = vmatmul.mubr.bf16.gmra.mrb[0].mxu0 %v236
    %v1612 = vpop.f32.mrb[0].mxu0
    %v1613 = vadd.f32 %v1540, %v1612
    %v1614 = vpop.f32.mrb[0].mxu0
    %v1615 = vadd.f32 %v1542, %v1614
    %v1616 = vpop.f32.mrb[0].mxu0
    %v1617 = vadd.f32 %v1544, %v1616
    %v1618 = vpop.f32.mrb[0].mxu0
    %v1619 = vadd.f32 %v1546, %v1618
    %1620 = vmatprep.mubr.bf16.mxu0 0
    %1621 = vmatmul.mubr.bf16.gmra.mrb[0].mxu0 %v237
    %v1622 = vpop.f32.mrb[0].mxu0
    %v1623 = vadd.f32 %v1550, %v1622
    %v1624 = vpop.f32.mrb[0].mxu0
    %v1625 = vadd.f32 %v1552, %v1624
    %v1626 = vpop.f32.mrb[0].mxu0
    %v1627 = vadd.f32 %v1554, %v1626
    %v1628 = vpop.f32.mrb[0].mxu0
    %v1629 = vadd.f32 %v1556, %v1628
    %1630 = vmatprep.mubr.bf16.mxu0 0
    %1631 = vmatmul.mubr.bf16.gmra.mrb[0].mxu0 %v238
    %v1632 = vpop.f32.mrb[0].mxu0
    %v1633 = vadd.f32 %v1560, %v1632
    %v1634 = vpop.f32.mrb[0].mxu0
    %v1635 = vadd.f32 %v1562, %v1634
    %v1636 = vpop.f32.mrb[0].mxu0
    %v1637 = vadd.f32 %v1564, %v1636
    %v1638 = vpop.f32.mrb[0].mxu0
    %v1639 = vadd.f32 %v1566, %v1638
    %1640 = vmatprep.mubr.bf16.mxu0 0
    %1641 = vmatmul.mubr.bf16.gmra.mrb[0].mxu0 %v239
    %v1642 = vpop.f32.mrb[0].mxu0
    %v1643 = vadd.f32 %v1570, %v1642
    %v1644 = vpop.f32.mrb[0].mxu0
    %v1645 = vadd.f32 %v1572, %v1644
    %v1646 = vpop.f32.mrb[0].mxu0
    %v1647 = vadd.f32 %v1574, %v1646
    %v1648 = vpop.f32.mrb[0].mxu0
    %v1649 = vadd.f32 %v1576, %v1648
    %1650 = vdwg.mxu0
    %v1651 = vmax.f32 %v1613, %v1615
    %v1652 = vmax.f32 %v1617, %v1619
    %v1653 = vmax.f32 %v1623, %v1625
    %v1654 = vmax.f32 %v1627, %v1629
    %v1655 = vmax.f32 %v1633, %v1635
    %v1656 = vmax.f32 %v1637, %v1639
    %v1657 = vmax.f32 %v1643, %v1645
    %v1658 = vmax.f32 %v1647, %v1649
    %v1659 = vmax.f32 %v1424, %v1651
    %v1660 = vmax.f32 %v1425, %v1652
    %v1661 = vmax.f32 %v1426, %v1653
    %v1662 = vmax.f32 %v1427, %v1654
    %v1663 = vmax.f32 %v1428, %v1655
    %v1664 = vmax.f32 %v1429, %v1656
    %v1665 = vmax.f32 %v1430, %v1657
    %v1666 = vmax.f32 %v1431, %v1658
    %v1667 = vadd.f32 %v1659, %v1187
    %v1668 = vadd.f32 %v1660, %v1187
    %v1669 = vadd.f32 %v1661, %v1187
    %v1670 = vadd.f32 %v1662, %v1187
    %v1671 = vadd.f32 %v1663, %v1187
    %v1672 = vadd.f32 %v1664, %v1187
    %v1673 = vadd.f32 %v1665, %v1187
    %v1674 = vadd.f32 %v1666, %v1187
    %v1675 = vmax.f32 %v1667, 0.0
    %v1676 = vmax.f32 %v1668, 0.0
    %v1677 = vmax.f32 %v1669, 0.0
    %v1678 = vmax.f32 %v1670, 0.0
    %v1679 = vmax.f32 %v1671, 0.0
    %v1680 = vmax.f32 %v1672, 0.0
    %v1681 = vmax.f32 %v1673, 0.0
    %v1682 = vmax.f32 %v1674, 0.0
    %v1683 = vpack.c.bf16 %v1198, %v1197
    %v1684 = vpack.c.bf16 %v1200, %v1199
    %v1685 = vpack.c.bf16 %v1202, %v1201
    %v1686 = vpack.c.bf16 %v1204, %v1203
    %v1695 = vrot.slane %v1197, 1
    %v1696 = vrot.slane %v1198, 1
    %v1697 = vsel %vm60, %v1695, %v1696
    %v1698 = vrot.slane %v1199, 1
    %v1699 = vsel %vm60, %v1696, %v1698
    %v1700 = vrot.slane %v1200, 1
    %v1701 = vsel %vm60, %v1698, %v1700
    %v1702 = vrot.slane %v1201, 1
    %v1703 = vsel %vm60, %v1700, %v1702
    %v1704 = vrot.slane %v1202, 1
    %v1705 = vsel %vm60, %v1702, %v1704
    %v1706 = vrot.slane %v1203, 1
    %v1707 = vsel %vm60, %v1704, %v1706
    %v1708 = vrot.slane %v1204, 1
    %v1709 = vsel %vm60, %v1706, %v1708
    %v1719 = vsel %vm60, %v1708, %v1695
    %v1720 = vpack.c.bf16 %v1699, %v1697
    %v1721 = vpack.c.bf16 %v1703, %v1701
    %v1722 = vpack.c.bf16 %v1707, %v1705
    %v1723 = vpack.c.bf16 %v1719, %v1709
    %vm1724 = vcmask 1045504
    %v1725 = vrot.slane %v1197, 2
    %v1726 = vrot.slane %v1198, 2
    %v1727 = vsel %vm1724, %v1725, %v1726
    %v1728 = vrot.slane %v1199, 2
    %v1729 = vsel %vm1724, %v1726, %v1728
    %v1730 = vrot.slane %v1200, 2
    %v1731 = vsel %vm1724, %v1728, %v1730
    %v1732 = vrot.slane %v1201, 2
    %v1733 = vsel %vm1724, %v1730, %v1732
    %v1734 = vrot.slane %v1202, 2
    %v1735 = vsel %vm1724, %v1732, %v1734
    %v1736 = vrot.slane %v1203, 2
    %v1737 = vsel %vm1724, %v1734, %v1736
    %v1738 = vrot.slane %v1204, 2
    %v1739 = vsel %vm1724, %v1736, %v1738
    %v1749 = vsel %vm1724, %v1738, %v1725
    %v1750 = vpack.c.bf16 %v1729, %v1727
    %v1751 = vpack.c.bf16 %v1733, %v1731
    %v1752 = vpack.c.bf16 %v1737, %v1735
    %v1753 = vpack.c.bf16 %v1749, %v1739
    %v1754 = vpack.c.bf16 %v1676, %v1675
    %v1755 = vpack.c.bf16 %v1678, %v1677
    %v1756 = vpack.c.bf16 %v1680, %v1679
    %v1757 = vpack.c.bf16 %v1682, %v1681
    %v1766 = vrot.slane %v1675, 1
    %v1767 = vrot.slane %v1676, 1
    %v1768 = vsel %vm60, %v1766, %v1767
    %v1769 = vrot.slane %v1677, 1
    %v1770 = vsel %vm60, %v1767, %v1769
    %v1771 = vrot.slane %v1678, 1
    %v1772 = vsel %vm60, %v1769, %v1771
    %v1773 = vrot.slane %v1679, 1
    %v1774 = vsel %vm60, %v1771, %v1773
    %v1775 = vrot.slane %v1680, 1
    %v1776 = vsel %vm60, %v1773, %v1775
    %v1777 = vrot.slane %v1681, 1
    %v1778 = vsel %vm60, %v1775, %v1777
    %v1779 = vrot.slane %v1682, 1
    %v1780 = vsel %vm60, %v1777, %v1779
    %v1790 = vsel %vm60, %v1779, %v1766
    %v1791 = vpack.c.bf16 %v1770, %v1768
    %v1792 = vpack.c.bf16 %v1774, %v1772
    %v1793 = vpack.c.bf16 %v1778, %v1776
    %v1794 = vpack.c.bf16 %v1790, %v1780
    %v1795 = vrot.slane %v1675, 2
    %v1796 = vrot.slane %v1676, 2
    %v1797 = vsel %vm1724, %v1795, %v1796
    %v1798 = vrot.slane %v1677, 2
    %v1799 = vsel %vm1724, %v1796, %v1798
    %v1800 = vrot.slane %v1678, 2
    %v1801 = vsel %vm1724, %v1798, %v1800
    %v1802 = vrot.slane %v1679, 2
    %v1803 = vsel %vm1724, %v1800, %v1802
    %v1804 = vrot.slane %v1680, 2
    %v1805 = vsel %vm1724, %v1802, %v1804
    %v1806 = vrot.slane %v1681, 2
    %v1807 = vsel %vm1724, %v1804, %v1806
    %v1808 = vrot.slane %v1682, 2
    %v1809 = vsel %vm1724, %v1806, %v1808
    %v1819 = vsel %vm1724, %v1808, %v1795
    %v1820 = vpack.c.bf16 %v1799, %v1797
    %v1821 = vpack.c.bf16 %v1803, %v1801
    %v1822 = vpack.c.bf16 %v1807, %v1805
    %v1823 = vpack.c.bf16 %v1819, %v1809
    %v1824 = vld [vmem:[%s3] sm:$0xff]
    %v1825 = vld [vmem:[%s3 + $0x8] sm:$0xff]
    %v1826 = vld [vmem:[%s3 + $0x10] sm:$0xff]
    %v1827 = vld [vmem:[%s3 + $0x18] sm:$0xff]
    %v1828 = vld [vmem:[%s3 + $0x20] sm:$0xff]
    %v1829 = vld [vmem:[%s3 + $0x28] sm:$0xff]
    %v1830 = vld [vmem:[%s3 + $0x30] sm:$0xff]
    %v1831 = vld [vmem:[%s3 + $0x38] sm:$0xff]
    %v1832 = vld [vmem:[%s3 + $0x40] sm:$0xff]
    %v1833 = vld [vmem:[%s3 + $0x48] sm:$0xff]
    %v1834 = vld [vmem:[%s3 + $0x50] sm:$0xff]
    %v1835 = vld [vmem:[%s3 + $0x58] sm:$0xff]
    %v1836 = vld [vmem:[%s3 + $0x60] sm:$0xff]
    %v1837 = vld [vmem:[%s3 + $0x68] sm:$0xff]
    %v1838 = vld [vmem:[%s3 + $0x70] sm:$0xff]
    %v1839 = vld [vmem:[%s3 + $0x78] sm:$0xff]
    %v1840 = vld [vmem:[%s3 + $0x80] sm:$0xff]
    %v1841 = vld [vmem:[%s3 + $0x88] sm:$0xff]
    %v1842 = vld [vmem:[%s3 + $0x90] sm:$0xff]
    %v1843 = vld [vmem:[%s3 + $0x98] sm:$0xff]
    %v1844 = vld [vmem:[%s3 + $0xa0] sm:$0xff]
    %v1845 = vld [vmem:[%s3 + $0xa8] sm:$0xff]
    %v1846 = vld [vmem:[%s3 + $0xb0] sm:$0xff]
    %v1847 = vld [vmem:[%s3 + $0xb8] sm:$0xff]
    %v1848 = vld [vmem:[%s3 + $0xc0] sm:$0xff]
    %v1849 = vld [vmem:[%s3 + $0xc8] sm:$0xff]
    %v1850 = vld [vmem:[%s3 + $0xd0] sm:$0xff]
    %v1851 = vld [vmem:[%s3 + $0xd8] sm:$0xff]
    %v1852 = vld [vmem:[%s3 + $0xe0] sm:$0xff]
    %v1853 = vld [vmem:[%s3 + $0xe8] sm:$0xff]
    %v1854 = vld [vmem:[%s3 + $0xf0] sm:$0xff]
    %v1855 = vld [vmem:[%s3 + $0xf8] sm:$0xff]
    %v1856 = vld [vmem:[%s3 + $0x100] sm:$0xff]
    %v1857 = vld [vmem:[%s3 + $0x108] sm:$0xff]
    %v1858 = vld [vmem:[%s3 + $0x110] sm:$0xff]
    %v1859 = vld [vmem:[%s3 + $0x118] sm:$0xff]
    %v1860 = vld [vmem:[%s3 + $0x120] sm:$0xff]
    %v1861 = vld [vmem:[%s3 + $0x128] sm:$0xff]
    %v1862 = vld [vmem:[%s3 + $0x130] sm:$0xff]
    %v1863 = vld [vmem:[%s3 + $0x138] sm:$0xff]
    %v1864 = vld [vmem:[%s3 + $0x140] sm:$0xff]
    %v1865 = vld [vmem:[%s3 + $0x148] sm:$0xff]
    %v1866 = vld [vmem:[%s3 + $0x150] sm:$0xff]
    %v1867 = vld [vmem:[%s3 + $0x158] sm:$0xff]
    %v1868 = vld [vmem:[%s3 + $0x160] sm:$0xff]
    %v1869 = vld [vmem:[%s3 + $0x168] sm:$0xff]
    %v1870 = vld [vmem:[%s3 + $0x170] sm:$0xff]
    %v1871 = vld [vmem:[%s3 + $0x178] sm:$0xff]
    %v1872 = vld [vmem:[%s3 + $0x180] sm:$0xff]
    %v1873 = vld [vmem:[%s3 + $0x188] sm:$0xff]
    %v1874 = vld [vmem:[%s3 + $0x190] sm:$0xff]
    %v1875 = vld [vmem:[%s3 + $0x198] sm:$0xff]
    %v1876 = vld [vmem:[%s3 + $0x1a0] sm:$0xff]
    %v1877 = vld [vmem:[%s3 + $0x1a8] sm:$0xff]
    %v1878 = vld [vmem:[%s3 + $0x1b0] sm:$0xff]
    %v1879 = vld [vmem:[%s3 + $0x1b8] sm:$0xff]
    %v1880 = vld [vmem:[%s3 + $0x1c0] sm:$0xff]
    %v1881 = vld [vmem:[%s3 + $0x1c8] sm:$0xff]
    %v1882 = vld [vmem:[%s3 + $0x1d0] sm:$0xff]
    %v1883 = vld [vmem:[%s3 + $0x1d8] sm:$0xff]
    %v1884 = vld [vmem:[%s3 + $0x1e0] sm:$0xff]
    %v1885 = vld [vmem:[%s3 + $0x1e8] sm:$0xff]
    %v1886 = vld [vmem:[%s3 + $0x1f0] sm:$0xff]
    %v1887 = vld [vmem:[%s3 + $0x1f8] sm:$0xff]
    %v1888 = vld [vmem:[%s3 + $0x200] sm:$0xff]
    %v1889 = vld [vmem:[%s3 + $0x208] sm:$0xff]
    %v1890 = vld [vmem:[%s3 + $0x210] sm:$0xff]
    %v1891 = vld [vmem:[%s3 + $0x218] sm:$0xff]
    %v1892 = vld [vmem:[%s3 + $0x220] sm:$0xff]
    %v1893 = vld [vmem:[%s3 + $0x228] sm:$0xff]
    %v1894 = vld [vmem:[%s3 + $0x230] sm:$0xff]
    %v1895 = vld [vmem:[%s3 + $0x238] sm:$0xff]
    %v1896 = vld [vmem:[%s3 + $0x240] sm:$0xff]
    %v1897 = vld [vmem:[%s3 + $0x248] sm:$0xff]
    %v1898 = vld [vmem:[%s3 + $0x250] sm:$0xff]
    %v1899 = vld [vmem:[%s3 + $0x258] sm:$0xff]
    %v1900 = vld [vmem:[%s3 + $0x260] sm:$0xff]
    %v1901 = vld [vmem:[%s3 + $0x268] sm:$0xff]
    %v1902 = vld [vmem:[%s3 + $0x270] sm:$0xff]
    %v1903 = vld [vmem:[%s3 + $0x278] sm:$0xff]
    %v1904 = vld [vmem:[%s4] sm:$0x1]
    %v1985 = vunpack.c.l.b16 %v1824
    %v1986 = vunpack.c.h.b16 %v1824
    %v1987 = vunpack.c.l.b16 %v1825
    %v1988 = vunpack.c.h.b16 %v1825
    %v1989 = vunpack.c.l.b16 %v1826
    %v1990 = vunpack.c.h.b16 %v1826
    %v1991 = vunpack.c.l.b16 %v1827
    %v1992 = vunpack.c.h.b16 %v1827
    %v1993 = vunpack.c.l.b16 %v1828
    %v1994 = vunpack.c.h.b16 %v1828
    %v1995 = vunpack.c.l.b16 %v1829
    %v1996 = vunpack.c.h.b16 %v1829
    %v1997 = vunpack.c.l.b16 %v1830
    %v1998 = vunpack.c.h.b16 %v1830
    %v1999 = vunpack.c.l.b16 %v1831
    %v2000 = vunpack.c.h.b16 %v1831
    %v2001 = vunpack.c.l.b16 %v1832
    %v2002 = vunpack.c.h.b16 %v1832
    %v2003 = vunpack.c.l.b16 %v1833
    %v2004 = vunpack.c.h.b16 %v1833
    %v2005 = vunpack.c.l.b16 %v1834
    %v2006 = vunpack.c.h.b16 %v1834
    %v2007 = vunpack.c.l.b16 %v1835
    %v2008 = vunpack.c.h.b16 %v1835
    %v2009 = vunpack.c.l.b16 %v1836
    %v2010 = vunpack.c.h.b16 %v1836
    %v2011 = vunpack.c.l.b16 %v1837
    %v2012 = vunpack.c.h.b16 %v1837
    %v2013 = vunpack.c.l.b16 %v1838
    %v2014 = vunpack.c.h.b16 %v1838
    %v2015 = vunpack.c.l.b16 %v1839
    %v2016 = vunpack.c.h.b16 %v1839
    %v2017 = vunpack.c.l.b16 %v1840
    %v2018 = vunpack.c.h.b16 %v1840
    %v2019 = vunpack.c.l.b16 %v1841
    %v2020 = vunpack.c.h.b16 %v1841
    %v2021 = vunpack.c.l.b16 %v1842
    %v2022 = vunpack.c.h.b16 %v1842
    %v2023 = vunpack.c.l.b16 %v1843
    %v2024 = vunpack.c.h.b16 %v1843
    %v2025 = vunpack.c.l.b16 %v1844
    %v2026 = vunpack.c.h.b16 %v1844
    %v2027 = vunpack.c.l.b16 %v1845
    %v2028 = vunpack.c.h.b16 %v1845
    %v2029 = vunpack.c.l.b16 %v1846
    %v2030 = vunpack.c.h.b16 %v1846
    %v2031 = vunpack.c.l.b16 %v1847
    %v2032 = vunpack.c.h.b16 %v1847
    %v2033 = vunpack.c.l.b16 %v1848
    %v2034 = vunpack.c.h.b16 %v1848
    %v2035 = vunpack.c.l.b16 %v1849
    %v2036 = vunpack.c.h.b16 %v1849
    %v2037 = vunpack.c.l.b16 %v1850
    %v2038 = vunpack.c.h.b16 %v1850
    %v2039 = vunpack.c.l.b16 %v1851
    %v2040 = vunpack.c.h.b16 %v1851
    %v2041 = vunpack.c.l.b16 %v1852
    %v2042 = vunpack.c.h.b16 %v1852
    %v2043 = vunpack.c.l.b16 %v1853
    %v2044 = vunpack.c.h.b16 %v1853
    %v2045 = vunpack.c.l.b16 %v1854
    %v2046 = vunpack.c.h.b16 %v1854
    %v2047 = vunpack.c.l.b16 %v1855
    %v2048 = vunpack.c.h.b16 %v1855
    %v2049 = vunpack.c.l.b16 %v1856
    %v2050 = vunpack.c.h.b16 %v1856
    %v2051 = vunpack.c.l.b16 %v1857
    %v2052 = vunpack.c.h.b16 %v1857
    %v2053 = vunpack.c.l.b16 %v1858
    %v2054 = vunpack.c.h.b16 %v1858
    %v2055 = vunpack.c.l.b16 %v1859
    %v2056 = vunpack.c.h.b16 %v1859
    %v2057 = vunpack.c.l.b16 %v1860
    %v2058 = vunpack.c.h.b16 %v1860
    %v2059 = vunpack.c.l.b16 %v1861
    %v2060 = vunpack.c.h.b16 %v1861
    %v2061 = vunpack.c.l.b16 %v1862
    %v2062 = vunpack.c.h.b16 %v1862
    %v2063 = vunpack.c.l.b16 %v1863
    %v2064 = vunpack.c.h.b16 %v1863
    %v2065 = vunpack.c.l.b16 %v1864
    %v2066 = vunpack.c.h.b16 %v1864
    %v2067 = vunpack.c.l.b16 %v1865
    %v2068 = vunpack.c.h.b16 %v1865
    %v2069 = vunpack.c.l.b16 %v1866
    %v2070 = vunpack.c.h.b16 %v1866
    %v2071 = vunpack.c.l.b16 %v1867
    %v2072 = vunpack.c.h.b16 %v1867
    %v2073 = vunpack.c.l.b16 %v1868
    %v2074 = vunpack.c.h.b16 %v1868
    %v2075 = vunpack.c.l.b16 %v1869
    %v2076 = vunpack.c.h.b16 %v1869
    %v2077 = vunpack.c.l.b16 %v1870
    %v2078 = vunpack.c.h.b16 %v1870
    %v2079 = vunpack.c.l.b16 %v1871
    %v2080 = vunpack.c.h.b16 %v1871
    %v2081 = vunpack.c.l.b16 %v1872
    %v2082 = vunpack.c.h.b16 %v1872
    %v2083 = vunpack.c.l.b16 %v1873
    %v2084 = vunpack.c.h.b16 %v1873
    %v2085 = vunpack.c.l.b16 %v1874
    %v2086 = vunpack.c.h.b16 %v1874
    %v2087 = vunpack.c.l.b16 %v1875
    %v2088 = vunpack.c.h.b16 %v1875
    %v2089 = vunpack.c.l.b16 %v1876
    %v2090 = vunpack.c.h.b16 %v1876
    %v2091 = vunpack.c.l.b16 %v1877
    %v2092 = vunpack.c.h.b16 %v1877
    %v2093 = vunpack.c.l.b16 %v1878
    %v2094 = vunpack.c.h.b16 %v1878
    %v2095 = vunpack.c.l.b16 %v1879
    %v2096 = vunpack.c.h.b16 %v1879
    %v2097 = vunpack.c.l.b16 %v1880
    %v2098 = vunpack.c.h.b16 %v1880
    %v2099 = vunpack.c.l.b16 %v1881
    %v2100 = vunpack.c.h.b16 %v1881
    %v2101 = vunpack.c.l.b16 %v1882
    %v2102 = vunpack.c.h.b16 %v1882
    %v2103 = vunpack.c.l.b16 %v1883
    %v2104 = vunpack.c.h.b16 %v1883
    %v2105 = vunpack.c.l.b16 %v1884
    %v2106 = vunpack.c.h.b16 %v1884
    %v2107 = vunpack.c.l.b16 %v1885
    %v2108 = vunpack.c.h.b16 %v1885
    %v2109 = vunpack.c.l.b16 %v1886
    %v2110 = vunpack.c.h.b16 %v1886
    %v2111 = vunpack.c.l.b16 %v1887
    %v2112 = vunpack.c.h.b16 %v1887
    %v2113 = vunpack.c.l.b16 %v1888
    %v2114 = vunpack.c.h.b16 %v1888
    %v2115 = vunpack.c.l.b16 %v1889
    %v2116 = vunpack.c.h.b16 %v1889
    %v2117 = vunpack.c.l.b16 %v1890
    %v2118 = vunpack.c.h.b16 %v1890
    %v2119 = vunpack.c.l.b16 %v1891
    %v2120 = vunpack.c.h.b16 %v1891
    %v2121 = vunpack.c.l.b16 %v1892
    %v2122 = vunpack.c.h.b16 %v1892
    %v2123 = vunpack.c.l.b16 %v1893
    %v2124 = vunpack.c.h.b16 %v1893
    %v2125 = vunpack.c.l.b16 %v1894
    %v2126 = vunpack.c.h.b16 %v1894
    %v2127 = vunpack.c.l.b16 %v1895
    %v2128 = vunpack.c.h.b16 %v1895
    %v2129 = vunpack.c.l.b16 %v1896
    %v2130 = vunpack.c.h.b16 %v1896
    %v2131 = vunpack.c.l.b16 %v1897
    %v2132 = vunpack.c.h.b16 %v1897
    %v2133 = vunpack.c.l.b16 %v1898
    %v2134 = vunpack.c.h.b16 %v1898
    %v2135 = vunpack.c.l.b16 %v1899
    %v2136 = vunpack.c.h.b16 %v1899
    %v2137 = vunpack.c.l.b16 %v1900
    %v2138 = vunpack.c.h.b16 %v1900
    %v2139 = vunpack.c.l.b16 %v1901
    %v2140 = vunpack.c.h.b16 %v1901
    %v2141 = vunpack.c.l.b16 %v1902
    %v2142 = vunpack.c.h.b16 %v1902
    %v2143 = vunpack.c.l.b16 %v1903
    %v2144 = vunpack.c.h.b16 %v1903
    %v2145 = vpack.c.b16 %v1987, %v1985
    %v2146 = vpack.c.b16 %v1988, %v1986
    %v2147 = vpack.c.b16 %v1991, %v1989
    %v2148 = vpack.c.b16 %v1992, %v1990
    %v2149 = vpack.c.b16 %v1995, %v1993
    %v2150 = vpack.c.b16 %v1996, %v1994
    %v2151 = vpack.c.b16 %v1999, %v1997
    %v2152 = vpack.c.b16 %v2000, %v1998
    %v2153 = vpack.c.b16 %v2003, %v2001
    %v2154 = vpack.c.b16 %v2004, %v2002
    %v2155 = vpack.c.b16 %v2007, %v2005
    %v2156 = vpack.c.b16 %v2008, %v2006
    %v2157 = vpack.c.b16 %v2011, %v2009
    %v2158 = vpack.c.b16 %v2012, %v2010
    %v2159 = vpack.c.b16 %v2015, %v2013
    %v2160 = vpack.c.b16 %v2016, %v2014
    %v2161 = vpack.c.b16 %v2019, %v2017
    %v2162 = vpack.c.b16 %v2020, %v2018
    %v2163 = vpack.c.b16 %v2023, %v2021
    %v2164 = vpack.c.b16 %v2024, %v2022
    %v2165 = vpack.c.b16 %v2027, %v2025
    %v2166 = vpack.c.b16 %v2028, %v2026
    %v2167 = vpack.c.b16 %v2031, %v2029
    %v2168 = vpack.c.b16 %v2032, %v2030
    %v2169 = vpack.c.b16 %v2035, %v2033
    %v2170 = vpack.c.b16 %v2036, %v2034
    %v2171 = vpack.c.b16 %v2039, %v2037
    %v2172 = vpack.c.b16 %v2040, %v2038
    %v2173 = vpack.c.b16 %v2043, %v2041
    %v2174 = vpack.c.b16 %v2044, %v2042
    %v2175 = vpack.c.b16 %v2047, %v2045
    %v2176 = vpack.c.b16 %v2048, %v2046
    %v2177 = vpack.c.b16 %v2051, %v2049
    %v2178 = vpack.c.b16 %v2052, %v2050
    %v2179 = vpack.c.b16 %v2055, %v2053
    %v2180 = vpack.c.b16 %v2056, %v2054
    %v2181 = vpack.c.b16 %v2059, %v2057
    %v2182 = vpack.c.b16 %v2060, %v2058
    %v2183 = vpack.c.b16 %v2063, %v2061
    %v2184 = vpack.c.b16 %v2064, %v2062
    %v2185 = vpack.c.b16 %v2067, %v2065
    %v2186 = vpack.c.b16 %v2068, %v2066
    %v2187 = vpack.c.b16 %v2071, %v2069
    %v2188 = vpack.c.b16 %v2072, %v2070
    %v2189 = vpack.c.b16 %v2075, %v2073
    %v2190 = vpack.c.b16 %v2076, %v2074
    %v2191 = vpack.c.b16 %v2079, %v2077
    %v2192 = vpack.c.b16 %v2080, %v2078
    %v2193 = vpack.c.b16 %v2083, %v2081
    %v2194 = vpack.c.b16 %v2084, %v2082
    %v2195 = vpack.c.b16 %v2087, %v2085
    %v2196 = vpack.c.b16 %v2088, %v2086
    %v2197 = vpack.c.b16 %v2091, %v2089
    %v2198 = vpack.c.b16 %v2092, %v2090
    %v2199 = vpack.c.b16 %v2095, %v2093
    %v2200 = vpack.c.b16 %v2096, %v2094
    %v2201 = vpack.c.b16 %v2099, %v2097
    %v2202 = vpack.c.b16 %v2100, %v2098
    %v2203 = vpack.c.b16 %v2103, %v2101
    %v2204 = vpack.c.b16 %v2104, %v2102
    %v2205 = vpack.c.b16 %v2107, %v2105
    %v2206 = vpack.c.b16 %v2108, %v2106
    %v2207 = vpack.c.b16 %v2111, %v2109
    %v2208 = vpack.c.b16 %v2112, %v2110
    %v2209 = vpack.c.b16 %v2115, %v2113
    %v2210 = vpack.c.b16 %v2116, %v2114
    %v2211 = vpack.c.b16 %v2119, %v2117
    %v2212 = vpack.c.b16 %v2120, %v2118
    %v2213 = vpack.c.b16 %v2123, %v2121
    %v2214 = vpack.c.b16 %v2124, %v2122
    %v2215 = vpack.c.b16 %v2127, %v2125
    %v2216 = vpack.c.b16 %v2128, %v2126
    %v2217 = vpack.c.b16 %v2131, %v2129
    %v2218 = vpack.c.b16 %v2132, %v2130
    %v2219 = vpack.c.b16 %v2135, %v2133
    %v2220 = vpack.c.b16 %v2136, %v2134
    %v2221 = vpack.c.b16 %v2139, %v2137
    %v2222 = vpack.c.b16 %v2140, %v2138
    %v2223 = vpack.c.b16 %v2143, %v2141
    %v2224 = vpack.c.b16 %v2144, %v2142
    %2305 = vmatprep.subr.bf16.mxu0 %v2146
    %2306 = vmatpush1.bf16.msra.mxu0 %v2145
    %2307 = vmatprep.subr.bf16.mxu0 %v2148
    %2308 = vmatpush1.bf16.msra.mxu0 %v2147
    %2309 = vmatprep.subr.bf16.mxu0 %v2150
    %2310 = vmatpush1.bf16.msra.mxu0 %v2149
    %2311 = vmatprep.subr.bf16.mxu0 %v2152
    %2312 = vmatpush1.bf16.msra.mxu0 %v2151
    %2313 = vmatprep.subr.bf16.mxu0 %v2154
    %2314 = vmatpush1.bf16.msra.mxu0 %v2153
    %2315 = vmatprep.subr.bf16.mxu0 %v2156
    %2316 = vmatpush1.bf16.msra.mxu0 %v2155
    %2317 = vmatprep.subr.bf16.mxu0 %v2158
    %2318 = vmatpush1.bf16.msra.mxu0 %v2157
    %2319 = vmatprep.subr.bf16.mxu0 %v2160
    %2320 = vmatpush1.bf16.msra.mxu0 %v2159
    %2321 = vmatprep.subr.bf16.mxu0 %v2162
    %2322 = vmatpush1.bf16.msra.mxu0 %v2161
    %2323 = vmatprep.subr.bf16.mxu0 %v2164
    %2324 = vmatpush1.bf16.msra.mxu0 %v2163
    %2325 = vmatprep.subr.bf16.mxu0 %v2166
    %2326 = vmatpush1.bf16.msra.mxu0 %v2165
    %2327 = vmatprep.subr.bf16.mxu0 %v2168
    %2328 = vmatpush1.bf16.msra.mxu0 %v2167
    %2329 = vmatprep.subr.bf16.mxu0 %v2170
    %2330 = vmatpush1.bf16.msra.mxu0 %v2169
    %2331 = vmatprep.subr.bf16.mxu0 %v2172
    %2332 = vmatpush1.bf16.msra.mxu0 %v2171
    %2333 = vmatprep.subr.bf16.mxu0 %v2174
    %2334 = vmatpush1.bf16.msra.mxu0 %v2173
    %2335 = vmatprep.subr.bf16.mxu0 %v2176
    %2336 = vmatpush1.bf16.msra.mxu0 %v2175
    %2337 = vmatprep.mubr.bf16.mxu0 %v1754
    %2338 = vmatmul.mubr.bf16.gmra.mrb[0].mxu0 %v1683
    %v2339 = vpop.f32.mrb[0].mxu0
    %v2340 = vadd.f32 0.0, %v2339
    %v2341 = vpop.f32.mrb[0].mxu0
    %v2342 = vadd.f32 0.0, %v2341
    %v2343 = vpop.f32.mrb[0].mxu0
    %v2344 = vadd.f32 0.0, %v2343
    %v2345 = vpop.f32.mrb[0].mxu0
    %v2346 = vadd.f32 0.0, %v2345
    %2347 = vmatprep.mubr.bf16.mxu0 %v1755
    %2348 = vmatmul.mubr.bf16.gmra.mrb[0].mxu0 %v1684
    %v2349 = vpop.f32.mrb[0].mxu0
    %v2350 = vadd.f32 0.0, %v2349
    %v2351 = vpop.f32.mrb[0].mxu0
    %v2352 = vadd.f32 0.0, %v2351
    %v2353 = vpop.f32.mrb[0].mxu0
    %v2354 = vadd.f32 0.0, %v2353
    %v2355 = vpop.f32.mrb[0].mxu0
    %v2356 = vadd.f32 0.0, %v2355
    %2357 = vmatprep.mubr.bf16.mxu0 %v1756
    %2358 = vmatmul.mubr.bf16.gmra.mrb[0].mxu0 %v1685
    %v2359 = vpop.f32.mrb[0].mxu0
    %v2360 = vadd.f32 0.0, %v2359
    %v2361 = vpop.f32.mrb[0].mxu0
    %v2362 = vadd.f32 0.0, %v2361
    %v2363 = vpop.f32.mrb[0].mxu0
    %v2364 = vadd.f32 0.0, %v2363
    %v2365 = vpop.f32.mrb[0].mxu0
    %v2366 = vadd.f32 0.0, %v2365
    %2367 = vmatprep.mubr.bf16.mxu0 %v1757
    %2368 = vmatmul.mubr.bf16.gmra.mrb[0].mxu0 %v1686
    %v2369 = vpop.f32.mrb[0].mxu0
    %v2370 = vadd.f32 0.0, %v2369
    %v2371 = vpop.f32.mrb[0].mxu0
    %v2372 = vadd.f32 0.0, %v2371
    %v2373 = vpop.f32.mrb[0].mxu0
    %v2374 = vadd.f32 0.0, %v2373
    %v2375 = vpop.f32.mrb[0].mxu0
    %v2376 = vadd.f32 0.0, %v2375
    %2377 = vdwg.mxu0
    %2378 = vmatprep.subr.bf16.mxu0 %v2178
    %2379 = vmatpush1.bf16.msra.mxu0 %v2177
    %2380 = vmatprep.subr.bf16.mxu0 %v2180
    %2381 = vmatpush1.bf16.msra.mxu0 %v2179
    %2382 = vmatprep.subr.bf16.mxu0 %v2182
    %2383 = vmatpush1.bf16.msra.mxu0 %v2181
    %2384 = vmatprep.subr.bf16.mxu0 %v2184
    %2385 = vmatpush1.bf16.msra.mxu0 %v2183
    %2386 = vmatprep.subr.bf16.mxu0 %v2186
    %2387 = vmatpush1.bf16.msra.mxu0 %v2185
    %2388 = vmatprep.subr.bf16.mxu0 %v2188
    %2389 = vmatpush1.bf16.msra.mxu0 %v2187
    %2390 = vmatprep.subr.bf16.mxu0 %v2190
    %2391 = vmatpush1.bf16.msra.mxu0 %v2189
    %2392 = vmatprep.subr.bf16.mxu0 %v2192
    %2393 = vmatpush1.bf16.msra.mxu0 %v2191
    %2394 = vmatprep.subr.bf16.mxu0 %v2194
    %2395 = vmatpush1.bf16.msra.mxu0 %v2193
    %2396 = vmatprep.subr.bf16.mxu0 %v2196
    %2397 = vmatpush1.bf16.msra.mxu0 %v2195
    %2398 = vmatprep.subr.bf16.mxu0 %v2198
    %2399 = vmatpush1.bf16.msra.mxu0 %v2197
    %2400 = vmatprep.subr.bf16.mxu0 %v2200
    %2401 = vmatpush1.bf16.msra.mxu0 %v2199
    %2402 = vmatprep.subr.bf16.mxu0 %v2202
    %2403 = vmatpush1.bf16.msra.mxu0 %v2201
    %2404 = vmatprep.subr.bf16.mxu0 %v2204
    %2405 = vmatpush1.bf16.msra.mxu0 %v2203
    %2406 = vmatprep.subr.bf16.mxu0 %v2206
    %2407 = vmatpush1.bf16.msra.mxu0 %v2205
    %2408 = vmatprep.subr.bf16.mxu0 %v2208
    %2409 = vmatpush1.bf16.msra.mxu0 %v2207
    %2410 = vmatprep.mubr.bf16.mxu0 %v1791
    %2411 = vmatmul.mubr.bf16.gmra.mrb[0].mxu0 %v1720
    %v2412 = vpop.f32.mrb[0].mxu0
    %v2413 = vadd.f32 %v2340, %v2412
    %v2414 = vpop.f32.mrb[0].mxu0
    %v2415 = vadd.f32 %v2342, %v2414
    %v2416 = vpop.f32.mrb[0].mxu0
    %v2417 = vadd.f32 %v2344, %v2416
    %v2418 = vpop.f32.mrb[0].mxu0
    %v2419 = vadd.f32 %v2346, %v2418
    %2420 = vmatprep.mubr.bf16.mxu0 %v1792
    %2421 = vmatmul.mubr.bf16.gmra.mrb[0].mxu0 %v1721
    %v2422 = vpop.f32.mrb[0].mxu0
    %v2423 = vadd.f32 %v2350, %v2422
    %v2424 = vpop.f32.mrb[0].mxu0
    %v2425 = vadd.f32 %v2352, %v2424
    %v2426 = vpop.f32.mrb[0].mxu0
    %v2427 = vadd.f32 %v2354, %v2426
    %v2428 = vpop.f32.mrb[0].mxu0
    %v2429 = vadd.f32 %v2356, %v2428
    %2430 = vmatprep.mubr.bf16.mxu0 %v1793
    %2431 = vmatmul.mubr.bf16.gmra.mrb[0].mxu0 %v1722
    %v2432 = vpop.f32.mrb[0].mxu0
    %v2433 = vadd.f32 %v2360, %v2432
    %v2434 = vpop.f32.mrb[0].mxu0
    %v2435 = vadd.f32 %v2362, %v2434
    %v2436 = vpop.f32.mrb[0].mxu0
    %v2437 = vadd.f32 %v2364, %v2436
    %v2438 = vpop.f32.mrb[0].mxu0
    %v2439 = vadd.f32 %v2366, %v2438
    %2440 = vmatprep.mubr.bf16.mxu0 %v1794
    %2441 = vmatmul.mubr.bf16.gmra.mrb[0].mxu0 %v1723
    %v2442 = vpop.f32.mrb[0].mxu0
    %v2443 = vadd.f32 %v2370, %v2442
    %v2444 = vpop.f32.mrb[0].mxu0
    %v2445 = vadd.f32 %v2372, %v2444
    %v2446 = vpop.f32.mrb[0].mxu0
    %v2447 = vadd.f32 %v2374, %v2446
    %v2448 = vpop.f32.mrb[0].mxu0
    %v2449 = vadd.f32 %v2376, %v2448
    %2450 = vdwg.mxu0
    %2451 = vmatprep.subr.bf16.mxu0 %v2210
    %2452 = vmatpush1.bf16.msra.mxu0 %v2209
    %2453 = vmatprep.subr.bf16.mxu0 %v2212
    %2454 = vmatpush1.bf16.msra.mxu0 %v2211
    %2455 = vmatprep.subr.bf16.mxu0 %v2214
    %2456 = vmatpush1.bf16.msra.mxu0 %v2213
    %2457 = vmatprep.subr.bf16.mxu0 %v2216
    %2458 = vmatpush1.bf16.msra.mxu0 %v2215
    %2459 = vmatprep.subr.bf16.mxu0 %v2218
    %2460 = vmatpush1.bf16.msra.mxu0 %v2217
    %2461 = vmatprep.subr.bf16.mxu0 %v2220
    %2462 = vmatpush1.bf16.msra.mxu0 %v2219
    %2463 = vmatprep.subr.bf16.mxu0 %v2222
    %2464 = vmatpush1.bf16.msra.mxu0 %v2221
    %2465 = vmatprep.subr.bf16.mxu0 %v2224
    %2466 = vmatpush1.bf16.msra.mxu0 %v2223
    %2467 = vmatprep.subr.bf16.mxu0 0
    %2468 = vmatpush1.bf16.msra.mxu0 0
    %2469 = vmatprep.subr.bf16.mxu0 0
    %2470 = vmatpush1.bf16.msra.mxu0 0
    %2471 = vmatprep.subr.bf16.mxu0 0
    %2472 = vmatpush1.bf16.msra.mxu0 0
    %2473 = vmatprep.subr.bf16.mxu0 0
    %2474 = vmatpush1.bf16.msra.mxu0 0
    %2475 = vmatprep.subr.bf16.mxu0 0
    %2476 = vmatpush1.bf16.msra.mxu0 0
    %2477 = vmatprep.subr.bf16.mxu0 0
    %2478 = vmatpush1.bf16.msra.mxu0 0
    %2479 = vmatprep.subr.bf16.mxu0 0
    %2480 = vmatpush1.bf16.msra.mxu0 0
    %2481 = vmatprep.subr.bf16.mxu0 0
    %2482 = vmatpush1.bf16.msra.mxu0 0
    %2483 = vmatprep.mubr.bf16.mxu0 0
    %2484 = vmatmul.mubr.bf16.gmra.mrb[0].mxu0 %v1750
    %v2485 = vpop.f32.mrb[0].mxu0
    %v2486 = vadd.f32 %v2413, %v2485
    %v2487 = vpop.f32.mrb[0].mxu0
    %v2488 = vadd.f32 %v2415, %v2487
    %v2489 = vpop.f32.mrb[0].mxu0
    %v2490 = vadd.f32 %v2417, %v2489
    %v2491 = vpop.f32.mrb[0].mxu0
    %v2492 = vadd.f32 %v2419, %v2491
    %2493 = vmatprep.mubr.bf16.mxu0 0
    %2494 = vmatmul.mubr.bf16.gmra.mrb[0].mxu0 %v1751
    %v2495 = vpop.f32.mrb[0].mxu0
    %v2496 = vadd.f32 %v2423, %v2495
    %v2497 = vpop.f32.mrb[0].mxu0
    %v2498 = vadd.f32 %v2425, %v2497
    %v2499 = vpop.f32.mrb[0].mxu0
    %v2500 = vadd.f32 %v2427, %v2499
    %v2501 = vpop.f32.mrb[0].mxu0
    %v2502 = vadd.f32 %v2429, %v2501
    %2503 = vmatprep.mubr.bf16.mxu0 0
    %2504 = vmatmul.mubr.bf16.gmra.mrb[0].mxu0 %v1752
    %v2505 = vpop.f32.mrb[0].mxu0
    %v2506 = vadd.f32 %v2433, %v2505
    %v2507 = vpop.f32.mrb[0].mxu0
    %v2508 = vadd.f32 %v2435, %v2507
    %v2509 = vpop.f32.mrb[0].mxu0
    %v2510 = vadd.f32 %v2437, %v2509
    %v2511 = vpop.f32.mrb[0].mxu0
    %v2512 = vadd.f32 %v2439, %v2511
    %2513 = vmatprep.mubr.bf16.mxu0 0
    %2514 = vmatmul.mubr.bf16.gmra.mrb[0].mxu0 %v1753
    %v2515 = vpop.f32.mrb[0].mxu0
    %v2516 = vadd.f32 %v2443, %v2515
    %v2517 = vpop.f32.mrb[0].mxu0
    %v2518 = vadd.f32 %v2445, %v2517
    %v2519 = vpop.f32.mrb[0].mxu0
    %v2520 = vadd.f32 %v2447, %v2519
    %v2521 = vpop.f32.mrb[0].mxu0
    %v2522 = vadd.f32 %v2449, %v2521
    %2523 = vdwg.mxu0
    %v2524 = vmax.f32 %v2486, %v2488
    %v2525 = vmax.f32 %v2490, %v2492
    %v2526 = vmax.f32 %v2496, %v2498
    %v2527 = vmax.f32 %v2500, %v2502
    %v2528 = vmax.f32 %v2506, %v2508
    %v2529 = vmax.f32 %v2510, %v2512
    %v2530 = vmax.f32 %v2516, %v2518
    %v2531 = vmax.f32 %v2520, %v2522
    %2532 = vmatprep.subr.bf16.mxu0 %v2146
    %2533 = vmatpush1.bf16.msra.mxu0 %v2145
    %2534 = vmatprep.subr.bf16.mxu0 %v2148
    %2535 = vmatpush1.bf16.msra.mxu0 %v2147
    %2536 = vmatprep.subr.bf16.mxu0 %v2150
    %2537 = vmatpush1.bf16.msra.mxu0 %v2149
    %2538 = vmatprep.subr.bf16.mxu0 %v2152
    %2539 = vmatpush1.bf16.msra.mxu0 %v2151
    %2540 = vmatprep.subr.bf16.mxu0 %v2154
    %2541 = vmatpush1.bf16.msra.mxu0 %v2153
    %2542 = vmatprep.subr.bf16.mxu0 %v2156
    %2543 = vmatpush1.bf16.msra.mxu0 %v2155
    %2544 = vmatprep.subr.bf16.mxu0 %v2158
    %2545 = vmatpush1.bf16.msra.mxu0 %v2157
    %2546 = vmatprep.subr.bf16.mxu0 %v2160
    %2547 = vmatpush1.bf16.msra.mxu0 %v2159
    %2548 = vmatprep.subr.bf16.mxu0 %v2162
    %2549 = vmatpush1.bf16.msra.mxu0 %v2161
    %2550 = vmatprep.subr.bf16.mxu0 %v2164
    %2551 = vmatpush1.bf16.msra.mxu0 %v2163
    %2552 = vmatprep.subr.bf16.mxu0 %v2166
    %2553 = vmatpush1.bf16.msra.mxu0 %v2165
    %2554 = vmatprep.subr.bf16.mxu0 %v2168
    %2555 = vmatpush1.bf16.msra.mxu0 %v2167
    %2556 = vmatprep.subr.bf16.mxu0 %v2170
    %2557 = vmatpush1.bf16.msra.mxu0 %v2169
    %2558 = vmatprep.subr.bf16.mxu0 %v2172
    %2559 = vmatpush1.bf16.msra.mxu0 %v2171
    %2560 = vmatprep.subr.bf16.mxu0 %v2174
    %2561 = vmatpush1.bf16.msra.mxu0 %v2173
    %2562 = vmatprep.subr.bf16.mxu0 %v2176
    %2563 = vmatpush1.bf16.msra.mxu0 %v2175
    %2564 = vmatprep.mubr.bf16.mxu0 %v1720
    %2565 = vmatmul.mubr.bf16.gmra.mrb[0].mxu0 %v1754
    %v2566 = vpop.f32.mrb[0].mxu0
    %v2567 = vadd.f32 0.0, %v2566
    %v2568 = vpop.f32.mrb[0].mxu0
    %v2569 = vadd.f32 0.0, %v2568
    %v2570 = vpop.f32.mrb[0].mxu0
    %v2571 = vadd.f32 0.0, %v2570
    %v2572 = vpop.f32.mrb[0].mxu0
    %v2573 = vadd.f32 0.0, %v2572
    %2574 = vmatprep.mubr.bf16.mxu0 %v1721
    %2575 = vmatmul.mubr.bf16.gmra.mrb[0].mxu0 %v1755
    %v2576 = vpop.f32.mrb[0].mxu0
    %v2577 = vadd.f32 0.0, %v2576
    %v2578 = vpop.f32.mrb[0].mxu0
    %v2579 = vadd.f32 0.0, %v2578
    %v2580 = vpop.f32.mrb[0].mxu0
    %v2581 = vadd.f32 0.0, %v2580
    %v2582 = vpop.f32.mrb[0].mxu0
    %v2583 = vadd.f32 0.0, %v2582
    %2584 = vmatprep.mubr.bf16.mxu0 %v1722
    %2585 = vmatmul.mubr.bf16.gmra.mrb[0].mxu0 %v1756
    %v2586 = vpop.f32.mrb[0].mxu0
    %v2587 = vadd.f32 0.0, %v2586
    %v2588 = vpop.f32.mrb[0].mxu0
    %v2589 = vadd.f32 0.0, %v2588
    %v2590 = vpop.f32.mrb[0].mxu0
    %v2591 = vadd.f32 0.0, %v2590
    %v2592 = vpop.f32.mrb[0].mxu0
    %v2593 = vadd.f32 0.0, %v2592
    %2594 = vmatprep.mubr.bf16.mxu0 %v1723
    %2595 = vmatmul.mubr.bf16.gmra.mrb[0].mxu0 %v1757
    %v2596 = vpop.f32.mrb[0].mxu0
    %v2597 = vadd.f32 0.0, %v2596
    %v2598 = vpop.f32.mrb[0].mxu0
    %v2599 = vadd.f32 0.0, %v2598
    %v2600 = vpop.f32.mrb[0].mxu0
    %v2601 = vadd.f32 0.0, %v2600
    %v2602 = vpop.f32.mrb[0].mxu0
    %v2603 = vadd.f32 0.0, %v2602
    %2604 = vdwg.mxu0
    %2605 = vmatprep.subr.bf16.mxu0 %v2178
    %2606 = vmatpush1.bf16.msra.mxu0 %v2177
    %2607 = vmatprep.subr.bf16.mxu0 %v2180
    %2608 = vmatpush1.bf16.msra.mxu0 %v2179
    %2609 = vmatprep.subr.bf16.mxu0 %v2182
    %2610 = vmatpush1.bf16.msra.mxu0 %v2181
    %2611 = vmatprep.subr.bf16.mxu0 %v2184
    %2612 = vmatpush1.bf16.msra.mxu0 %v2183
    %2613 = vmatprep.subr.bf16.mxu0 %v2186
    %2614 = vmatpush1.bf16.msra.mxu0 %v2185
    %2615 = vmatprep.subr.bf16.mxu0 %v2188
    %2616 = vmatpush1.bf16.msra.mxu0 %v2187
    %2617 = vmatprep.subr.bf16.mxu0 %v2190
    %2618 = vmatpush1.bf16.msra.mxu0 %v2189
    %2619 = vmatprep.subr.bf16.mxu0 %v2192
    %2620 = vmatpush1.bf16.msra.mxu0 %v2191
    %2621 = vmatprep.subr.bf16.mxu0 %v2194
    %2622 = vmatpush1.bf16.msra.mxu0 %v2193
    %2623 = vmatprep.subr.bf16.mxu0 %v2196
    %2624 = vmatpush1.bf16.msra.mxu0 %v2195
    %2625 = vmatprep.subr.bf16.mxu0 %v2198
    %2626 = vmatpush1.bf16.msra.mxu0 %v2197
    %2627 = vmatprep.subr.bf16.mxu0 %v2200
    %2628 = vmatpush1.bf16.msra.mxu0 %v2199
    %2629 = vmatprep.subr.bf16.mxu0 %v2202
    %2630 = vmatpush1.bf16.msra.mxu0 %v2201
    %2631 = vmatprep.subr.bf16.mxu0 %v2204
    %2632 = vmatpush1.bf16.msra.mxu0 %v2203
    %2633 = vmatprep.subr.bf16.mxu0 %v2206
    %2634 = vmatpush1.bf16.msra.mxu0 %v2205
    %2635 = vmatprep.subr.bf16.mxu0 %v2208
    %2636 = vmatpush1.bf16.msra.mxu0 %v2207
    %2637 = vmatprep.mubr.bf16.mxu0 %v1750
    %2638 = vmatmul.mubr.bf16.gmra.mrb[0].mxu0 %v1791
    %v2639 = vpop.f32.mrb[0].mxu0
    %v2640 = vadd.f32 %v2567, %v2639
    %v2641 = vpop.f32.mrb[0].mxu0
    %v2642 = vadd.f32 %v2569, %v2641
    %v2643 = vpop.f32.mrb[0].mxu0
    %v2644 = vadd.f32 %v2571, %v2643
    %v2645 = vpop.f32.mrb[0].mxu0
    %v2646 = vadd.f32 %v2573, %v2645
    %2647 = vmatprep.mubr.bf16.mxu0 %v1751
    %2648 = vmatmul.mubr.bf16.gmra.mrb[0].mxu0 %v1792
    %v2649 = vpop.f32.mrb[0].mxu0
    %v2650 = vadd.f32 %v2577, %v2649
    %v2651 = vpop.f32.mrb[0].mxu0
    %v2652 = vadd.f32 %v2579, %v2651
    %v2653 = vpop.f32.mrb[0].mxu0
    %v2654 = vadd.f32 %v2581, %v2653
    %v2655 = vpop.f32.mrb[0].mxu0
    %v2656 = vadd.f32 %v2583, %v2655
    %2657 = vmatprep.mubr.bf16.mxu0 %v1752
    %2658 = vmatmul.mubr.bf16.gmra.mrb[0].mxu0 %v1793
    %v2659 = vpop.f32.mrb[0].mxu0
    %v2660 = vadd.f32 %v2587, %v2659
    %v2661 = vpop.f32.mrb[0].mxu0
    %v2662 = vadd.f32 %v2589, %v2661
    %v2663 = vpop.f32.mrb[0].mxu0
    %v2664 = vadd.f32 %v2591, %v2663
    %v2665 = vpop.f32.mrb[0].mxu0
    %v2666 = vadd.f32 %v2593, %v2665
    %2667 = vmatprep.mubr.bf16.mxu0 %v1753
    %2668 = vmatmul.mubr.bf16.gmra.mrb[0].mxu0 %v1794
    %v2669 = vpop.f32.mrb[0].mxu0
    %v2670 = vadd.f32 %v2597, %v2669
    %v2671 = vpop.f32.mrb[0].mxu0
    %v2672 = vadd.f32 %v2599, %v2671
    %v2673 = vpop.f32.mrb[0].mxu0
    %v2674 = vadd.f32 %v2601, %v2673
    %v2675 = vpop.f32.mrb[0].mxu0
    %v2676 = vadd.f32 %v2603, %v2675
    %2677 = vdwg.mxu0
    %2678 = vmatprep.subr.bf16.mxu0 %v2210
    %2679 = vmatpush1.bf16.msra.mxu0 %v2209
    %2680 = vmatprep.subr.bf16.mxu0 %v2212
    %2681 = vmatpush1.bf16.msra.mxu0 %v2211
    %2682 = vmatprep.subr.bf16.mxu0 %v2214
    %2683 = vmatpush1.bf16.msra.mxu0 %v2213
    %2684 = vmatprep.subr.bf16.mxu0 %v2216
    %2685 = vmatpush1.bf16.msra.mxu0 %v2215
    %2686 = vmatprep.subr.bf16.mxu0 %v2218
    %2687 = vmatpush1.bf16.msra.mxu0 %v2217
    %2688 = vmatprep.subr.bf16.mxu0 %v2220
    %2689 = vmatpush1.bf16.msra.mxu0 %v2219
    %2690 = vmatprep.subr.bf16.mxu0 %v2222
    %2691 = vmatpush1.bf16.msra.mxu0 %v2221
    %2692 = vmatprep.subr.bf16.mxu0 %v2224
    %2693 = vmatpush1.bf16.msra.mxu0 %v2223
    %2694 = vmatprep.subr.bf16.mxu0 0
    %2695 = vmatpush1.bf16.msra.mxu0 0
    %2696 = vmatprep.subr.bf16.mxu0 0
    %2697 = vmatpush1.bf16.msra.mxu0 0
    %2698 = vmatprep.subr.bf16.mxu0 0
    %2699 = vmatpush1.bf16.msra.mxu0 0
    %2700 = vmatprep.subr.bf16.mxu0 0
    %2701 = vmatpush1.bf16.msra.mxu0 0
    %2702 = vmatprep.subr.bf16.mxu0 0
    %2703 = vmatpush1.bf16.msra.mxu0 0
    %2704 = vmatprep.subr.bf16.mxu0 0
    %2705 = vmatpush1.bf16.msra.mxu0 0
    %2706 = vmatprep.subr.bf16.mxu0 0
    %2707 = vmatpush1.bf16.msra.mxu0 0
    %2708 = vmatprep.subr.bf16.mxu0 0
    %2709 = vmatpush1.bf16.msra.mxu0 0
    %2710 = vmatprep.mubr.bf16.mxu0 0
    %2711 = vmatmul.mubr.bf16.gmra.mrb[0].mxu0 %v1820
    %v2712 = vpop.f32.mrb[0].mxu0
    %v2713 = vadd.f32 %v2640, %v2712
    %v2714 = vpop.f32.mrb[0].mxu0
    %v2715 = vadd.f32 %v2642, %v2714
    %v2716 = vpop.f32.mrb[0].mxu0
    %v2717 = vadd.f32 %v2644, %v2716
    %v2718 = vpop.f32.mrb[0].mxu0
    %v2719 = vadd.f32 %v2646, %v2718
    %2720 = vmatprep.mubr.bf16.mxu0 0
    %2721 = vmatmul.mubr.bf16.gmra.mrb[0].mxu0 %v1821
    %v2722 = vpop.f32.mrb[0].mxu0
    %v2723 = vadd.f32 %v2650, %v2722
    %v2724 = vpop.f32.mrb[0].mxu0
    %v2725 = vadd.f32 %v2652, %v2724
    %v2726 = vpop.f32.mrb[0].mxu0
    %v2727 = vadd.f32 %v2654, %v2726
    %v2728 = vpop.f32.mrb[0].mxu0
    %v2729 = vadd.f32 %v2656, %v2728
    %2730 = vmatprep.mubr.bf16.mxu0 0
    %2731 = vmatmul.mubr.bf16.gmra.mrb[0].mxu0 %v1822
    %v2732 = vpop.f32.mrb[0].mxu0
    %v2733 = vadd.f32 %v2660, %v2732
    %v2734 = vpop.f32.mrb[0].mxu0
    %v2735 = vadd.f32 %v2662, %v2734
    %v2736 = vpop.f32.mrb[0].mxu0
    %v2737 = vadd.f32 %v2664, %v2736
    %v2738 = vpop.f32.mrb[0].mxu0
    %v2739 = vadd.f32 %v2666, %v2738
    %2740 = vmatprep.mubr.bf16.mxu0 0
    %2741 = vmatmul.mubr.bf16.gmra.mrb[0].mxu0 %v1823
    %v2742 = vpop.f32.mrb[0].mxu0
    %v2743 = vadd.f32 %v2670, %v2742
    %v2744 = vpop.f32.mrb[0].mxu0
    %v2745 = vadd.f32 %v2672, %v2744
    %v2746 = vpop.f32.mrb[0].mxu0
    %v2747 = vadd.f32 %v2674, %v2746
    %v2748 = vpop.f32.mrb[0].mxu0
    %v2749 = vadd.f32 %v2676, %v2748
    %2750 = vdwg.mxu0
    %v2751 = vmax.f32 %v2713, %v2715
    %v2752 = vmax.f32 %v2717, %v2719
    %v2753 = vmax.f32 %v2723, %v2725
    %v2754 = vmax.f32 %v2727, %v2729
    %v2755 = vmax.f32 %v2733, %v2735
    %v2756 = vmax.f32 %v2737, %v2739
    %v2757 = vmax.f32 %v2743, %v2745
    %v2758 = vmax.f32 %v2747, %v2749
    %v2759 = vmax.f32 %v2524, %v2751
    %v2760 = vmax.f32 %v2525, %v2752
    %v2761 = vmax.f32 %v2526, %v2753
    %v2762 = vmax.f32 %v2527, %v2754
    %v2763 = vmax.f32 %v2528, %v2755
    %v2764 = vmax.f32 %v2529, %v2756
    %v2765 = vmax.f32 %v2530, %v2757
    %v2766 = vmax.f32 %v2531, %v2758
    %v2768 = vlaneseq
    %v2769 = vshrl.u32 %v2768, 7
    %v2770 = vsub.s32 0, %v2769
    %v2771 = vrot.slane %v1904, %v2770
    %v2773 = vadd.f32 %v2759, %v2771
    %v2774 = vadd.f32 %v2760, %v2771
    %v2775 = vadd.f32 %v2761, %v2771
    %v2776 = vadd.f32 %v2762, %v2771
    %v2777 = vadd.f32 %v2763, %v2771
    %v2778 = vadd.f32 %v2764, %v2771
    %v2779 = vadd.f32 %v2765, %v2771
    %v2780 = vadd.f32 %v2766, %v2771
    %v2781 = vmax.f32 %v2773, 0.0
    %v2782 = vmax.f32 %v2774, 0.0
    %v2783 = vmax.f32 %v2775, 0.0
    %v2784 = vmax.f32 %v2776, 0.0
    %v2785 = vmax.f32 %v2777, 0.0
    %v2786 = vmax.f32 %v2778, 0.0
    %v2787 = vmax.f32 %v2779, 0.0
    %v2788 = vmax.f32 %v2780, 0.0
    %v2797 = vrot.slane %v2782, 7
    %vm2798 = vcmask 1041409
    %v2799 = vsel %vm2798, %v2797, %v2781
    %v2800 = vrot.slane %v2783, 6
    %vm2801 = vcmask 1042434
    %v2802 = vsel %vm2801, %v2800, %v2799
    %v2803 = vrot.slane %v2784, 5
    %vm2804 = vcmask 1043459
    %v2805 = vsel %vm2804, %v2803, %v2802
    %v2806 = vrot.slane %v2785, 4
    %vm2807 = vcmask 1044484
    %v2808 = vsel %vm2807, %v2806, %v2805
    %v2809 = vrot.slane %v2786, 3
    %vm2810 = vcmask 1045509
    %v2811 = vsel %vm2810, %v2809, %v2808
    %v2812 = vrot.slane %v2787, 2
    %vm2813 = vcmask 1046534
    %v2814 = vsel %vm2813, %v2812, %v2811
    %v2815 = vrot.slane %v2788, 1
    %vm2816 = vcmask 1047559
    %v2817 = vsel %vm2816, %v2815, %v2814
    %v2819 = vrot.slane %v2781, 1
    %v2820 = vsel %vm2798, %v2782, %v2819
    %v2821 = vrot.slane %v2783, 7
    %v2822 = vsel %vm2801, %v2821, %v2820
    %v2823 = vrot.slane %v2784, 6
    %v2824 = vsel %vm2804, %v2823, %v2822
    %v2825 = vrot.slane %v2785, 5
    %v2826 = vsel %vm2807, %v2825, %v2824
    %v2827 = vrot.slane %v2786, 4
    %v2828 = vsel %vm2810, %v2827, %v2826
    %v2829 = vrot.slane %v2787, 3
    %v2830 = vsel %vm2813, %v2829, %v2828
    %v2831 = vrot.slane %v2788, 2
    %v2832 = vsel %vm2816, %v2831, %v2830
    %v2834 = vrot.slane %v2781, 2
    %v2835 = vrot.slane %v2782, 1
    %v2836 = vsel %vm2798, %v2835, %v2834
    %v2837 = vsel %vm2801, %v2783, %v2836
    %v2838 = vrot.slane %v2784, 7
    %v2839 = vsel %vm2804, %v2838, %v2837
    %v2840 = vrot.slane %v2785, 6
    %v2841 = vsel %vm2807, %v2840, %v2839
    %v2842 = vrot.slane %v2786, 5
    %v2843 = vsel %vm2810, %v2842, %v2841
    %v2844 = vrot.slane %v2787, 4
    %v2845 = vsel %vm2813, %v2844, %v2843
    %v2846 = vrot.slane %v2788, 3
    %v2847 = vsel %vm2816, %v2846, %v2845
    %v2849 = vrot.slane %v2781, 3
    %v2850 = vrot.slane %v2782, 2
    %v2851 = vsel %vm2798, %v2850, %v2849
    %v2852 = vrot.slane %v2783, 1
    %v2853 = vsel %vm2801, %v2852, %v2851
    %v2854 = vsel %vm2804, %v2784, %v2853
    %v2855 = vrot.slane %v2785, 7
    %v2856 = vsel %vm2807, %v2855, %v2854
    %v2857 = vrot.slane %v2786, 6
    %v2858 = vsel %vm2810, %v2857, %v2856
    %v2859 = vrot.slane %v2787, 5
    %v2860 = vsel %vm2813, %v2859, %v2858
    %v2861 = vrot.slane %v2788, 4
    %v2862 = vsel %vm2816, %v2861, %v2860
    %v2864 = vrot.slane %v2781, 4
    %v2865 = vrot.slane %v2782, 3
    %v2866 = vsel %vm2798, %v2865, %v2864
    %v2867 = vrot.slane %v2783, 2
    %v2868 = vsel %vm2801, %v2867, %v2866
    %v2869 = vrot.slane %v2784, 1
    %v2870 = vsel %vm2804, %v2869, %v2868
    %v2871 = vsel %vm2807, %v2785, %v2870
    %v2872 = vrot.slane %v2786, 7
    %v2873 = vsel %vm2810, %v2872, %v2871
    %v2874 = vrot.slane %v2787, 6
    %v2875 = vsel %vm2813, %v2874, %v2873
    %v2876 = vrot.slane %v2788, 5
    %v2877 = vsel %vm2816, %v2876, %v2875
    %v2879 = vpack.c.bf16 %v2817, %v2817
    %v2880 = vpack.c.bf16 %v2832, %v2832
    %v2881 = vpack.c.bf16 %v2847, %v2847
    %v2882 = vpack.c.bf16 %v2862, %v2862
    %v2883 = vpack.c.bf16 %v2877, %v2877
    %v2884 = vld [vmem:[%s5] sm:$0xf]
    %v2885 = vld [vmem:[%s5 + $0x4] sm:$0xf]
    %v2886 = vld [vmem:[%s5 + $0x8] sm:$0xf]
    %v2887 = vld [vmem:[%s5 + $0xc] sm:$0xf]
    %v2888 = vld [vmem:[%s5 + $0x10] sm:$0xf]
    %v2889 = vld [vmem:[%s5 + $0x14] sm:$0xf]
    %v2890 = vld [vmem:[%s5 + $0x18] sm:$0xf]
    %v2891 = vld [vmem:[%s5 + $0x1c] sm:$0xf]
    %v2892 = vld [vmem:[%s5 + $0x20] sm:$0xf]
    %v2893 = vld [vmem:[%s5 + $0x24] sm:$0xf]
    %v2894 = vld [vmem:[%s5 + $0x28] sm:$0xf]
    %v2895 = vld [vmem:[%s5 + $0x2c] sm:$0xf]
    %v2896 = vld [vmem:[%s5 + $0x30] sm:$0xf]
    %v2897 = vld [vmem:[%s5 + $0x34] sm:$0xf]
    %v2898 = vld [vmem:[%s5 + $0x38] sm:$0xf]
    %v2899 = vld [vmem:[%s5 + $0x3c] sm:$0xf]
    %v2900 = vld [vmem:[%s5 + $0x40] sm:$0xf]
    %v2901 = vld [vmem:[%s5 + $0x44] sm:$0xf]
    %v2902 = vld [vmem:[%s5 + $0x48] sm:$0xf]
    %v2903 = vld [vmem:[%s5 + $0x4c] sm:$0xf]
    %v2904 = vld [vmem:[%s5 + $0x50] sm:$0xf]
    %v2905 = vld [vmem:[%s5 + $0x54] sm:$0xf]
    %v2906 = vld [vmem:[%s5 + $0x58] sm:$0xf]
    %v2907 = vld [vmem:[%s5 + $0x5c] sm:$0xf]
    %v2908 = vld [vmem:[%s5 + $0x60] sm:$0xf]
    %v2909 = vld [vmem:[%s5 + $0x64] sm:$0xf]
    %v2910 = vld [vmem:[%s5 + $0x68] sm:$0xf]
    %v2911 = vld [vmem:[%s5 + $0x6c] sm:$0xf]
    %v2912 = vld [vmem:[%s5 + $0x70] sm:$0xf]
    %v2913 = vld [vmem:[%s5 + $0x74] sm:$0xf]
    %v2914 = vld [vmem:[%s5 + $0x78] sm:$0xf]
    %v2915 = vld [vmem:[%s5 + $0x7c] sm:$0xf]
    %v2916 = vld [vmem:[%s5 + $0x80] sm:$0xf]
    %v2917 = vld [vmem:[%s5 + $0x84] sm:$0xf]
    %v2918 = vld [vmem:[%s5 + $0x88] sm:$0xf]
    %v2919 = vld [vmem:[%s5 + $0x8c] sm:$0xf]
    %v2920 = vld [vmem:[%s5 + $0x90] sm:$0xf]
    %v2921 = vld [vmem:[%s5 + $0x94] sm:$0xf]
    %v2922 = vld [vmem:[%s5 + $0x98] sm:$0xf]
    %v2923 = vld [vmem:[%s5 + $0x9c] sm:$0xf]
    %v2924 = vld [vmem:[%s5 + $0xa0] sm:$0xf]
    %v2925 = vld [vmem:[%s5 + $0xa4] sm:$0xf]
    %v2926 = vld [vmem:[%s5 + $0xa8] sm:$0xf]
    %v2927 = vld [vmem:[%s5 + $0xac] sm:$0xf]
    %v2928 = vld [vmem:[%s5 + $0xb0] sm:$0xf]
    %v2929 = vld [vmem:[%s5 + $0xb4] sm:$0xf]
    %v2930 = vld [vmem:[%s5 + $0xb8] sm:$0xf]
    %v2931 = vld [vmem:[%s5 + $0xbc] sm:$0xf]
    %v2932 = vld [vmem:[%s5 + $0xc0] sm:$0xf]
    %v2933 = vld [vmem:[%s5 + $0xc4] sm:$0xf]
    %v2934 = vld [vmem:[%s5 + $0xc8] sm:$0xf]
    %v2935 = vld [vmem:[%s5 + $0xcc] sm:$0xf]
    %v2936 = vld [vmem:[%s5 + $0xd0] sm:$0xf]
    %v2937 = vld [vmem:[%s5 + $0xd4] sm:$0xf]
    %v2938 = vld [vmem:[%s5 + $0xd8] sm:$0xf]
    %v2939 = vld [vmem:[%s5 + $0xdc] sm:$0xf]
    %v2940 = vld [vmem:[%s5 + $0xe0] sm:$0xf]
    %v2941 = vld [vmem:[%s5 + $0xe4] sm:$0xf]
    %v2942 = vld [vmem:[%s5 + $0xe8] sm:$0xf]
    %v2943 = vld [vmem:[%s5 + $0xec] sm:$0xf]
    %v2944 = vld [vmem:[%s5 + $0xf0] sm:$0xf]
    %v2945 = vld [vmem:[%s5 + $0xf4] sm:$0xf]
    %v2946 = vld [vmem:[%s5 + $0xf8] sm:$0xf]
    %v2947 = vld [vmem:[%s5 + $0xfc] sm:$0xf]
    %v2948 = vld [vmem:[%s5 + $0x100] sm:$0xf]
    %v2949 = vld [vmem:[%s5 + $0x104] sm:$0xf]
    %v2950 = vld [vmem:[%s5 + $0x108] sm:$0xf]
    %v2951 = vld [vmem:[%s5 + $0x10c] sm:$0xf]
    %v2952 = vld [vmem:[%s5 + $0x110] sm:$0xf]
    %v2953 = vld [vmem:[%s5 + $0x114] sm:$0xf]
    %v2954 = vld [vmem:[%s5 + $0x118] sm:$0xf]
    %v2955 = vld [vmem:[%s5 + $0x11c] sm:$0xf]
    %v2956 = vld [vmem:[%s5 + $0x120] sm:$0xf]
    %v2957 = vld [vmem:[%s5 + $0x124] sm:$0xf]
    %v2958 = vld [vmem:[%s5 + $0x128] sm:$0xf]
    %v2959 = vld [vmem:[%s5 + $0x12c] sm:$0xf]
    %v2960 = vld [vmem:[%s5 + $0x130] sm:$0xf]
    %v2961 = vld [vmem:[%s5 + $0x134] sm:$0xf]
    %v2962 = vld [vmem:[%s5 + $0x138] sm:$0xf]
    %v2963 = vld [vmem:[%s5 + $0x13c] sm:$0xf]
    %v2964 = vld [vmem:[%s6] sm:$0x1]
    %v2966 = vlaneseq
    %v2967 = vshrl.u32 %v2966, 7
    %v2968 = vsub.s32 0, %v2967
    %v2969 = vrot.slane %v2964, %v2968
    %v3051 = vunpack.c.l.b16 %v2884
    %v3052 = vunpack.c.l.b16 %v2885
    %v3053 = vunpack.c.l.b16 %v2886
    %v3054 = vunpack.c.l.b16 %v2887
    %v3055 = vunpack.c.l.b16 %v2888
    %v3056 = vunpack.c.l.b16 %v2889
    %v3057 = vunpack.c.l.b16 %v2890
    %v3058 = vunpack.c.l.b16 %v2891
    %v3059 = vunpack.c.l.b16 %v2892
    %v3060 = vunpack.c.l.b16 %v2893
    %v3061 = vunpack.c.l.b16 %v2894
    %v3062 = vunpack.c.l.b16 %v2895
    %v3063 = vunpack.c.l.b16 %v2896
    %v3064 = vunpack.c.l.b16 %v2897
    %v3065 = vunpack.c.l.b16 %v2898
    %v3066 = vunpack.c.l.b16 %v2899
    %v3067 = vunpack.c.l.b16 %v2900
    %v3068 = vunpack.c.l.b16 %v2901
    %v3069 = vunpack.c.l.b16 %v2902
    %v3070 = vunpack.c.l.b16 %v2903
    %v3071 = vunpack.c.l.b16 %v2904
    %v3072 = vunpack.c.l.b16 %v2905
    %v3073 = vunpack.c.l.b16 %v2906
    %v3074 = vunpack.c.l.b16 %v2907
    %v3075 = vunpack.c.l.b16 %v2908
    %v3076 = vunpack.c.l.b16 %v2909
    %v3077 = vunpack.c.l.b16 %v2910
    %v3078 = vunpack.c.l.b16 %v2911
    %v3079 = vunpack.c.l.b16 %v2912
    %v3080 = vunpack.c.l.b16 %v2913
    %v3081 = vunpack.c.l.b16 %v2914
    %v3082 = vunpack.c.l.b16 %v2915
    %v3083 = vunpack.c.l.b16 %v2916
    %v3084 = vunpack.c.l.b16 %v2917
    %v3085 = vunpack.c.l.b16 %v2918
    %v3086 = vunpack.c.l.b16 %v2919
    %v3087 = vunpack.c.l.b16 %v2920
    %v3088 = vunpack.c.l.b16 %v2921
    %v3089 = vunpack.c.l.b16 %v2922
    %v3090 = vunpack.c.l.b16 %v2923
    %v3091 = vunpack.c.l.b16 %v2924
    %v3092 = vunpack.c.l.b16 %v2925
    %v3093 = vunpack.c.l.b16 %v2926
    %v3094 = vunpack.c.l.b16 %v2927
    %v3095 = vunpack.c.l.b16 %v2928
    %v3096 = vunpack.c.l.b16 %v2929
    %v3097 = vunpack.c.l.b16 %v2930
    %v3098 = vunpack.c.l.b16 %v2931
    %v3099 = vunpack.c.l.b16 %v2932
    %v3100 = vunpack.c.l.b16 %v2933
    %v3101 = vunpack.c.l.b16 %v2934
    %v3102 = vunpack.c.l.b16 %v2935
    %v3103 = vunpack.c.l.b16 %v2936
    %v3104 = vunpack.c.l.b16 %v2937
    %v3105 = vunpack.c.l.b16 %v2938
    %v3106 = vunpack.c.l.b16 %v2939
    %v3107 = vunpack.c.l.b16 %v2940
    %v3108 = vunpack.c.l.b16 %v2941
    %v3109 = vunpack.c.l.b16 %v2942
    %v3110 = vunpack.c.l.b16 %v2943
    %v3111 = vunpack.c.l.b16 %v2944
    %v3112 = vunpack.c.l.b16 %v2945
    %v3113 = vunpack.c.l.b16 %v2946
    %v3114 = vunpack.c.l.b16 %v2947
    %v3115 = vunpack.c.l.b16 %v2948
    %v3116 = vunpack.c.l.b16 %v2949
    %v3117 = vunpack.c.l.b16 %v2950
    %v3118 = vunpack.c.l.b16 %v2951
    %v3119 = vunpack.c.l.b16 %v2952
    %v3120 = vunpack.c.l.b16 %v2953
    %v3121 = vunpack.c.l.b16 %v2954
    %v3122 = vunpack.c.l.b16 %v2955
    %v3123 = vunpack.c.l.b16 %v2956
    %v3124 = vunpack.c.l.b16 %v2957
    %v3125 = vunpack.c.l.b16 %v2958
    %v3126 = vunpack.c.l.b16 %v2959
    %v3127 = vunpack.c.l.b16 %v2960
    %v3128 = vunpack.c.l.b16 %v2961
    %v3129 = vunpack.c.l.b16 %v2962
    %v3130 = vunpack.c.l.b16 %v2963
    %v3131 = vpack.c.b16 %v3052, %v3051
    %v3132 = vpack.c.b16 %v3054, %v3053
    %v3133 = vpack.c.b16 %v3056, %v3055
    %v3134 = vpack.c.b16 %v3058, %v3057
    %v3135 = vpack.c.b16 %v3060, %v3059
    %v3136 = vpack.c.b16 %v3062, %v3061
    %v3137 = vpack.c.b16 %v3064, %v3063
    %v3138 = vpack.c.b16 %v3066, %v3065
    %v3139 = vpack.c.b16 %v3068, %v3067
    %v3140 = vpack.c.b16 %v3070, %v3069
    %v3141 = vpack.c.b16 %v3072, %v3071
    %v3142 = vpack.c.b16 %v3074, %v3073
    %v3143 = vpack.c.b16 %v3076, %v3075
    %v3144 = vpack.c.b16 %v3078, %v3077
    %v3145 = vpack.c.b16 %v3080, %v3079
    %v3146 = vpack.c.b16 %v3082, %v3081
    %v3147 = vpack.c.b16 %v3084, %v3083
    %v3148 = vpack.c.b16 %v3086, %v3085
    %v3149 = vpack.c.b16 %v3088, %v3087
    %v3150 = vpack.c.b16 %v3090, %v3089
    %v3151 = vpack.c.b16 %v3092, %v3091
    %v3152 = vpack.c.b16 %v3094, %v3093
    %v3153 = vpack.c.b16 %v3096, %v3095
    %v3154 = vpack.c.b16 %v3098, %v3097
    %v3155 = vpack.c.b16 %v3100, %v3099
    %v3156 = vpack.c.b16 %v3102, %v3101
    %v3157 = vpack.c.b16 %v3104, %v3103
    %v3158 = vpack.c.b16 %v3106, %v3105
    %v3159 = vpack.c.b16 %v3108, %v3107
    %v3160 = vpack.c.b16 %v3110, %v3109
    %v3161 = vpack.c.b16 %v3112, %v3111
    %v3162 = vpack.c.b16 %v3114, %v3113
    %v3163 = vpack.c.b16 %v3116, %v3115
    %v3164 = vpack.c.b16 %v3118, %v3117
    %v3165 = vpack.c.b16 %v3120, %v3119
    %v3166 = vpack.c.b16 %v3122, %v3121
    %v3167 = vpack.c.b16 %v3124, %v3123
    %v3168 = vpack.c.b16 %v3126, %v3125
    %v3169 = vpack.c.b16 %v3128, %v3127
    %v3170 = vpack.c.b16 %v3130, %v3129
    %3211 = vmatprep.subr.bf16.mxu0 0
    %3212 = vmatpush1.bf16.msra.mxu0 %v3131
    %3213 = vmatprep.subr.bf16.mxu0 0
    %3214 = vmatpush1.bf16.msra.mxu0 %v3132
    %3215 = vmatprep.subr.bf16.mxu0 0
    %3216 = vmatpush1.bf16.msra.mxu0 %v3133
    %3217 = vmatprep.subr.bf16.mxu0 0
    %3218 = vmatpush1.bf16.msra.mxu0 %v3134
    %3219 = vmatprep.subr.bf16.mxu0 0
    %3220 = vmatpush1.bf16.msra.mxu0 %v3135
    %3221 = vmatprep.subr.bf16.mxu0 0
    %3222 = vmatpush1.bf16.msra.mxu0 %v3136
    %3223 = vmatprep.subr.bf16.mxu0 0
    %3224 = vmatpush1.bf16.msra.mxu0 %v3137
    %3225 = vmatprep.subr.bf16.mxu0 0
    %3226 = vmatpush1.bf16.msra.mxu0 %v3138
    %3227 = vmatprep.subr.bf16.mxu0 0
    %3228 = vmatpush1.bf16.msra.mxu0 %v3139
    %3229 = vmatprep.subr.bf16.mxu0 0
    %3230 = vmatpush1.bf16.msra.mxu0 %v3140
    %3231 = vmatprep.subr.bf16.mxu0 0
    %3232 = vmatpush1.bf16.msra.mxu0 %v3141
    %3233 = vmatprep.subr.bf16.mxu0 0
    %3234 = vmatpush1.bf16.msra.mxu0 %v3142
    %3235 = vmatprep.subr.bf16.mxu0 0
    %3236 = vmatpush1.bf16.msra.mxu0 %v3143
    %3237 = vmatprep.subr.bf16.mxu0 0
    %3238 = vmatpush1.bf16.msra.mxu0 %v3144
    %3239 = vmatprep.subr.bf16.mxu0 0
    %3240 = vmatpush1.bf16.msra.mxu0 %v3145
    %3241 = vmatprep.subr.bf16.mxu0 0
    %3242 = vmatpush1.bf16.msra.mxu0 %v3146
    %3243 = vmatprep.mubr.bf16.mxu0 %v2880
    %3244 = vmatmul.mubr.bf16.gmra.mrb[0].mxu0 %v2879
    %v3245 = vpop.f32.mrb[0].mxu0
    %v3246 = vadd.f32 %v2969, %v3245
    %v3247 = vpop.f32.mrb[0].mxu0
    %v3248 = vpop.f32.mrb[0].mxu0
    %v3249 = vpop.f32.mrb[0].mxu0
    %3250 = vdwg.mxu0
    %3251 = vmatprep.subr.bf16.mxu0 0
    %3252 = vmatpush1.bf16.msra.mxu0 %v3147
    %3253 = vmatprep.subr.bf16.mxu0 0
    %3254 = vmatpush1.bf16.msra.mxu0 %v3148
    %3255 = vmatprep.subr.bf16.mxu0 0
    %3256 = vmatpush1.bf16.msra.mxu0 %v3149
    %3257 = vmatprep.subr.bf16.mxu0 0
    %3258 = vmatpush1.bf16.msra.mxu0 %v3150
    %3259 = vmatprep.subr.bf16.mxu0 0
    %3260 = vmatpush1.bf16.msra.mxu0 %v3151
    %3261 = vmatprep.subr.bf16.mxu0 0
    %3262 = vmatpush1.bf16.msra.mxu0 %v3152
    %3263 = vmatprep.subr.bf16.mxu0 0
    %3264 = vmatpush1.bf16.msra.mxu0 %v3153
    %3265 = vmatprep.subr.bf16.mxu0 0
    %3266 = vmatpush1.bf16.msra.mxu0 %v3154
    %3267 = vmatprep.subr.bf16.mxu0 0
    %3268 = vmatpush1.bf16.msra.mxu0 %v3155
    %3269 = vmatprep.subr.bf16.mxu0 0
    %3270 = vmatpush1.bf16.msra.mxu0 %v3156
    %3271 = vmatprep.subr.bf16.mxu0 0
    %3272 = vmatpush1.bf16.msra.mxu0 %v3157
    %3273 = vmatprep.subr.bf16.mxu0 0
    %3274 = vmatpush1.bf16.msra.mxu0 %v3158
    %3275 = vmatprep.subr.bf16.mxu0 0
    %3276 = vmatpush1.bf16.msra.mxu0 %v3159
    %3277 = vmatprep.subr.bf16.mxu0 0
    %3278 = vmatpush1.bf16.msra.mxu0 %v3160
    %3279 = vmatprep.subr.bf16.mxu0 0
    %3280 = vmatpush1.bf16.msra.mxu0 %v3161
    %3281 = vmatprep.subr.bf16.mxu0 0
    %3282 = vmatpush1.bf16.msra.mxu0 %v3162
    %3283 = vmatprep.mubr.bf16.mxu0 %v2882
    %3284 = vmatmul.mubr.bf16.gmra.mrb[0].mxu0 %v2881
    %v3285 = vpop.f32.mrb[0].mxu0
    %v3286 = vadd.f32 %v3246, %v3285
    %v3287 = vpop.f32.mrb[0].mxu0
    %v3288 = vpop.f32.mrb[0].mxu0
    %v3289 = vpop.f32.mrb[0].mxu0
    %3290 = vdwg.mxu0
    %3291 = vmatprep.subr.bf16.mxu0 0
    %3292 = vmatpush1.bf16.msra.mxu0 %v3163
    %3293 = vmatprep.subr.bf16.mxu0 0
    %3294 = vmatpush1.bf16.msra.mxu0 %v3164
    %3295 = vmatprep.subr.bf16.mxu0 0
    %3296 = vmatpush1.bf16.msra.mxu0 %v3165
    %3297 = vmatprep.subr.bf16.mxu0 0
    %3298 = vmatpush1.bf16.msra.mxu0 %v3166
    %3299 = vmatprep.subr.bf16.mxu0 0
    %3300 = vmatpush1.bf16.msra.mxu0 %v3167
    %3301 = vmatprep.subr.bf16.mxu0 0
    %3302 = vmatpush1.bf16.msra.mxu0 %v3168
    %3303 = vmatprep.subr.bf16.mxu0 0
    %3304 = vmatpush1.bf16.msra.mxu0 %v3169
    %3305 = vmatprep.subr.bf16.mxu0 0
    %3306 = vmatpush1.bf16.msra.mxu0 %v3170
    %3307 = vmatprep.subr.bf16.mxu0 0
    %3308 = vmatpush1.bf16.msra.mxu0 0
    %3309 = vmatprep.subr.bf16.mxu0 0
    %3310 = vmatpush1.bf16.msra.mxu0 0
    %3311 = vmatprep.subr.bf16.mxu0 0
    %3312 = vmatpush1.bf16.msra.mxu0 0
    %3313 = vmatprep.subr.bf16.mxu0 0
    %3314 = vmatpush1.bf16.msra.mxu0 0
    %3315 = vmatprep.subr.bf16.mxu0 0
    %3316 = vmatpush1.bf16.msra.mxu0 0
    %3317 = vmatprep.subr.bf16.mxu0 0
    %3318 = vmatpush1.bf16.msra.mxu0 0
    %3319 = vmatprep.subr.bf16.mxu0 0
    %3320 = vmatpush1.bf16.msra.mxu0 0
    %3321 = vmatprep.subr.bf16.mxu0 0
    %3322 = vmatpush1.bf16.msra.mxu0 0
    %3323 = vmatprep.mubr.bf16.mxu0 0
    %3324 = vmatmul.mubr.bf16.gmra.mrb[0].mxu0 %v2883
    %v3325 = vpop.f32.mrb[0].mxu0
    %v3326 = vadd.f32 %v3286, %v3325
    %v3327 = vpop.f32.mrb[0].mxu0
    %v3328 = vpop.f32.mrb[0].mxu0
    %v3329 = vpop.f32.mrb[0].mxu0
    %3330 = vdwg.mxu0
    %v3331 = vmax.f32 %v3326, 0.0
    %v3332 = vpack.c.bf16 %v3331, %v3331
    %v3333 = vld [vmem:[%s7] sm:$0xf]
    %v3334 = vld [vmem:[%s7 + $0x4] sm:$0xf]
    %v3335 = vld [vmem:[%s7 + $0x8] sm:$0xf]
    %v3336 = vld [vmem:[%s7 + $0xc] sm:$0xf]
    %v3337 = vld [vmem:[%s7 + $0x10] sm:$0xf]
    %v3338 = vld [vmem:[%s7 + $0x14] sm:$0xf]
    %v3339 = vld [vmem:[%s7 + $0x18] sm:$0xf]
    %v3340 = vld [vmem:[%s7 + $0x1c] sm:$0xf]
    %v3341 = vld [vmem:[%s7 + $0x20] sm:$0xf]
    %v3342 = vld [vmem:[%s7 + $0x24] sm:$0xf]
    %v3343 = vld [vmem:[%s7 + $0x28] sm:$0xf]
    %v3344 = vld [vmem:[%s7 + $0x2c] sm:$0xf]
    %v3345 = vld [vmem:[%s7 + $0x30] sm:$0xf]
    %v3346 = vld [vmem:[%s7 + $0x34] sm:$0xf]
    %v3347 = vld [vmem:[%s7 + $0x38] sm:$0xf]
    %v3348 = vld [vmem:[%s7 + $0x3c] sm:$0xf]
    %v3349 = vld [vmem:[%s8] sm:$0x1]
    %v3351 = vlaneseq
    %v3352 = vshrl.u32 %v3351, 7
    %v3353 = vsub.s32 0, %v3352
    %v3354 = vrot.slane %v3349, %v3353
    %v3372 = vunpack.c.l.b16 %v3333
    %v3373 = vunpack.c.l.b16 %v3334
    %v3374 = vunpack.c.l.b16 %v3335
    %v3375 = vunpack.c.l.b16 %v3336
    %v3376 = vunpack.c.l.b16 %v3337
    %v3377 = vunpack.c.l.b16 %v3338
    %v3378 = vunpack.c.l.b16 %v3339
    %v3379 = vunpack.c.l.b16 %v3340
    %v3380 = vunpack.c.l.b16 %v3341
    %v3381 = vunpack.c.l.b16 %v3342
    %v3382 = vunpack.c.l.b16 %v3343
    %v3383 = vunpack.c.l.b16 %v3344
    %v3384 = vunpack.c.l.b16 %v3345
    %v3385 = vunpack.c.l.b16 %v3346
    %v3386 = vunpack.c.l.b16 %v3347
    %v3387 = vunpack.c.l.b16 %v3348
    %v3388 = vpack.c.b16 %v3373, %v3372
    %v3389 = vpack.c.b16 %v3375, %v3374
    %v3390 = vpack.c.b16 %v3377, %v3376
    %v3391 = vpack.c.b16 %v3379, %v3378
    %v3392 = vpack.c.b16 %v3381, %v3380
    %v3393 = vpack.c.b16 %v3383, %v3382
    %v3394 = vpack.c.b16 %v3385, %v3384
    %v3395 = vpack.c.b16 %v3387, %v3386
    %3404 = vmatprep.subr.bf16.mxu0 0
    %3405 = vmatpush1.bf16.msra.mxu0 %v3388
    %3406 = vmatprep.subr.bf16.mxu0 0
    %3407 = vmatpush1.bf16.msra.mxu0 %v3389
    %3408 = vmatprep.subr.bf16.mxu0 0
    %3409 = vmatpush1.bf16.msra.mxu0 %v3390
    %3410 = vmatprep.subr.bf16.mxu0 0
    %3411 = vmatpush1.bf16.msra.mxu0 %v3391
    %3412 = vmatprep.subr.bf16.mxu0 0
    %3413 = vmatpush1.bf16.msra.mxu0 %v3392
    %3414 = vmatprep.subr.bf16.mxu0 0
    %3415 = vmatpush1.bf16.msra.mxu0 %v3393
    %3416 = vmatprep.subr.bf16.mxu0 0
    %3417 = vmatpush1.bf16.msra.mxu0 %v3394
    %3418 = vmatprep.subr.bf16.mxu0 0
    %3419 = vmatpush1.bf16.msra.mxu0 %v3395
    %3420 = vmatprep.subr.bf16.mxu0 0
    %3421 = vmatpush1.bf16.msra.mxu0 0
    %3422 = vmatprep.subr.bf16.mxu0 0
    %3423 = vmatpush1.bf16.msra.mxu0 0
    %3424 = vmatprep.subr.bf16.mxu0 0
    %3425 = vmatpush1.bf16.msra.mxu0 0
    %3426 = vmatprep.subr.bf16.mxu0 0
    %3427 = vmatpush1.bf16.msra.mxu0 0
    %3428 = vmatprep.subr.bf16.mxu0 0
    %3429 = vmatpush1.bf16.msra.mxu0 0
    %3430 = vmatprep.subr.bf16.mxu0 0
    %3431 = vmatpush1.bf16.msra.mxu0 0
    %3432 = vmatprep.subr.bf16.mxu0 0
    %3433 = vmatpush1.bf16.msra.mxu0 0
    %3434 = vmatprep.subr.bf16.mxu0 0
    %3435 = vmatpush1.bf16.msra.mxu0 0
    %3436 = vmatprep.mubr.bf16.mxu0 0
    %3437 = vmatmul.mubr.bf16.gmra.mrb[0].mxu0 %v3332
    %v3438 = vpop.f32.mrb[0].mxu0
    %v3439 = vadd.f32 %v3354, %v3438
    %v3440 = vpop.f32.mrb[0].mxu0
    %v3441 = vpop.f32.mrb[0].mxu0
    %v3442 = vpop.f32.mrb[0].mxu0
    %3443 = vdwg.mxu0
    %v3444 = vmax.f32 %v3439, 0.0
    %v3445 = vpack.c.bf16 %v3444, %v3444
    %v3446 = vld [vmem:[%s9] sm:$0xf]
    %v3447 = vld [vmem:[%s9 + $0x4] sm:$0xf]
    %v3448 = vld [vmem:[%s9 + $0x8] sm:$0xf]
    %v3449 = vld [vmem:[%s9 + $0xc] sm:$0xf]
    %v3450 = vld [vmem:[%s9 + $0x10] sm:$0xf]
    %v3451 = vld [vmem:[%s9 + $0x14] sm:$0xf]
    %v3452 = vld [vmem:[%s9 + $0x18] sm:$0xf]
    %v3453 = vld [vmem:[%s9 + $0x1c] sm:$0xf]
    %v3454 = vld [vmem:[%s9 + $0x20] sm:$0xf]
    %v3455 = vld [vmem:[%s9 + $0x24] sm:$0xf]
    %v3456 = vld [vmem:[%s9 + $0x28] sm:$0xf]
    %v3457 = vld [vmem:[%s9 + $0x2c] sm:$0xf]
    %v3458 = vld [vmem:[%s9 + $0x30] sm:$0xf]
    %v3459 = vld [vmem:[%s9 + $0x34] sm:$0xf]
    %v3460 = vld [vmem:[%s9 + $0x38] sm:$0xf]
    %v3461 = vld [vmem:[%s9 + $0x3c] sm:$0xf]
    %v3462 = vld [vmem:[%s10] sm:$0x1]
    %v3464 = vlaneseq
    %v3465 = vshrl.u32 %v3464, 7
    %v3466 = vsub.s32 0, %v3465
    %v3467 = vrot.slane %v3462, %v3466
    %v3485 = vunpack.c.l.b16 %v3446
    %v3486 = vunpack.c.l.b16 %v3447
    %v3487 = vunpack.c.l.b16 %v3448
    %v3488 = vunpack.c.l.b16 %v3449
    %v3489 = vunpack.c.l.b16 %v3450
    %v3490 = vunpack.c.l.b16 %v3451
    %v3491 = vunpack.c.l.b16 %v3452
    %v3492 = vunpack.c.l.b16 %v3453
    %v3493 = vunpack.c.l.b16 %v3454
    %v3494 = vunpack.c.l.b16 %v3455
    %v3495 = vunpack.c.l.b16 %v3456
    %v3496 = vunpack.c.l.b16 %v3457
    %v3497 = vunpack.c.l.b16 %v3458
    %v3498 = vunpack.c.l.b16 %v3459
    %v3499 = vunpack.c.l.b16 %v3460
    %v3500 = vunpack.c.l.b16 %v3461
    %v3501 = vpack.c.b16 %v3486, %v3485
    %v3502 = vpack.c.b16 %v3488, %v3487
    %v3503 = vpack.c.b16 %v3490, %v3489
    %v3504 = vpack.c.b16 %v3492, %v3491
    %v3505 = vpack.c.b16 %v3494, %v3493
    %v3506 = vpack.c.b16 %v3496, %v3495
    %v3507 = vpack.c.b16 %v3498, %v3497
    %v3508 = vpack.c.b16 %v3500, %v3499
    %3517 = vmatprep.subr.bf16.mxu0 0
    %3518 = vmatpush1.bf16.msra.mxu0 %v3501
    %3519 = vmatprep.subr.bf16.mxu0 0
    %3520 = vmatpush1.bf16.msra.mxu0 %v3502
    %3521 = vmatprep.subr.bf16.mxu0 0
    %3522 = vmatpush1.bf16.msra.mxu0 %v3503
    %3523 = vmatprep.subr.bf16.mxu0 0
    %3524 = vmatpush1.bf16.msra.mxu0 %v3504
    %3525 = vmatprep.subr.bf16.mxu0 0
    %3526 = vmatpush1.bf16.msra.mxu0 %v3505
    %3527 = vmatprep.subr.bf16.mxu0 0
    %3528 = vmatpush1.bf16.msra.mxu0 %v3506
    %3529 = vmatprep.subr.bf16.mxu0 0
    %3530 = vmatpush1.bf16.msra.mxu0 %v3507
    %3531 = vmatprep.subr.bf16.mxu0 0
    %3532 = vmatpush1.bf16.msra.mxu0 %v3508
    %3533 = vmatprep.subr.bf16.mxu0 0
    %3534 = vmatpush1.bf16.msra.mxu0 0
    %3535 = vmatprep.subr.bf16.mxu0 0
    %3536 = vmatpush1.bf16.msra.mxu0 0
    %3537 = vmatprep.subr.bf16.mxu0 0
    %3538 = vmatpush1.bf16.msra.mxu0 0
    %3539 = vmatprep.subr.bf16.mxu0 0
    %3540 = vmatpush1.bf16.msra.mxu0 0
    %3541 = vmatprep.subr.bf16.mxu0 0
    %3542 = vmatpush1.bf16.msra.mxu0 0
    %3543 = vmatprep.subr.bf16.mxu0 0
    %3544 = vmatpush1.bf16.msra.mxu0 0
    %3545 = vmatprep.subr.bf16.mxu0 0
    %3546 = vmatpush1.bf16.msra.mxu0 0
    %3547 = vmatprep.subr.bf16.mxu0 0
    %3548 = vmatpush1.bf16.msra.mxu0 0
    %3549 = vmatprep.mubr.bf16.mxu0 0
    %3550 = vmatmul.mubr.bf16.gmra.mrb[0].mxu0 %v3445
    %v3551 = vpop.f32.mrb[0].mxu0
    %v3552 = vadd.f32 %v3467, %v3551
    %v3553 = vpop.f32.mrb[0].mxu0
    %v3554 = vpop.f32.mrb[0].mxu0
    %v3555 = vpop.f32.mrb[0].mxu0
    %3556 = vdwg.mxu0
    %3557 = vst [vmem:[#allocation2] sm:$0xff] %v3552
    // Predicated region
    $region46: #{net_forward.1} parent=1 // pred_check
      _
    $region47: #{net_forward.1} parent=1 // pred_check_branch
      %3559 = sbr.rel (0) target = $region49
    $region48: #{net_forward.1} parent=1 // pred_region
      %s3561 = ssub.s32 128, 128
      %3562 = vsyncadd [#allocation3], %s3561
      %s3564 = sshll.u32 [#allocation2], 4
      %s3565 = int_to_ptr.vmem [resolvable:$true] %s3564
      %3567 = dma.vmem_to_hbm [thread:$0]  %s3565, 128, %s11, [#allocation3]
    $region49: #{net_forward.1} parent=1 // pred_fallthru
      _
    // Predicated region
    $region50: #{net_forward.1} parent=1 // pred_check
      _
    $region51: #{net_forward.1} parent=1 // pred_check_branch
      %3569 = sbr.rel (0) target = $region53
    $region52: #{net_forward.1} parent=1 // pred_region
      %3570 = dma.done [#allocation3], 128
    $region53: #{net_forward.1} parent=1 // pred_fallthru
      _
    %3571 = vsyncpa [#allocation3], 1

</llo_original>
